<compile_context>
chip_gen: v5e
topology: v5e:2x2
jax: 0.10.0
libtpu: 0.0.40
codegen_flags: <defaults>
</compile_context>

<pallas_src>
import functools

import jax
import jax.numpy as jnp
from jax import lax
from jax.experimental import pallas as pl
from jax.experimental.pallas import tpu as pltpu


def bottleneck_kernel(x_ref, w1_ref, s1_ref, b1_ref, w2_ref, s2_ref, b2_ref,
                      o_ref, y1s_ref, *, W, block_h, add, front):
    # x_ref : (1, H*W, C1p)  bf16   full image of the current batch element
    # w1_ref: (C1p, Cp_)     bf16   1x1 conv as a matmul
    # s1/b1 : (1, Cp_)       f32    folded BN1 scale / bias
    # w2_ref: (9*Cp_, C2p)   bf16   3x3 conv, 9 taps stacked on the K axis
    # s2/b2 : (1, C2p)       f32    folded BN2 scale / bias
    # o_ref : (1, M, C2p)    f32    output row band (M = block_h * W)
    # y1s   : (front + (block_h+2)*W + 8, Cp_) f32   cv1 band + 1-row halo
    M = block_h * W
    band = pl.program_id(1)
    nb = pl.num_programs(1)
    Cp_ = y1s_ref.shape[1]

    w1 = w1_ref[...]
    s1 = s1_ref[...]
    b1 = b1_ref[...]

    def cv1(x_rows):  # bf16 rows -> f32 SiLU(BN(1x1 conv))
        y = jnp.dot(x_rows, w1, preferred_element_type=jnp.float32)
        y = y * s1 + b1
        return y * jax.nn.sigmoid(y)

    base = pl.multiple_of(band * M, M)  # first flat row of this band

    # ---- cv1 on the band + recomputed 1-row halo, into the flat scratch ----
    xm = x_ref[0, pl.ds(base, M), :]                       # (M, C1p) bf16
    y1s_ref[pl.ds(front + W, M), :] = cv1(xm)              # aligned M-row store

    @pl.when(band > 0)
    def _top():
        top = pl.multiple_of(base - W, W)
        y1s_ref[pl.ds(front, W), :] = cv1(x_ref[0, pl.ds(top, W), :])

    @pl.when(band == 0)
    def _top_zero():
        y1s_ref[pl.ds(front, W), :] = jnp.zeros((W, Cp_), y1s_ref.dtype)

    @pl.when(band < nb - 1)
    def _bot():
        bot = pl.multiple_of(base + M, W)
        y1s_ref[pl.ds(front + W + M, W), :] = cv1(x_ref[0, pl.ds(bot, W), :])

    @pl.when(band == nb - 1)
    def _bot_zero():
        y1s_ref[pl.ds(front + W + M, W), :] = jnp.zeros((W, Cp_),
                                                        y1s_ref.dtype)

    # ---- cv2: 9 shifted taps concatenated on K -> one MXU matmul ----
    w_idx = lax.broadcasted_iota(jnp.int32, (M, 1), 0) % W
    not_left = w_idx > 0            # column tap w-1 invalid at w == 0
    not_right = w_idx < (W - 1)     # column tap w+1 invalid at w == W-1

    taps = []
    for ky in range(3):
        for kx in range(3):
            start = front + ky * W + (kx - 1)
            t = y1s_ref[pl.ds(start, M), :]
            if kx == 0:
                t = jnp.where(not_left, t, 0.0)
            elif kx == 2:
                t = jnp.where(not_right, t, 0.0)
            taps.append(t.astype(jnp.bfloat16))
    big = jnp.concatenate(taps, axis=1)                    # (M, 9*Cp_) bf16

    acc = jnp.dot(big, w2_ref[...], preferred_element_type=jnp.float32)
    y2 = acc * s2_ref[...] + b2_ref[...]
    y2 = y2 * jax.nn.sigmoid(y2)
    if add:
        y2 = y2 + xm.astype(jnp.float32)
    o_ref[0, :, :] = y2.astype(o_ref.dtype)


def _fold_bn(gamma, beta, mean, var, eps=1e-5):
    scale = gamma / jnp.sqrt(var + eps)
    bias = beta - mean * scale
    return scale.astype(jnp.float32), bias.astype(jnp.float32)


def _round_up(v, m=128):
    return ((v + m - 1) // m) * m


def bottleneck_pallas(x_nchw, params, *, shortcut=True, block_h=None, eps=1e-5):
    N, C1, H, W = x_nchw.shape
    w1_pt = params["w1"]            # (C_, C1, 1, 1)
    w2_pt = params["w2"]            # (C2, C_, 3, 3)
    C_ = w1_pt.shape[0]
    C2 = w2_pt.shape[0]
    add = bool(shortcut) and (C1 == C2)

    C1p, Cp_, C2p = _round_up(C1), _round_up(C_), _round_up(C2)

    # Row-band height: must divide H; keep block_h*W a multiple of 8; aim for
    # roughly 1024 rows per band so the matmul M dim is well fed.
    if block_h is None:
        block_h = H
        for bh in range(min(H, max(1, 1024 // W)), 0, -1):
            if H % bh == 0 and (bh == H or (bh * W) % 8 == 0):
                block_h = bh
                break
    assert H % block_h == 0 and (block_h == H or (block_h * W) % 8 == 0)
    nb = H // block_h
    M = block_h * W

    # Front pad of the cv1 scratch: keep tap offsets >= 0 and make the big
    # M-row store (at offset front+W) 8-sublane aligned for any W.
    front = 8 if W % 8 == 0 else (8 - W % 8)

    # ---- weights / folded-BN params, zero-padded to lane-dense shapes ----
    w1_k = jnp.zeros((C1p, Cp_), jnp.float32).at[:C1, :C_].set(
        jnp.transpose(w1_pt[:, :, 0, 0], (1, 0)).astype(jnp.float32))
    w2_t = jnp.transpose(w2_pt, (2, 3, 1, 0)).reshape(9, C_, C2)   # tap-major
    w2_k = jnp.zeros((9, Cp_, C2p), jnp.float32).at[:, :C_, :C2].set(
        w2_t.astype(jnp.float32)).reshape(9 * Cp_, C2p)

    s1, b1 = _fold_bn(params["g1"], params["be1"], params["m1"], params["v1"], eps)
    s2, b2 = _fold_bn(params["g2"], params["be2"], params["m2"], params["v2"], eps)
    s1p = jnp.zeros((1, Cp_), jnp.float32).at[0, :C_].set(s1)
    b1p = jnp.zeros((1, Cp_), jnp.float32).at[0, :C_].set(b1)
    s2p = jnp.zeros((1, C2p), jnp.float32).at[0, :C2].set(s2)
    b2p = jnp.zeros((1, C2p), jnp.float32).at[0, :C2].set(b2)

    # ---- NCHW -> flat NHWC, channel zero-pad, bf16 MXU operand ----
    # TODO(synk): in a full model keep activations in this flat-NHWC bf16
    # layout between Bottleneck blocks so the transposes/pads amortize away.
    x_nhwc = jnp.transpose(x_nchw, (0, 2, 3, 1)).reshape(N, H * W, C1)
    x_flat = jnp.zeros((N, H * W, C1p), jnp.bfloat16).at[:, :, :C1].set(
        x_nhwc.astype(jnp.bfloat16))

    scratch_rows = front + (block_h + 2) * W + 8

    # VMEM budget: double-buffered in/out blocks + weights + scratch + temps.
    est = (2 * H * W * C1p * 2 + 2 * M * C2p * 4
           + (C1p * Cp_ + 9 * Cp_ * C2p) * 2
           + scratch_rows * Cp_ * 4
           + 4 * M * 9 * Cp_ * 2)
    vmem_limit = int(min(max(2 * est, 16 << 20), 48 << 20))  # < v7x 64 MiB

    cost = pl.CostEstimate(
        flops=2 * N * H * W * (C1p * Cp_ + 9 * Cp_ * C2p),
        transcendentals=N * H * W * (Cp_ + C2p),
        bytes_accessed=(N * H * W * C1p * 2 + N * H * W * C2p * 4
                        + (C1p * Cp_ + 9 * Cp_ * C2p) * 2))

    kern = functools.partial(bottleneck_kernel, W=W, block_h=block_h,
                             add=add, front=front)

    out_flat = pl.pallas_call(
        kern,
        out_shape=jax.ShapeDtypeStruct((N, H * W, C2p), jnp.float32),
        grid_spec=pltpu.PrefetchScalarGridSpec(
            num_scalar_prefetch=0,
            grid=(N, nb),
            in_specs=[
                pl.BlockSpec((1, H * W, C1p), lambda n, b: (n, 0, 0)),
                pl.BlockSpec((C1p, Cp_), lambda n, b: (0, 0)),
                pl.BlockSpec((1, Cp_), lambda n, b: (0, 0)),
                pl.BlockSpec((1, Cp_), lambda n, b: (0, 0)),
                pl.BlockSpec((9 * Cp_, C2p), lambda n, b: (0, 0)),
                pl.BlockSpec((1, C2p), lambda n, b: (0, 0)),
                pl.BlockSpec((1, C2p), lambda n, b: (0, 0)),
            ],
            out_specs=pl.BlockSpec((1, M, C2p), lambda n, b: (n, b, 0)),
            scratch_shapes=[pltpu.VMEM((scratch_rows, Cp_), jnp.float32)],
        ),
        compiler_params=pltpu.CompilerParams(
            dimension_semantics=("parallel", "parallel"),
            vmem_limit_bytes=vmem_limit),
        cost_estimate=cost,
    )(x_flat, w1_k.astype(jnp.bfloat16), s1p, b1p,
      w2_k.astype(jnp.bfloat16), s2p, b2p)

    out = out_flat[:, :, :C2].reshape(N, H, W, C2)
    return jnp.transpose(out, (0, 3, 1, 2)).astype(x_nchw.dtype)


# ---------------- pure-JAX reference (sanity check) ----------------
def bottleneck_ref(x, params, *, shortcut=True):
    def conv_bn_silu(h, w, gamma, beta, mean, var, pad):
        y = lax.conv_general_dilated(
            h, w, window_strides=(1, 1), padding=[(pad, pad), (pad, pad)],
            dimension_numbers=("NCHW", "OIHW", "NCHW"))
        y = ((y - mean[None, :, None, None])
             / jnp.sqrt(var[None, :, None, None] + 1e-5)
             * gamma[None, :, None, None] + beta[None, :, None, None])
        return y * jax.nn.sigmoid(y)

    y = conv_bn_silu(x, params["w1"], params["g1"], params["be1"],
                     params["m1"], params["v1"], pad=0)
    y = conv_bn_silu(y, params["w2"], params["g2"], params["be2"],
                     params["m2"], params["v2"], pad=1)
    add = shortcut and (x.shape[1] == y.shape[1])
    return x + y if add else y


def make_params(key, c1, c2, e=0.5):
    c_ = int(c2 * e)
    ks = jax.random.split(key, 10)
    return {
        "w1": 0.2 * jax.random.normal(ks[0], (c_, c1, 1, 1), jnp.float32),
        "g1": 1.0 + 0.1 * jax.random.normal(ks[1], (c_,), jnp.float32),
        "be1": 0.05 * jax.random.normal(ks[2], (c_,), jnp.float32),
        "m1": 0.1 * jax.random.normal(ks[3], (c_,), jnp.float32),
        "v1": 0.5 + jnp.abs(jax.random.normal(ks[4], (c_,), jnp.float32)) * 0.5,
        "w2": 0.2 * jax.random.normal(ks[5], (c2, c_, 3, 3), jnp.float32),
        "g2": 1.0 + 0.1 * jax.random.normal(ks[6], (c2,), jnp.float32),
        "be2": 0.05 * jax.random.normal(ks[7], (c2,), jnp.float32),
        "m2": 0.1 * jax.random.normal(ks[8], (c2,), jnp.float32),
        "v2": 0.5 + jnp.abs(jax.random.normal(ks[9], (c2,), jnp.float32)) * 0.5,
    }


if __name__ == "__main__":
    key = jax.random.PRNGKey(0)
    k_x, k_p = jax.random.split(key)

    N, C1, H, W = 2, 4, 16, 16
    C2 = 4                                   # c1 == c2 -> shortcut active
    x = jax.random.normal(k_x, (N, C1, H, W), jnp.float32)
    params = make_params(k_p, C1, C2, e=0.5)

    # block_h=8 -> 2 row bands per image: exercises top/bottom halo handling.
    out = bottleneck_pallas(x, params, shortcut=True, block_h=8)
    out = jax.block_until_ready(out)

    ref = jax.block_until_ready(bottleneck_ref(x, params, shortcut=True))
    assert out.shape == (N, C2, H, W), out.shape
    # bf16 MXU operands + bf16 residual input -> relaxed tolerance vs fp32 ref.
    assert jnp.allclose(out, ref, rtol=5e-2, atol=5e-2), (
        float(jnp.max(jnp.abs(out - ref))))

    print("KERNEL_OK")
</pallas_src>

<mosaic_0001>
module attributes {stable_mosaic.version = 11 : i64} {
  func.func @bottleneck_kernel(%arg0: i32, %arg1: i32, %arg2: memref<1x256x128xbf16, #tpu.memory_space<vmem>>, %arg3: memref<128x128xbf16, #tpu.memory_space<vmem>>, %arg4: memref<1x128xf32, #tpu.memory_space<vmem>>, %arg5: memref<1x128xf32, #tpu.memory_space<vmem>>, %arg6: memref<1152x128xbf16, #tpu.memory_space<vmem>>, %arg7: memref<1x128xf32, #tpu.memory_space<vmem>>, %arg8: memref<1x128xf32, #tpu.memory_space<vmem>>, %arg9: memref<1x128x128xf32, #tpu.memory_space<vmem>>, %arg10: memref<176x128xf32, #tpu.memory_space<vmem>>) attributes {dimension_semantics = [#tpu.dimension_semantics<parallel>, #tpu.dimension_semantics<parallel>], iteration_bounds = array<i64: 2, 2>, scalar_prefetch = 0 : i64, scratch_operands = 1 : i64, tpu.core_type = #tpu.core_type<tc>, window_params = [{transform_indices = @transform_0, window_bounds = array<i64: 1, 256, 128>}, {pipeline_mode = #tpu.pipeline_mode<synchronous>, transform_indices = @transform_1, window_bounds = array<i64: 128, 128>}, {pipeline_mode = #tpu.pipeline_mode<synchronous>, transform_indices = @transform_2, window_bounds = array<i64: 1, 128>}, {pipeline_mode = #tpu.pipeline_mode<synchronous>, transform_indices = @transform_3, window_bounds = array<i64: 1, 128>}, {pipeline_mode = #tpu.pipeline_mode<synchronous>, transform_indices = @transform_4, window_bounds = array<i64: 1152, 128>}, {pipeline_mode = #tpu.pipeline_mode<synchronous>, transform_indices = @transform_5, window_bounds = array<i64: 1, 128>}, {pipeline_mode = #tpu.pipeline_mode<synchronous>, transform_indices = @transform_6, window_bounds = array<i64: 1, 128>}, {transform_indices = @transform_7, window_bounds = array<i64: 1, 128, 128>}]} {
    %c0 = arith.constant 0 : index
    %c0_0 = arith.constant 0 : index
    %0 = vector.load %arg3[%c0, %c0_0] : memref<128x128xbf16, #tpu.memory_space<vmem>>, vector<128x128xbf16>
    %c0_1 = arith.constant 0 : index
    %c0_2 = arith.constant 0 : index
    %1 = vector.load %arg4[%c0_1, %c0_2] : memref<1x128xf32, #tpu.memory_space<vmem>>, vector<1x128xf32>
    %c0_3 = arith.constant 0 : index
    %c0_4 = arith.constant 0 : index
    %2 = vector.load %arg5[%c0_3, %c0_4] : memref<1x128xf32, #tpu.memory_space<vmem>>, vector<1x128xf32>
    %c128_i32 = arith.constant 128 : i32
    %3 = arith.muli %arg1, %c128_i32 : i32
    %4 = tpu.assume_multiple %3, 128 : i32
    %c0_5 = arith.constant 0 : index
    %5 = arith.index_cast %4 : i32 to index
    %c0_6 = arith.constant 0 : index
    %6 = vector.load %arg2[%c0_5, %5, %c0_6] : memref<1x256x128xbf16, #tpu.memory_space<vmem>>, vector<1x128x128xbf16>
    %7 = vector.shape_cast %6 : vector<1x128x128xbf16> to vector<128x128xbf16>
    %cst = arith.constant dense<0.000000e+00> : vector<128x128xf32>
    %8 = tpu.matmul %7, %0, %cst {dimension_numbers = #tpu.dot_dimension_numbers<[1], [0], [0], [1], [0, 0, 1, 1], [], []>} : vector<128x128xbf16>, vector<128x128xbf16>, vector<128x128xf32> -> vector<128x128xf32>
    %9 = vector.broadcast %1 : vector<1x128xf32> to vector<128x128xf32>
    %10 = arith.mulf %8, %9 : vector<128x128xf32>
    %11 = vector.broadcast %2 : vector<1x128xf32> to vector<128x128xf32>
    %12 = arith.addf %10, %11 : vector<128x128xf32>
    %13 = arith.negf %12 : vector<128x128xf32>
    %14 = math.exp %13 : vector<128x128xf32>
    %cst_7 = arith.constant 1.000000e+00 : f32
    %15 = vector.broadcast %cst_7 : f32 to vector<128x128xf32>
    %16 = arith.addf %15, %14 : vector<128x128xf32>
    %17 = arith.divf %15, %16 : vector<128x128xf32>
    %18 = arith.mulf %12, %17 : vector<128x128xf32>
    %c24 = arith.constant 24 : index
    %c0_8 = arith.constant 0 : index
    %19 = vector.load %arg10[%c24, %c0_8] : memref<176x128xf32, #tpu.memory_space<vmem>>, vector<128x128xf32>
    tpu.vector_store %arg10[%c24, %c0_8], %18 {strides = array<i32>} : memref<176x128xf32, #tpu.memory_space<vmem>>, vector<128x128xf32>,
    %c0_i32 = arith.constant 0 : i32
    %20 = arith.cmpi sgt, %arg1, %c0_i32 : i32
    %21 = arith.extui %20 : i1 to i32
    %c0_i32_9 = arith.constant 0 : i32
    %22 = arith.cmpi ne, %21, %c0_i32_9 : i32
    scf.if %22 {
      %c16_i32_48 = arith.constant 16 : i32
      %115 = arith.subi %4, %c16_i32_48 : i32
      %116 = tpu.assume_multiple %115, 16 : i32
      %c0_49 = arith.constant 0 : index
      %117 = arith.index_cast %116 : i32 to index
      %c0_50 = arith.constant 0 : index
      %118 = vector.load %arg2[%c0_49, %117, %c0_50] : memref<1x256x128xbf16, #tpu.memory_space<vmem>>, vector<1x16x128xbf16>
      %119 = vector.shape_cast %118 : vector<1x16x128xbf16> to vector<16x128xbf16>
      %cst_51 = arith.constant dense<0.000000e+00> : vector<16x128xf32>
      %120 = tpu.matmul %119, %0, %cst_51 {dimension_numbers = #tpu.dot_dimension_numbers<[1], [0], [0], [1], [0, 0, 1, 1], [], []>} : vector<16x128xbf16>, vector<128x128xbf16>, vector<16x128xf32> -> vector<16x128xf32>
      %121 = vector.broadcast %1 : vector<1x128xf32> to vector<16x128xf32>
      %122 = arith.mulf %120, %121 : vector<16x128xf32>
      %123 = vector.broadcast %2 : vector<1x128xf32> to vector<16x128xf32>
      %124 = arith.addf %122, %123 : vector<16x128xf32>
      %125 = arith.negf %124 : vector<16x128xf32>
      %126 = math.exp %125 : vector<16x128xf32>
      %cst_52 = arith.constant 1.000000e+00 : f32
      %127 = vector.broadcast %cst_52 : f32 to vector<16x128xf32>
      %128 = arith.addf %127, %126 : vector<16x128xf32>
      %129 = arith.divf %127, %128 : vector<16x128xf32>
      %130 = arith.mulf %124, %129 : vector<16x128xf32>
      %c8_53 = arith.constant 8 : index
      %c0_54 = arith.constant 0 : index
      %131 = vector.load %arg10[%c8_53, %c0_54] : memref<176x128xf32, #tpu.memory_space<vmem>>, vector<16x128xf32>
      tpu.vector_store %arg10[%c8_53, %c0_54], %130 {strides = array<i32>} : memref<176x128xf32, #tpu.memory_space<vmem>>, vector<16x128xf32>,
    } else {
    }
    %c0_i32_10 = arith.constant 0 : i32
    %23 = arith.cmpi eq, %arg1, %c0_i32_10 : i32
    %24 = arith.extui %23 : i1 to i32
    %c0_i32_11 = arith.constant 0 : i32
    %25 = arith.cmpi ne, %24, %c0_i32_11 : i32
    scf.if %25 {
      %cst_48 = arith.constant 0.000000e+00 : f32
      %115 = vector.broadcast %cst_48 : f32 to vector<16x128xf32>
      %c8_49 = arith.constant 8 : index
      %c0_50 = arith.constant 0 : index
      %116 = vector.load %arg10[%c8_49, %c0_50] : memref<176x128xf32, #tpu.memory_space<vmem>>, vector<16x128xf32>
      tpu.vector_store %arg10[%c8_49, %c0_50], %115 {strides = array<i32>} : memref<176x128xf32, #tpu.memory_space<vmem>>, vector<16x128xf32>,
    } else {
    }
    %c1_i32 = arith.constant 1 : i32
    %26 = arith.cmpi slt, %arg1, %c1_i32 : i32
    %27 = arith.extui %26 : i1 to i32
    %c0_i32_12 = arith.constant 0 : i32
    %28 = arith.cmpi ne, %27, %c0_i32_12 : i32
    scf.if %28 {
      %c128_i32_48 = arith.constant 128 : i32
      %115 = arith.addi %4, %c128_i32_48 : i32
      %116 = tpu.assume_multiple %115, 16 : i32
      %c0_49 = arith.constant 0 : index
      %117 = arith.index_cast %116 : i32 to index
      %c0_50 = arith.constant 0 : index
      %118 = vector.load %arg2[%c0_49, %117, %c0_50] : memref<1x256x128xbf16, #tpu.memory_space<vmem>>, vector<1x16x128xbf16>
      %119 = vector.shape_cast %118 : vector<1x16x128xbf16> to vector<16x128xbf16>
      %cst_51 = arith.constant dense<0.000000e+00> : vector<16x128xf32>
      %120 = tpu.matmul %119, %0, %cst_51 {dimension_numbers = #tpu.dot_dimension_numbers<[1], [0], [0], [1], [0, 0, 1, 1], [], []>} : vector<16x128xbf16>, vector<128x128xbf16>, vector<16x128xf32> -> vector<16x128xf32>
      %121 = vector.broadcast %1 : vector<1x128xf32> to vector<16x128xf32>
      %122 = arith.mulf %120, %121 : vector<16x128xf32>
      %123 = vector.broadcast %2 : vector<1x128xf32> to vector<16x128xf32>
      %124 = arith.addf %122, %123 : vector<16x128xf32>
      %125 = arith.negf %124 : vector<16x128xf32>
      %126 = math.exp %125 : vector<16x128xf32>
      %cst_52 = arith.constant 1.000000e+00 : f32
      %127 = vector.broadcast %cst_52 : f32 to vector<16x128xf32>
      %128 = arith.addf %127, %126 : vector<16x128xf32>
      %129 = arith.divf %127, %128 : vector<16x128xf32>
      %130 = arith.mulf %124, %129 : vector<16x128xf32>
      %c152 = arith.constant 152 : index
      %c0_53 = arith.constant 0 : index
      %131 = vector.load %arg10[%c152, %c0_53] : memref<176x128xf32, #tpu.memory_space<vmem>>, vector<16x128xf32>
      tpu.vector_store %arg10[%c152, %c0_53], %130 {strides = array<i32>} : memref<176x128xf32, #tpu.memory_space<vmem>>, vector<16x128xf32>,
    } else {
    }
    %c1_i32_13 = arith.constant 1 : i32
    %29 = arith.cmpi eq, %arg1, %c1_i32_13 : i32
    %30 = arith.extui %29 : i1 to i32
    %c0_i32_14 = arith.constant 0 : i32
    %31 = arith.cmpi ne, %30, %c0_i32_14 : i32
    scf.if %31 {
      %cst_48 = arith.constant 0.000000e+00 : f32
      %115 = vector.broadcast %cst_48 : f32 to vector<16x128xf32>
      %c152 = arith.constant 152 : index
      %c0_49 = arith.constant 0 : index
      %116 = vector.load %arg10[%c152, %c0_49] : memref<176x128xf32, #tpu.memory_space<vmem>>, vector<16x128xf32>
      tpu.vector_store %arg10[%c152, %c0_49], %115 {strides = array<i32>} : memref<176x128xf32, #tpu.memory_space<vmem>>, vector<16x128xf32>,
    } else {
    }
    %32 = tpu.iota {dimensions = array<i32: 0>} : vector<128x1xi32>
    %c16_i32 = arith.constant 16 : i32
    %c0_i32_15 = arith.constant 0 : i32
    %33 = arith.cmpi eq, %c16_i32, %c0_i32_15 : i32
    %c1_i32_16 = arith.constant 1 : i32
    %34 = arith.select %33, %c1_i32_16, %c16_i32 : i32
    %35 = vector.broadcast %34 : i32 to vector<128x1xi32>
    %36 = arith.remsi %32, %35 : vector<128x1xi32>
    %c0_i32_17 = arith.constant 0 : i32
    %37 = vector.broadcast %c0_i32_17 : i32 to vector<128x1xi32>
    %38 = arith.cmpi ne, %36, %37 : vector<128x1xi32>
    %c0_i32_18 = arith.constant 0 : i32
    %39 = vector.broadcast %c0_i32_18 : i32 to vector<128x1xi32>
    %40 = arith.cmpi slt, %36, %39 : vector<128x1xi32>
    %c0_i32_19 = arith.constant 0 : i32
    %41 = arith.cmpi slt, %34, %c0_i32_19 : i32
    %42 = vector.broadcast %41 : i1 to vector<128x1xi1>
    %43 = vector.broadcast %42 : vector<128x1xi1> to vector<128x1xi1>
    %44 = arith.xori %40, %43 : vector<128x1xi1>
    %45 = arith.andi %44, %38 : vector<128x1xi1>
    %46 = vector.broadcast %34 : i32 to vector<128x1xi32>
    %47 = arith.addi %36, %46 : vector<128x1xi32>
    %48 = arith.select %45, %47, %36 : vector<128x1xi1>, vector<128x1xi32>
    %c0_i32_20 = arith.constant 0 : i32
    %49 = vector.broadcast %c0_i32_20 : i32 to vector<128x1xi32>
    %50 = arith.cmpi sgt, %48, %49 : vector<128x1xi32>
    %c15_i32 = arith.constant 15 : i32
    %51 = vector.broadcast %c15_i32 : i32 to vector<128x1xi32>
    %52 = arith.cmpi slt, %48, %51 : vector<128x1xi32>
    %c7 = arith.constant 7 : index
    %c0_21 = arith.constant 0 : index
    %53 = vector.load %arg10[%c7, %c0_21] : memref<176x128xf32, #tpu.memory_space<vmem>>, vector<128x128xf32>
    %cst_22 = arith.constant 0.000000e+00 : f32
    %54 = vector.shape_cast %50 : vector<128x1xi1> to vector<128x1xi1>
    %55 = vector.broadcast %54 : vector<128x1xi1> to vector<128x128xi1>
    %56 = vector.broadcast %cst_22 : f32 to vector<128x128xf32>
    %57 = arith.select %55, %53, %56 : vector<128x128xi1>, vector<128x128xf32>
    %58 = arith.truncf %57 : vector<128x128xf32> to vector<128x128xbf16>
    %c8 = arith.constant 8 : index
    %c0_23 = arith.constant 0 : index
    %59 = vector.load %arg10[%c8, %c0_23] : memref<176x128xf32, #tpu.memory_space<vmem>>, vector<128x128xf32>
    %60 = arith.truncf %59 : vector<128x128xf32> to vector<128x128xbf16>
    %c9 = arith.constant 9 : index
    %c0_24 = arith.constant 0 : index
    %61 = vector.load %arg10[%c9, %c0_24] : memref<176x128xf32, #tpu.memory_space<vmem>>, vector<128x128xf32>
    %cst_25 = arith.constant 0.000000e+00 : f32
    %62 = vector.shape_cast %52 : vector<128x1xi1> to vector<128x1xi1>
    %63 = vector.broadcast %62 : vector<128x1xi1> to vector<128x128xi1>
    %64 = vector.broadcast %cst_25 : f32 to vector<128x128xf32>
    %65 = arith.select %63, %61, %64 : vector<128x128xi1>, vector<128x128xf32>
    %66 = arith.truncf %65 : vector<128x128xf32> to vector<128x128xbf16>
    %c23 = arith.constant 23 : index
    %c0_26 = arith.constant 0 : index
    %67 = vector.load %arg10[%c23, %c0_26] : memref<176x128xf32, #tpu.memory_space<vmem>>, vector<128x128xf32>
    %cst_27 = arith.constant 0.000000e+00 : f32
    %68 = vector.shape_cast %50 : vector<128x1xi1> to vector<128x1xi1>
    %69 = vector.broadcast %68 : vector<128x1xi1> to vector<128x128xi1>
    %70 = vector.broadcast %cst_27 : f32 to vector<128x128xf32>
    %71 = arith.select %69, %67, %70 : vector<128x128xi1>, vector<128x128xf32>
    %72 = arith.truncf %71 : vector<128x128xf32> to vector<128x128xbf16>
    %c24_28 = arith.constant 24 : index
    %c0_29 = arith.constant 0 : index
    %73 = vector.load %arg10[%c24_28, %c0_29] : memref<176x128xf32, #tpu.memory_space<vmem>>, vector<128x128xf32>
    %74 = arith.truncf %73 : vector<128x128xf32> to vector<128x128xbf16>
    %c25 = arith.constant 25 : index
    %c0_30 = arith.constant 0 : index
    %75 = vector.load %arg10[%c25, %c0_30] : memref<176x128xf32, #tpu.memory_space<vmem>>, vector<128x128xf32>
    %cst_31 = arith.constant 0.000000e+00 : f32
    %76 = vector.shape_cast %52 : vector<128x1xi1> to vector<128x1xi1>
    %77 = vector.broadcast %76 : vector<128x1xi1> to vector<128x128xi1>
    %78 = vector.broadcast %cst_31 : f32 to vector<128x128xf32>
    %79 = arith.select %77, %75, %78 : vector<128x128xi1>, vector<128x128xf32>
    %80 = arith.truncf %79 : vector<128x128xf32> to vector<128x128xbf16>
    %c39 = arith.constant 39 : index
    %c0_32 = arith.constant 0 : index
    %81 = vector.load %arg10[%c39, %c0_32] : memref<176x128xf32, #tpu.memory_space<vmem>>, vector<128x128xf32>
    %cst_33 = arith.constant 0.000000e+00 : f32
    %82 = vector.shape_cast %50 : vector<128x1xi1> to vector<128x1xi1>
    %83 = vector.broadcast %82 : vector<128x1xi1> to vector<128x128xi1>
    %84 = vector.broadcast %cst_33 : f32 to vector<128x128xf32>
    %85 = arith.select %83, %81, %84 : vector<128x128xi1>, vector<128x128xf32>
    %86 = arith.truncf %85 : vector<128x128xf32> to vector<128x128xbf16>
    %c40 = arith.constant 40 : index
    %c0_34 = arith.constant 0 : index
    %87 = vector.load %arg10[%c40, %c0_34] : memref<176x128xf32, #tpu.memory_space<vmem>>, vector<128x128xf32>
    %88 = arith.truncf %87 : vector<128x128xf32> to vector<128x128xbf16>
    %c41 = arith.constant 41 : index
    %c0_35 = arith.constant 0 : index
    %89 = vector.load %arg10[%c41, %c0_35] : memref<176x128xf32, #tpu.memory_space<vmem>>, vector<128x128xf32>
    %cst_36 = arith.constant 0.000000e+00 : f32
    %90 = vector.shape_cast %52 : vector<128x1xi1> to vector<128x1xi1>
    %91 = vector.broadcast %90 : vector<128x1xi1> to vector<128x128xi1>
    %92 = vector.broadcast %cst_36 : f32 to vector<128x128xf32>
    %93 = arith.select %91, %89, %92 : vector<128x128xi1>, vector<128x128xf32>
    %94 = arith.truncf %93 : vector<128x128xf32> to vector<128x128xbf16>
    %95 = tpu.concatenate %58, %60, %66, %72, %74, %80, %86, %88, %94 in 1 : vector<128x128xbf16>, vector<128x128xbf16>, vector<128x128xbf16>, vector<128x128xbf16>, vector<128x128xbf16>, vector<128x128xbf16>, vector<128x128xbf16>, vector<128x128xbf16>, vector<128x128xbf16> -> vector<128x1152xbf16>
    %c0_37 = arith.constant 0 : index
    %c0_38 = arith.constant 0 : index
    %96 = vector.load %arg6[%c0_37, %c0_38] : memref<1152x128xbf16, #tpu.memory_space<vmem>>, vector<1152x128xbf16>
    %cst_39 = arith.constant dense<0.000000e+00> : vector<128x128xf32>
    %97 = tpu.matmul %95, %96, %cst_39 {dimension_numbers = #tpu.dot_dimension_numbers<[1], [0], [0], [1], [0, 0, 1, 1], [], []>} : vector<128x1152xbf16>, vector<1152x128xbf16>, vector<128x128xf32> -> vector<128x128xf32>
    %c0_40 = arith.constant 0 : index
    %c0_41 = arith.constant 0 : index
    %98 = vector.load %arg7[%c0_40, %c0_41] : memref<1x128xf32, #tpu.memory_space<vmem>>, vector<1x128xf32>
    %99 = vector.broadcast %98 : vector<1x128xf32> to vector<128x128xf32>
    %100 = arith.mulf %97, %99 : vector<128x128xf32>
    %c0_42 = arith.constant 0 : index
    %c0_43 = arith.constant 0 : index
    %101 = vector.load %arg8[%c0_42, %c0_43] : memref<1x128xf32, #tpu.memory_space<vmem>>, vector<1x128xf32>
    %102 = vector.broadcast %101 : vector<1x128xf32> to vector<128x128xf32>
    %103 = arith.addf %100, %102 : vector<128x128xf32>
    %104 = arith.negf %103 : vector<128x128xf32>
    %105 = math.exp %104 : vector<128x128xf32>
    %cst_44 = arith.constant 1.000000e+00 : f32
    %106 = vector.broadcast %cst_44 : f32 to vector<128x128xf32>
    %107 = arith.addf %106, %105 : vector<128x128xf32>
    %108 = arith.divf %106, %107 : vector<128x128xf32>
    %109 = arith.mulf %103, %108 : vector<128x128xf32>
    %110 = arith.extf %7 : vector<128x128xbf16> to vector<128x128xf32>
    %111 = arith.addf %109, %110 : vector<128x128xf32>
    %c0_45 = arith.constant 0 : index
    %c0_46 = arith.constant 0 : index
    %c0_47 = arith.constant 0 : index
    %112 = vector.load %arg9[%c0_45, %c0_46, %c0_47] : memref<1x128x128xf32, #tpu.memory_space<vmem>>, vector<1x128x128xf32>
    %113 = vector.shape_cast %112 : vector<1x128x128xf32> to vector<128x128xf32>
    %114 = vector.shape_cast %111 : vector<128x128xf32> to vector<1x128x128xf32>
    tpu.vector_store %arg9[%c0_45, %c0_46, %c0_47], %114 {strides = array<i32>} : memref<1x128x128xf32, #tpu.memory_space<vmem>>, vector<1x128x128xf32>,
    return
  }
  func.func @transform_0(%arg0: i32, %arg1: i32) -> (i32, i32, i32) {
    %c0_i32 = arith.constant 0 : i32
    %c0_i32_0 = arith.constant 0 : i32
    %c0_i32_1 = arith.constant 0 : i32
    return %arg0, %c0_i32, %c0_i32_0 : i32, i32, i32
  }
  func.func @transform_1(%arg0: i32, %arg1: i32) -> (i32, i32) {
    %c0_i32 = arith.constant 0 : i32
    %c0_i32_0 = arith.constant 0 : i32
    %c0_i32_1 = arith.constant 0 : i32
    return %c0_i32, %c0_i32_0 : i32, i32
  }
  func.func @transform_2(%arg0: i32, %arg1: i32) -> (i32, i32) {
    %c0_i32 = arith.constant 0 : i32
    %c0_i32_0 = arith.constant 0 : i32
    %c0_i32_1 = arith.constant 0 : i32
    return %c0_i32, %c0_i32_0 : i32, i32
  }
  func.func @transform_3(%arg0: i32, %arg1: i32) -> (i32, i32) {
    %c0_i32 = arith.constant 0 : i32
    %c0_i32_0 = arith.constant 0 : i32
    %c0_i32_1 = arith.constant 0 : i32
    return %c0_i32, %c0_i32_0 : i32, i32
  }
  func.func @transform_4(%arg0: i32, %arg1: i32) -> (i32, i32) {
    %c0_i32 = arith.constant 0 : i32
    %c0_i32_0 = arith.constant 0 : i32
    %c0_i32_1 = arith.constant 0 : i32
    return %c0_i32, %c0_i32_0 : i32, i32
  }
  func.func @transform_5(%arg0: i32, %arg1: i32) -> (i32, i32) {
    %c0_i32 = arith.constant 0 : i32
    %c0_i32_0 = arith.constant 0 : i32
    %c0_i32_1 = arith.constant 0 : i32
    return %c0_i32, %c0_i32_0 : i32, i32
  }
  func.func @transform_6(%arg0: i32, %arg1: i32) -> (i32, i32) {
    %c0_i32 = arith.constant 0 : i32
    %c0_i32_0 = arith.constant 0 : i32
    %c0_i32_1 = arith.constant 0 : i32
    return %c0_i32, %c0_i32_0 : i32, i32
  }
  func.func @transform_7(%arg0: i32, %arg1: i32) -> (i32, i32, i32) {
    %c0_i32 = arith.constant 0 : i32
    %c0_i32_0 = arith.constant 0 : i32
    return %arg0, %arg1, %c0_i32 : i32, i32, i32
  }
}

</mosaic_0001>

<llo_original>
// kernel: tpu_custom_call.1
$region0: #{tpu_custom_call.1}
  #allocation0 [shape = 'u32[]', space=smem, size = 0x4, offset = 0x4, fixed_abs, tag = 'smem constant byte address 0x4 - core index']
  #allocation1 [shape = 'u32[72,128]{1,0:T(1,128)}', space=vmem, size = 0x9000, scoped, tag = 'internal scratch']
  #allocation2 [shape = 'f32[176,128]{1,0:T(8,128)}', space=vmem, size = 0x16000, scoped, tag = 'scratch operand']
  %s0 = inlined_call_operand.hbm [shape: bf16[2,256,128], index: 0, kind: input, shape index: {}]
  %s1 = inlined_call_operand.hbm [shape: bf16[128,128], index: 1, kind: input, shape index: {}]
  %s2 = inlined_call_operand.vmem [shape: f32[1,128], index: 2, kind: input, shape index: {}]
  %s3 = inlined_call_operand.vmem [shape: f32[1,128], index: 3, kind: input, shape index: {}]
  %s4 = inlined_call_operand.hbm [shape: bf16[1152,128], index: 4, kind: input, shape index: {}]
  %s5 = inlined_call_operand.vmem [shape: f32[1,128], index: 5, kind: input, shape index: {}]
  %s6 = inlined_call_operand.vmem [shape: f32[1,128], index: 6, kind: input, shape index: {}]
  %s7 = inlined_call_operand.hbm [shape: f32[2,256,128], index: 7, kind: output, shape index: {}]
  %s8 = sld [smem:[#allocation0]]
  $region89: #{tpu_custom_call.1} parent=0
    _
  %s10 = ssub.s32 1, %s8
  %s11 = scalar_select 0, %s10, %s8
  $region1: #{tpu_custom_call.1} parent=0
    #allocation3 [shape = 'u8[131072]{0}', space=vmem, size = 0x20000, scoped, tag = 'input window, operand 0']
    #allocation4 [shape = 's32[2]{0}', space=sflag, size = 0x8, scoped, tag = 'scoped memory for tpu_custom_call.1']
    #allocation5 [shape = 's32[2]{0}', space=sflag, size = 0x8, scoped, tag = 'scoped memory for tpu_custom_call.1']
    #allocation6 [shape = 'u8[32768]{0}', space=vmem, size = 0x8000, scoped, tag = 'input window, operand 1, single buffered']
    #allocation7 [shape = 's32[1]{0}', space=sflag, size = 0x4, scoped, tag = 'scoped memory for tpu_custom_call.1']
    #allocation8 [shape = 'u8[294912]{0}', space=vmem, size = 0x48000, scoped, tag = 'input window, operand 4, single buffered']
    #allocation9 [shape = 'u8[131072]{0}', space=vmem, size = 0x20000, scoped, tag = 'output window, operand 0']
    %12 = vsyncpa [#allocation4], 0
    %s13 = scalar_lea.sflag [#allocation4], 1
    %14 = vsyncpa %s13, 0
    %15 = vsyncpa [#allocation7], 0
    %16 = vsyncpa [#allocation5], 0
    %s17 = scalar_lea.sflag [#allocation5], 1
    %18 = vsyncpa %s17, 0
    loop: start=0, step=1, limit=6
    $region2: #{tpu_custom_call.1} parent=1 // loop_pre_header
      _
    $region3: #{tpu_custom_call.1} parent=1 // loop_header
      %s20 = sphi 0, %s24
      %p21 = scmp.ge.s32.totalorder %s20, 6
      %s27 = sphi 0, %s39
      %s28 = sphi 0, %s35
      %s29 = sphi 0, %s27
      %s30 = sphi 0, %s28
      %s31 = sphi 0, %s29
      %s32 = sphi 0, %s30
      %s42 = sphi 0, %s44
      %s45 = sphi 0, %s42
      %s46 = sphi 0, %s45
      %s62 = sphi 0, %s46
      %s66 = sphi 0, %s66
      %s68 = sphi 0, %s66
      %s69 = sphi 0, %s68
      %s83 = sphi 0, %s69
      %s87 = sphi 0, %s87
      %s89 = sphi 0, %s87
      %s90 = sphi 0, %s89
      %s104 = sphi 0, %s90
      %s108 = sphi 0, %s108
      %s110 = sphi 0, %s108
      %s111 = sphi 0, %s110
      %s125 = sphi 0, %s111
      %s129 = sphi 0, %s129
      %s131 = sphi 0, %s129
      %s132 = sphi 0, %s131
      %s146 = sphi 0, %s132
      %s150 = sphi 0, %s150
      %s152 = sphi 0, %s150
      %s153 = sphi 0, %s152
      %s167 = sphi 0, %s153
      %s171 = sphi 0, %s171
      %s173 = sphi 0, %s171
      %s174 = sphi 0, %s173
      %s188 = sphi 0, %s174
      %s196 = sphi 0, %s198
      %s199 = sphi 0, %s196
      %s200 = sphi 0, %s199
      %s216 = sphi 0, %s200
    $region4: #{tpu_custom_call.1} parent=1 // loop_header_branch
      %23 = sbr.rel (%p21) target = $region8
    $region5: #{tpu_custom_call.1} parent=1 // loop_body
      %s25 = ssub.s32 %s20, 1
      %s26 = ssub.s32 %s20, 2
      %s33 = sadd.s32 1, %s28
      %p34 = scmp.ge.s32.totalorder %s33, 2
      %s35 = scalar_select %p34, 0, %s33
      %s36 = sadd.s32 1, %s27
      %s37 = scalar_select %p34, %s36, %s27
      %p38 = scmp.ge.s32.totalorder %s37, 2
      %s39 = scalar_select %p38, 0, %s37
      %s40 = ssub.s32 %s27, %s39
      %p41 = scmp.eq.s32.totalorder %s40, 0
      %s43 = sadd.s32 %s42, 1
      %s44 = scalar_select %p41, %s42, %s43
      %p47 = pneg %p41
      %p48 = scmp.eq.s32.totalorder %s20, 3
      %p49 = por %p47, %p48
      %p50 = scmp.ne.s32.totalorder %s42, %s45
      %p51 = scmp.eq.s32.totalorder %s20, 0
      %p52 = por %p50, %p51
      %p53 = scmp.ne.s32.totalorder %s42, %s45
      %p54 = scmp.eq.s32.totalorder %s25, 3
      %p55 = por %p53, %p54
      %p56 = scmp.ne.s32.totalorder %s45, %s46
      %p57 = scmp.eq.s32.totalorder %s25, 0
      %p58 = por %p56, %p57
      %p59 = scmp.ne.s32.totalorder %s45, %s46
      %p60 = scmp.eq.s32.totalorder %s26, 3
      %p61 = por %p59, %p60
      %p63 = scmp.ne.s32.totalorder %s46, %s62
      %p64 = scmp.eq.s32.totalorder %s26, 0
      %p65 = por %p63, %p64
      %s67 = sadd.s32 %s66, 1
      %p70 = scmp.eq.s32.totalorder %s20, 3
      %p71 = scmp.ne.s32.totalorder %s66, %s68
      %p72 = scmp.eq.s32.totalorder %s20, 0
      %p73 = por %p71, %p72
      %p74 = scmp.ne.s32.totalorder %s66, %s68
      %p75 = scmp.eq.s32.totalorder %s25, 3
      %p76 = por %p74, %p75
      %p77 = scmp.ne.s32.totalorder %s68, %s69
      %p78 = scmp.eq.s32.totalorder %s25, 0
      %p79 = por %p77, %p78
      %p80 = scmp.ne.s32.totalorder %s68, %s69
      %p81 = scmp.eq.s32.totalorder %s26, 3
      %p82 = por %p80, %p81
      %p84 = scmp.ne.s32.totalorder %s69, %s83
      %p85 = scmp.eq.s32.totalorder %s26, 0
      %p86 = por %p84, %p85
      %s88 = sadd.s32 %s87, 1
      %p91 = scmp.eq.s32.totalorder %s20, 3
      %p92 = scmp.ne.s32.totalorder %s87, %s89
      %p93 = scmp.eq.s32.totalorder %s20, 0
      %p94 = por %p92, %p93
      %p95 = scmp.ne.s32.totalorder %s87, %s89
      %p96 = scmp.eq.s32.totalorder %s25, 3
      %p97 = por %p95, %p96
      %p98 = scmp.ne.s32.totalorder %s89, %s90
      %p99 = scmp.eq.s32.totalorder %s25, 0
      %p100 = por %p98, %p99
      %p101 = scmp.ne.s32.totalorder %s89, %s90
      %p102 = scmp.eq.s32.totalorder %s26, 3
      %p103 = por %p101, %p102
      %p105 = scmp.ne.s32.totalorder %s90, %s104
      %p106 = scmp.eq.s32.totalorder %s26, 0
      %p107 = por %p105, %p106
      %s109 = sadd.s32 %s108, 1
      %p112 = scmp.eq.s32.totalorder %s20, 3
      %p113 = scmp.ne.s32.totalorder %s108, %s110
      %p114 = scmp.eq.s32.totalorder %s20, 0
      %p115 = por %p113, %p114
      %p116 = scmp.ne.s32.totalorder %s108, %s110
      %p117 = scmp.eq.s32.totalorder %s25, 3
      %p118 = por %p116, %p117
      %p119 = scmp.ne.s32.totalorder %s110, %s111
      %p120 = scmp.eq.s32.totalorder %s25, 0
      %p121 = por %p119, %p120
      %p122 = scmp.ne.s32.totalorder %s110, %s111
      %p123 = scmp.eq.s32.totalorder %s26, 3
      %p124 = por %p122, %p123
      %p126 = scmp.ne.s32.totalorder %s111, %s125
      %p127 = scmp.eq.s32.totalorder %s26, 0
      %p128 = por %p126, %p127
      %s130 = sadd.s32 %s129, 1
      %p133 = scmp.eq.s32.totalorder %s20, 3
      %p134 = scmp.ne.s32.totalorder %s129, %s131
      %p135 = scmp.eq.s32.totalorder %s20, 0
      %p136 = por %p134, %p135
      %p137 = scmp.ne.s32.totalorder %s129, %s131
      %p138 = scmp.eq.s32.totalorder %s25, 3
      %p139 = por %p137, %p138
      %p140 = scmp.ne.s32.totalorder %s131, %s132
      %p141 = scmp.eq.s32.totalorder %s25, 0
      %p142 = por %p140, %p141
      %p143 = scmp.ne.s32.totalorder %s131, %s132
      %p144 = scmp.eq.s32.totalorder %s26, 3
      %p145 = por %p143, %p144
      %p147 = scmp.ne.s32.totalorder %s132, %s146
      %p148 = scmp.eq.s32.totalorder %s26, 0
      %p149 = por %p147, %p148
      %s151 = sadd.s32 %s150, 1
      %p154 = scmp.eq.s32.totalorder %s20, 3
      %p155 = scmp.ne.s32.totalorder %s150, %s152
      %p156 = scmp.eq.s32.totalorder %s20, 0
      %p157 = por %p155, %p156
      %p158 = scmp.ne.s32.totalorder %s150, %s152
      %p159 = scmp.eq.s32.totalorder %s25, 3
      %p160 = por %p158, %p159
      %p161 = scmp.ne.s32.totalorder %s152, %s153
      %p162 = scmp.eq.s32.totalorder %s25, 0
      %p163 = por %p161, %p162
      %p164 = scmp.ne.s32.totalorder %s152, %s153
      %p165 = scmp.eq.s32.totalorder %s26, 3
      %p166 = por %p164, %p165
      %p168 = scmp.ne.s32.totalorder %s153, %s167
      %p169 = scmp.eq.s32.totalorder %s26, 0
      %p170 = por %p168, %p169
      %s172 = sadd.s32 %s171, 1
      %p175 = scmp.eq.s32.totalorder %s20, 3
      %p176 = scmp.ne.s32.totalorder %s171, %s173
      %p177 = scmp.eq.s32.totalorder %s20, 0
      %p178 = por %p176, %p177
      %p179 = scmp.ne.s32.totalorder %s171, %s173
      %p180 = scmp.eq.s32.totalorder %s25, 3
      %p181 = por %p179, %p180
      %p182 = scmp.ne.s32.totalorder %s173, %s174
      %p183 = scmp.eq.s32.totalorder %s25, 0
      %p184 = por %p182, %p183
      %p185 = scmp.ne.s32.totalorder %s173, %s174
      %p186 = scmp.eq.s32.totalorder %s26, 3
      %p187 = por %p185, %p186
      %p189 = scmp.ne.s32.totalorder %s174, %s188
      %p190 = scmp.eq.s32.totalorder %s26, 0
      %p191 = por %p189, %p190
      %s192 = ssub.s32 %s27, %s39
      %s193 = ssub.s32 %s28, %s35
      %s194 = sor.u32 %s192, %s193
      %p195 = scmp.eq.s32.totalorder %s194, 0
      %s197 = sadd.s32 %s196, 1
      %s198 = scalar_select %p195, %s196, %s197
      %p201 = pneg %p195
      %p202 = scmp.eq.s32.totalorder %s20, 3
      %p203 = por %p201, %p202
      %p204 = scmp.ne.s32.totalorder %s196, %s199
      %p205 = scmp.eq.s32.totalorder %s20, 0
      %p206 = por %p204, %p205
      %p207 = scmp.ne.s32.totalorder %s196, %s199
      %p208 = scmp.eq.s32.totalorder %s25, 3
      %p209 = por %p207, %p208
      %p210 = scmp.ne.s32.totalorder %s199, %s200
      %p211 = scmp.eq.s32.totalorder %s25, 0
      %p212 = por %p210, %p211
      %p213 = scmp.ne.s32.totalorder %s199, %s200
      %p214 = scmp.eq.s32.totalorder %s26, 3
      %p215 = por %p213, %p214
      %p217 = scmp.ne.s32.totalorder %s200, %s216
      %p218 = scmp.eq.s32.totalorder %s26, 0
      %p219 = por %p217, %p218
      %p220 = scmp.le.s32.totalorder 1, %s20
      %p221 = scmp.lt.s32.totalorder %s20, 5
      %p222 = pnand %p220, %p221
      %p223 = pneg %p222
      // Predicated region
      $region9: #{tpu_custom_call.1} parent=5 // pred_check
        _
      $region10: #{tpu_custom_call.1} parent=5 // pred_check_branch
        %225 = sbr.rel (%p222) target = $region12
      $region11: #{tpu_custom_call.1} parent=5 // pred_region
        %s226 = ssub.s32 %s20, 1
        // Predicated region
        $region13: #{tpu_custom_call.1} parent=11 // pred_check
          %p227 = pneg %p79
        $region14: #{tpu_custom_call.1} parent=11 // pred_check_branch
          %229 = sbr.rel (%p227) target = $region16
        $region15: #{tpu_custom_call.1} parent=11 // pred_region
          %231 = vsyncadd [#allocation7], 0
          %s232 = sshll.u32 %s1, 4
          %s233 = int_to_ptr.hbm [resolvable:$true] %s232
          %s234 = sshll.u32 [#allocation6], 4
          %s235 = int_to_ptr.vmem [resolvable:$true] %s234
          %240 = dma.hbm_to_vmem [thread:$0]  %s233, 1024, %s235, [#allocation7], 64, 64, 4
        $region16: #{tpu_custom_call.1} parent=11 // pred_fallthru
          _
        // Predicated region
        $region17: #{tpu_custom_call.1} parent=11 // pred_check
          %p241 = pneg %p100
        $region18: #{tpu_custom_call.1} parent=11 // pred_check_branch
          %243 = sbr.rel (%p241) target = $region20
        $region19: #{tpu_custom_call.1} parent=11 // pred_region
          _
        $region20: #{tpu_custom_call.1} parent=11 // pred_fallthru
          _
        // Predicated region
        $region21: #{tpu_custom_call.1} parent=11 // pred_check
          %p244 = pneg %p121
        $region22: #{tpu_custom_call.1} parent=11 // pred_check_branch
          %246 = sbr.rel (%p244) target = $region24
        $region23: #{tpu_custom_call.1} parent=11 // pred_region
          _
        $region24: #{tpu_custom_call.1} parent=11 // pred_fallthru
          _
        // Predicated region
        $region25: #{tpu_custom_call.1} parent=11 // pred_check
          %p247 = pneg %p142
        $region26: #{tpu_custom_call.1} parent=11 // pred_check_branch
          %249 = sbr.rel (%p247) target = $region28
        $region27: #{tpu_custom_call.1} parent=11 // pred_region
          %251 = vsyncadd [#allocation7], 0
          %s252 = sshll.u32 %s4, 4
          %s253 = int_to_ptr.hbm [resolvable:$true] %s252
          %s254 = sshll.u32 [#allocation8], 4
          %s255 = int_to_ptr.vmem [resolvable:$true] %s254
          %260 = dma.hbm_to_vmem [thread:$0]  %s253, 9216, %s255, [#allocation7], 64, 64, 4
        $region28: #{tpu_custom_call.1} parent=11 // pred_fallthru
          _
        // Predicated region
        $region29: #{tpu_custom_call.1} parent=11 // pred_check
          %p261 = pneg %p163
        $region30: #{tpu_custom_call.1} parent=11 // pred_check_branch
          %263 = sbr.rel (%p261) target = $region32
        $region31: #{tpu_custom_call.1} parent=11 // pred_region
          _
        $region32: #{tpu_custom_call.1} parent=11 // pred_fallthru
          _
        // Predicated region
        $region33: #{tpu_custom_call.1} parent=11 // pred_check
          %p264 = pneg %p184
        $region34: #{tpu_custom_call.1} parent=11 // pred_check_branch
          %266 = sbr.rel (%p264) target = $region36
        $region35: #{tpu_custom_call.1} parent=11 // pred_region
          _
        $region36: #{tpu_custom_call.1} parent=11 // pred_fallthru
          _
      $region12: #{tpu_custom_call.1} parent=5 // pred_fallthru
        _
      %p267 = scmp.lt.s32.totalorder %s20, 4
      // Predicated region
      $region37: #{tpu_custom_call.1} parent=5 // pred_check
        %p268 = pneg %p267
      $region38: #{tpu_custom_call.1} parent=5 // pred_check_branch
        %270 = sbr.rel (%p268) target = $region40
      $region39: #{tpu_custom_call.1} parent=5 // pred_region
        // Predicated region
        $region41: #{tpu_custom_call.1} parent=39 // pred_check
          %p271 = pneg %p52
        $region42: #{tpu_custom_call.1} parent=39 // pred_check_branch
          %273 = sbr.rel (%p271) target = $region44
        $region43: #{tpu_custom_call.1} parent=39 // pred_region
          %s274 = sand.u32 %s42, 1
          %s275 = scalar_lea.sflag [#allocation4], %s274
          %s276 = sand.u32 %s42, 1
          %s277 = smul.addr %s276, 128
          %s278 = scalar_lea.vmem [#allocation3], %s277
          %280 = vsyncadd %s275, 0
          %s281 = smul.addr %s27, 32
          %s282 = smul.addr %s281, 4
          %s283 = scalar_lea.hbm %s0, %s282
          %s284 = sshll.u32 %s283, 4
          %s285 = int_to_ptr.hbm [resolvable:$true] %s284
          %s286 = sshll.u32 %s278, 4
          %s287 = int_to_ptr.vmem [resolvable:$true] %s286
          %292 = dma.hbm_to_vmem [thread:$0]  %s285, 2048, %s287, %s275, 64, 64, 4
        $region44: #{tpu_custom_call.1} parent=39 // pred_fallthru
          _
      $region40: #{tpu_custom_call.1} parent=5 // pred_fallthru
        _
      %p293 = scmp.le.s32.totalorder 1, %s20
      %p294 = scmp.lt.s32.totalorder %s20, 5
      %p295 = pnand %p293, %p294
      %p296 = pneg %p295
      // Predicated region
      $region45: #{tpu_custom_call.1} parent=5 // pred_check
        _
      $region46: #{tpu_custom_call.1} parent=5 // pred_check_branch
        %298 = sbr.rel (%p295) target = $region48
      $region47: #{tpu_custom_call.1} parent=5 // pred_region
        %s299 = ssub.s32 %s20, 1
        %s300 = sand.u32 %s45, 1
        %s301 = scalar_lea.sflag [#allocation4], %s300
        %s302 = sand.u32 %s45, 1
        %s303 = smul.addr %s302, 128
        %s304 = scalar_lea.vmem [#allocation3], %s303
        // Predicated region
        $region49: #{tpu_custom_call.1} parent=47 // pred_check
          %p305 = pneg %p58
        $region50: #{tpu_custom_call.1} parent=47 // pred_check_branch
          %307 = sbr.rel (%p305) target = $region52
        $region51: #{tpu_custom_call.1} parent=47 // pred_region
          %309 = dma.done %s301, 2048
        $region52: #{tpu_custom_call.1} parent=47 // pred_fallthru
          _
        // Predicated region
        $region53: #{tpu_custom_call.1} parent=47 // pred_check
          %p310 = pneg %p79
        $region54: #{tpu_custom_call.1} parent=47 // pred_check_branch
          %312 = sbr.rel (%p310) target = $region56
        $region55: #{tpu_custom_call.1} parent=47 // pred_region
          %314 = dma.done [#allocation7], 1024
        $region56: #{tpu_custom_call.1} parent=47 // pred_fallthru
          _
        // Predicated region
        $region57: #{tpu_custom_call.1} parent=47 // pred_check
          %p315 = pneg %p142
        $region58: #{tpu_custom_call.1} parent=47 // pred_check_branch
          %317 = sbr.rel (%p315) target = $region60
        $region59: #{tpu_custom_call.1} parent=47 // pred_region
          %319 = dma.done [#allocation7], 9216
        $region60: #{tpu_custom_call.1} parent=47 // pred_fallthru
          _
        %s320 = sand.u32 %s45, 1
        %s321 = scalar_lea.sflag [#allocation4], %s320
        %s322 = sand.u32 %s45, 1
        %s323 = smul.addr %s322, 128
        %s324 = scalar_lea.vmem [#allocation3], %s323
        %p325 = pneg %p58
        %p326 = pneg %p55
        %p327 = pneg %p79
        %p328 = pneg %p76
        %p329 = pneg %p100
        %p330 = pneg %p97
        %p331 = pneg %p121
        %p332 = pneg %p118
        %p333 = pneg %p142
        %p334 = pneg %p139
        %p335 = pneg %p163
        %p336 = pneg %p160
        %p337 = pneg %p184
        %p338 = pneg %p181
        %p339 = pneg %p212
        %p340 = pneg %p209
        %s341 = sand.u32 %s199, 1
        %s342 = scalar_lea.sflag [#allocation5], %s341
        %s343 = sand.u32 %s199, 1
        %s344 = smul.addr %s343, 128
        %s345 = scalar_lea.vmem [#allocation9], %s344
        %s346 = smul.u32 16, %s30
        %v347 = vld [vmem:[#allocation6] sm:$0xf]
        %v348 = vld [vmem:[#allocation6 + $0x4] sm:$0xf]
        %v349 = vld [vmem:[#allocation6 + $0x8] sm:$0xf]
        %v350 = vld [vmem:[#allocation6 + $0xc] sm:$0xf]
        %v351 = vld [vmem:[#allocation6 + $0x10] sm:$0xf]
        %v352 = vld [vmem:[#allocation6 + $0x14] sm:$0xf]
        %v353 = vld [vmem:[#allocation6 + $0x18] sm:$0xf]
        %v354 = vld [vmem:[#allocation6 + $0x1c] sm:$0xf]
        %v355 = vld [vmem:[#allocation6 + $0x20] sm:$0xf]
        %v356 = vld [vmem:[#allocation6 + $0x24] sm:$0xf]
        %v357 = vld [vmem:[#allocation6 + $0x28] sm:$0xf]
        %v358 = vld [vmem:[#allocation6 + $0x2c] sm:$0xf]
        %v359 = vld [vmem:[#allocation6 + $0x30] sm:$0xf]
        %v360 = vld [vmem:[#allocation6 + $0x34] sm:$0xf]
        %v361 = vld [vmem:[#allocation6 + $0x38] sm:$0xf]
        %v362 = vld [vmem:[#allocation6 + $0x3c] sm:$0xf]
        %v363 = vld [vmem:[%s2] sm:$0x1]
        %v364 = vld [vmem:[%s3] sm:$0x1]
        %s365 = smul.u32 %s30, 128
        %s366 = sshra.s32 %s365, 3
        %s367 = sand.u32 %s365, 7
        %s368 = smul.addr %s366, 4
        %s369 = scalar_lea.vmem %s304, %s368 [#allocation3]
        %v370 = vld [vmem:[%s369] sm:$0xf]
        %v371 = vld [vmem:[%s369 + $0x4] sm:$0xf]
        %v372 = vld [vmem:[%s369 + $0x8] sm:$0xf]
        %v373 = vld [vmem:[%s369 + $0xc] sm:$0xf]
        %v374 = vld [vmem:[%s369 + $0x10] sm:$0xf]
        %v375 = vld [vmem:[%s369 + $0x14] sm:$0xf]
        %v376 = vld [vmem:[%s369 + $0x18] sm:$0xf]
        %v377 = vld [vmem:[%s369 + $0x1c] sm:$0xf]
        %v378 = vld [vmem:[%s369 + $0x20] sm:$0xf]
        %v379 = vld [vmem:[%s369 + $0x24] sm:$0xf]
        %v380 = vld [vmem:[%s369 + $0x28] sm:$0xf]
        %v381 = vld [vmem:[%s369 + $0x2c] sm:$0xf]
        %v382 = vld [vmem:[%s369 + $0x30] sm:$0xf]
        %v383 = vld [vmem:[%s369 + $0x34] sm:$0xf]
        %v384 = vld [vmem:[%s369 + $0x38] sm:$0xf]
        %v385 = vld [vmem:[%s369 + $0x3c] sm:$0xf]
        %v402 = vunpack.c.l.b16 %v370
        %v403 = vunpack.c.l.b16 %v371
        %v404 = vunpack.c.l.b16 %v372
        %v405 = vunpack.c.l.b16 %v373
        %v406 = vunpack.c.l.b16 %v374
        %v407 = vunpack.c.l.b16 %v375
        %v408 = vunpack.c.l.b16 %v376
        %v409 = vunpack.c.l.b16 %v377
        %v410 = vunpack.c.l.b16 %v378
        %v411 = vunpack.c.l.b16 %v379
        %v412 = vunpack.c.l.b16 %v380
        %v413 = vunpack.c.l.b16 %v381
        %v414 = vunpack.c.l.b16 %v382
        %v415 = vunpack.c.l.b16 %v383
        %v416 = vunpack.c.l.b16 %v384
        %v417 = vunpack.c.l.b16 %v385
        %v418 = vpack.c.b16 %v403, %v402
        %v419 = vpack.c.b16 %v405, %v404
        %v420 = vpack.c.b16 %v407, %v406
        %v421 = vpack.c.b16 %v409, %v408
        %v422 = vpack.c.b16 %v411, %v410
        %v423 = vpack.c.b16 %v413, %v412
        %v424 = vpack.c.b16 %v415, %v414
        %v425 = vpack.c.b16 %v417, %v416
        %v450 = vunpack.c.l.b16 %v347
        %v451 = vunpack.c.l.b16 %v348
        %v452 = vunpack.c.l.b16 %v349
        %v453 = vunpack.c.l.b16 %v350
        %v454 = vunpack.c.l.b16 %v351
        %v455 = vunpack.c.l.b16 %v352
        %v456 = vunpack.c.l.b16 %v353
        %v457 = vunpack.c.l.b16 %v354
        %v458 = vunpack.c.l.b16 %v355
        %v459 = vunpack.c.l.b16 %v356
        %v460 = vunpack.c.l.b16 %v357
        %v461 = vunpack.c.l.b16 %v358
        %v462 = vunpack.c.l.b16 %v359
        %v463 = vunpack.c.l.b16 %v360
        %v464 = vunpack.c.l.b16 %v361
        %v465 = vunpack.c.l.b16 %v362
        %v466 = vpack.c.b16 %v451, %v450
        %v467 = vpack.c.b16 %v453, %v452
        %v468 = vpack.c.b16 %v455, %v454
        %v469 = vpack.c.b16 %v457, %v456
        %v470 = vpack.c.b16 %v459, %v458
        %v471 = vpack.c.b16 %v461, %v460
        %v472 = vpack.c.b16 %v463, %v462
        %v473 = vpack.c.b16 %v465, %v464
        %482 = vmatpush.bf16.msra.mxu0 %v473
        %483 = vmatpush.bf16.msra.mxu0 %v472
        %484 = vmatpush.bf16.msra.mxu0 %v471
        %485 = vmatpush.bf16.msra.mxu0 %v470
        %486 = vmatpush.bf16.msra.mxu0 %v469
        %487 = vmatpush.bf16.msra.mxu0 %v468
        %488 = vmatpush.bf16.msra.mxu0 %v467
        %489 = vmatpush.bf16.msra.mxu0 %v466
        %490 = vmatmul.bf16.gmra.mxu0 %v418
        %v491 = vpop.f32.mrf.mxu0
        %v492 = vadd.f32 0.0, %v491
        %v493 = vpop.f32.mrf.mxu0
        %v494 = vadd.f32 0.0, %v493
        %495 = vmatmul.bf16.gmra.mxu0 %v419
        %v496 = vpop.f32.mrf.mxu0
        %v497 = vadd.f32 0.0, %v496
        %v498 = vpop.f32.mrf.mxu0
        %v499 = vadd.f32 0.0, %v498
        %500 = vmatmul.bf16.gmra.mxu0 %v420
        %v501 = vpop.f32.mrf.mxu0
        %v502 = vadd.f32 0.0, %v501
        %v503 = vpop.f32.mrf.mxu0
        %v504 = vadd.f32 0.0, %v503
        %505 = vmatmul.bf16.gmra.mxu0 %v421
        %v506 = vpop.f32.mrf.mxu0
        %v507 = vadd.f32 0.0, %v506
        %v508 = vpop.f32.mrf.mxu0
        %v509 = vadd.f32 0.0, %v508
        %510 = vmatmul.bf16.gmra.mxu0 %v422
        %v511 = vpop.f32.mrf.mxu0
        %v512 = vadd.f32 0.0, %v511
        %v513 = vpop.f32.mrf.mxu0
        %v514 = vadd.f32 0.0, %v513
        %515 = vmatmul.bf16.gmra.mxu0 %v423
        %v516 = vpop.f32.mrf.mxu0
        %v517 = vadd.f32 0.0, %v516
        %v518 = vpop.f32.mrf.mxu0
        %v519 = vadd.f32 0.0, %v518
        %520 = vmatmul.bf16.gmra.mxu0 %v424
        %v521 = vpop.f32.mrf.mxu0
        %v522 = vadd.f32 0.0, %v521
        %v523 = vpop.f32.mrf.mxu0
        %v524 = vadd.f32 0.0, %v523
        %525 = vmatmul.bf16.gmra.mxu0 %v425
        %v526 = vpop.f32.mrf.mxu0
        %v527 = vadd.f32 0.0, %v526
        %v528 = vpop.f32.mrf.mxu0
        %v529 = vadd.f32 0.0, %v528
        %530 = vdwg.mxu0
        %v532 = vperm.slane %v363, 0
        %v534 = vmul.f32 %v492, %v532
        %v535 = vmul.f32 %v494, %v532
        %v536 = vmul.f32 %v497, %v532
        %v537 = vmul.f32 %v499, %v532
        %v538 = vmul.f32 %v502, %v532
        %v539 = vmul.f32 %v504, %v532
        %v540 = vmul.f32 %v507, %v532
        %v541 = vmul.f32 %v509, %v532
        %v542 = vmul.f32 %v512, %v532
        %v543 = vmul.f32 %v514, %v532
        %v544 = vmul.f32 %v517, %v532
        %v545 = vmul.f32 %v519, %v532
        %v546 = vmul.f32 %v522, %v532
        %v547 = vmul.f32 %v524, %v532
        %v548 = vmul.f32 %v527, %v532
        %v549 = vmul.f32 %v529, %v532
        %v551 = vperm.slane %v364, 0
        %v553 = vadd.f32 %v534, %v551
        %v554 = vadd.f32 %v535, %v551
        %v555 = vadd.f32 %v536, %v551
        %v556 = vadd.f32 %v537, %v551
        %v557 = vadd.f32 %v538, %v551
        %v558 = vadd.f32 %v539, %v551
        %v559 = vadd.f32 %v540, %v551
        %v560 = vadd.f32 %v541, %v551
        %v561 = vadd.f32 %v542, %v551
        %v562 = vadd.f32 %v543, %v551
        %v563 = vadd.f32 %v544, %v551
        %v564 = vadd.f32 %v545, %v551
        %v565 = vadd.f32 %v546, %v551
        %v566 = vadd.f32 %v547, %v551
        %v567 = vadd.f32 %v548, %v551
        %v568 = vadd.f32 %v549, %v551
        %v569 = vxor.u32 %v553, 2147483648
        %v570 = vxor.u32 %v554, 2147483648
        %v571 = vxor.u32 %v555, 2147483648
        %v572 = vxor.u32 %v556, 2147483648
        %v573 = vxor.u32 %v557, 2147483648
        %v574 = vxor.u32 %v558, 2147483648
        %v575 = vxor.u32 %v559, 2147483648
        %v576 = vxor.u32 %v560, 2147483648
        %v577 = vxor.u32 %v561, 2147483648
        %v578 = vxor.u32 %v562, 2147483648
        %v579 = vxor.u32 %v563, 2147483648
        %v580 = vxor.u32 %v564, 2147483648
        %v581 = vxor.u32 %v565, 2147483648
        %v582 = vxor.u32 %v566, 2147483648
        %v583 = vxor.u32 %v567, 2147483648
        %v584 = vxor.u32 %v568, 2147483648
        %v585 = vmul.f32 %v569, 1.442695
        %v586 = vpow.pop %v585
        %v587 = vmul.f32 %v570, 1.442695
        %v588 = vpow.pop %v587
        %v589 = vmul.f32 %v571, 1.442695
        %v590 = vpow.pop %v589
        %v591 = vmul.f32 %v572, 1.442695
        %v592 = vpow.pop %v591
        %v593 = vmul.f32 %v573, 1.442695
        %v594 = vpow.pop %v593
        %v595 = vmul.f32 %v574, 1.442695
        %v596 = vpow.pop %v595
        %v597 = vmul.f32 %v575, 1.442695
        %v598 = vpow.pop %v597
        %v599 = vmul.f32 %v576, 1.442695
        %v600 = vpow.pop %v599
        %v601 = vmul.f32 %v577, 1.442695
        %v602 = vpow.pop %v601
        %v603 = vmul.f32 %v578, 1.442695
        %v604 = vpow.pop %v603
        %v605 = vmul.f32 %v579, 1.442695
        %v606 = vpow.pop %v605
        %v607 = vmul.f32 %v580, 1.442695
        %v608 = vpow.pop %v607
        %v609 = vmul.f32 %v581, 1.442695
        %v610 = vpow.pop %v609
        %v611 = vmul.f32 %v582, 1.442695
        %v612 = vpow.pop %v611
        %v613 = vmul.f32 %v583, 1.442695
        %v614 = vpow.pop %v613
        %v615 = vmul.f32 %v584, 1.442695
        %v616 = vpow.pop %v615
        %v617 = vadd.f32 %v586, 1.0
        %v618 = vadd.f32 %v588, 1.0
        %v619 = vadd.f32 %v590, 1.0
        %v620 = vadd.f32 %v592, 1.0
        %v621 = vadd.f32 %v594, 1.0
        %v622 = vadd.f32 %v596, 1.0
        %v623 = vadd.f32 %v598, 1.0
        %v624 = vadd.f32 %v600, 1.0
        %v625 = vadd.f32 %v602, 1.0
        %v626 = vadd.f32 %v604, 1.0
        %v627 = vadd.f32 %v606, 1.0
        %v628 = vadd.f32 %v608, 1.0
        %v629 = vadd.f32 %v610, 1.0
        %v630 = vadd.f32 %v612, 1.0
        %v631 = vadd.f32 %v614, 1.0
        %v632 = vadd.f32 %v616, 1.0
        %v633 = vrcp.pop %v617
        %v634 = vmul.f32 %v617, %v633
        %v635 = vsub.f32 1.0, %v634
        %v636 = vmul.f32 %v633, %v635
        %v637 = vadd.f32 %v633, %v636
        %vm638 = vweird.f32 %v617
        %vm639 = vweird.f32 %v633
        %vm640 = vmor %vm638, %vm639
        %v641 = vsel %vm640, %v633, %v637
        %v642 = vand.u32 2147483647, %v617
        %vm643 = vcmp.eq.f32.partialorder %v642, 8.507059e+37
        %v644 = vand.u32 %v617, 2147483648
        %v645 = vor.u32 1.1754944e-38, %v644
        %v646 = vsel %vm643, %v645, %v641
        %v647 = vmul.f32 1.0, %v646
        %v648 = vrcp.pop %v618
        %v649 = vmul.f32 %v618, %v648
        %v650 = vsub.f32 1.0, %v649
        %v651 = vmul.f32 %v648, %v650
        %v652 = vadd.f32 %v648, %v651
        %vm653 = vweird.f32 %v618
        %vm654 = vweird.f32 %v648
        %vm655 = vmor %vm653, %vm654
        %v656 = vsel %vm655, %v648, %v652
        %v657 = vand.u32 2147483647, %v618
        %vm658 = vcmp.eq.f32.partialorder %v657, 8.507059e+37
        %v659 = vand.u32 %v618, 2147483648
        %v660 = vor.u32 1.1754944e-38, %v659
        %v661 = vsel %vm658, %v660, %v656
        %v662 = vmul.f32 1.0, %v661
        %v663 = vrcp.pop %v619
        %v664 = vmul.f32 %v619, %v663
        %v665 = vsub.f32 1.0, %v664
        %v666 = vmul.f32 %v663, %v665
        %v667 = vadd.f32 %v663, %v666
        %vm668 = vweird.f32 %v619
        %vm669 = vweird.f32 %v663
        %vm670 = vmor %vm668, %vm669
        %v671 = vsel %vm670, %v663, %v667
        %v672 = vand.u32 2147483647, %v619
        %vm673 = vcmp.eq.f32.partialorder %v672, 8.507059e+37
        %v674 = vand.u32 %v619, 2147483648
        %v675 = vor.u32 1.1754944e-38, %v674
        %v676 = vsel %vm673, %v675, %v671
        %v677 = vmul.f32 1.0, %v676
        %v678 = vrcp.pop %v620
        %v679 = vmul.f32 %v620, %v678
        %v680 = vsub.f32 1.0, %v679
        %v681 = vmul.f32 %v678, %v680
        %v682 = vadd.f32 %v678, %v681
        %vm683 = vweird.f32 %v620
        %vm684 = vweird.f32 %v678
        %vm685 = vmor %vm683, %vm684
        %v686 = vsel %vm685, %v678, %v682
        %v687 = vand.u32 2147483647, %v620
        %vm688 = vcmp.eq.f32.partialorder %v687, 8.507059e+37
        %v689 = vand.u32 %v620, 2147483648
        %v690 = vor.u32 1.1754944e-38, %v689
        %v691 = vsel %vm688, %v690, %v686
        %v692 = vmul.f32 1.0, %v691
        %v693 = vrcp.pop %v621
        %v694 = vmul.f32 %v621, %v693
        %v695 = vsub.f32 1.0, %v694
        %v696 = vmul.f32 %v693, %v695
        %v697 = vadd.f32 %v693, %v696
        %vm698 = vweird.f32 %v621
        %vm699 = vweird.f32 %v693
        %vm700 = vmor %vm698, %vm699
        %v701 = vsel %vm700, %v693, %v697
        %v702 = vand.u32 2147483647, %v621
        %vm703 = vcmp.eq.f32.partialorder %v702, 8.507059e+37
        %v704 = vand.u32 %v621, 2147483648
        %v705 = vor.u32 1.1754944e-38, %v704
        %v706 = vsel %vm703, %v705, %v701
        %v707 = vmul.f32 1.0, %v706
        %v708 = vrcp.pop %v622
        %v709 = vmul.f32 %v622, %v708
        %v710 = vsub.f32 1.0, %v709
        %v711 = vmul.f32 %v708, %v710
        %v712 = vadd.f32 %v708, %v711
        %vm713 = vweird.f32 %v622
        %vm714 = vweird.f32 %v708
        %vm715 = vmor %vm713, %vm714
        %v716 = vsel %vm715, %v708, %v712
        %v717 = vand.u32 2147483647, %v622
        %vm718 = vcmp.eq.f32.partialorder %v717, 8.507059e+37
        %v719 = vand.u32 %v622, 2147483648
        %v720 = vor.u32 1.1754944e-38, %v719
        %v721 = vsel %vm718, %v720, %v716
        %v722 = vmul.f32 1.0, %v721
        %v723 = vrcp.pop %v623
        %v724 = vmul.f32 %v623, %v723
        %v725 = vsub.f32 1.0, %v724
        %v726 = vmul.f32 %v723, %v725
        %v727 = vadd.f32 %v723, %v726
        %vm728 = vweird.f32 %v623
        %vm729 = vweird.f32 %v723
        %vm730 = vmor %vm728, %vm729
        %v731 = vsel %vm730, %v723, %v727
        %v732 = vand.u32 2147483647, %v623
        %vm733 = vcmp.eq.f32.partialorder %v732, 8.507059e+37
        %v734 = vand.u32 %v623, 2147483648
        %v735 = vor.u32 1.1754944e-38, %v734
        %v736 = vsel %vm733, %v735, %v731
        %v737 = vmul.f32 1.0, %v736
        %v738 = vrcp.pop %v624
        %v739 = vmul.f32 %v624, %v738
        %v740 = vsub.f32 1.0, %v739
        %v741 = vmul.f32 %v738, %v740
        %v742 = vadd.f32 %v738, %v741
        %vm743 = vweird.f32 %v624
        %vm744 = vweird.f32 %v738
        %vm745 = vmor %vm743, %vm744
        %v746 = vsel %vm745, %v738, %v742
        %v747 = vand.u32 2147483647, %v624
        %vm748 = vcmp.eq.f32.partialorder %v747, 8.507059e+37
        %v749 = vand.u32 %v624, 2147483648
        %v750 = vor.u32 1.1754944e-38, %v749
        %v751 = vsel %vm748, %v750, %v746
        %v752 = vmul.f32 1.0, %v751
        %v753 = vrcp.pop %v625
        %v754 = vmul.f32 %v625, %v753
        %v755 = vsub.f32 1.0, %v754
        %v756 = vmul.f32 %v753, %v755
        %v757 = vadd.f32 %v753, %v756
        %vm758 = vweird.f32 %v625
        %vm759 = vweird.f32 %v753
        %vm760 = vmor %vm758, %vm759
        %v761 = vsel %vm760, %v753, %v757
        %v762 = vand.u32 2147483647, %v625
        %vm763 = vcmp.eq.f32.partialorder %v762, 8.507059e+37
        %v764 = vand.u32 %v625, 2147483648
        %v765 = vor.u32 1.1754944e-38, %v764
        %v766 = vsel %vm763, %v765, %v761
        %v767 = vmul.f32 1.0, %v766
        %v768 = vrcp.pop %v626
        %v769 = vmul.f32 %v626, %v768
        %v770 = vsub.f32 1.0, %v769
        %v771 = vmul.f32 %v768, %v770
        %v772 = vadd.f32 %v768, %v771
        %vm773 = vweird.f32 %v626
        %vm774 = vweird.f32 %v768
        %vm775 = vmor %vm773, %vm774
        %v776 = vsel %vm775, %v768, %v772
        %v777 = vand.u32 2147483647, %v626
        %vm778 = vcmp.eq.f32.partialorder %v777, 8.507059e+37
        %v779 = vand.u32 %v626, 2147483648
        %v780 = vor.u32 1.1754944e-38, %v779
        %v781 = vsel %vm778, %v780, %v776
        %v782 = vmul.f32 1.0, %v781
        %v783 = vrcp.pop %v627
        %v784 = vmul.f32 %v627, %v783
        %v785 = vsub.f32 1.0, %v784
        %v786 = vmul.f32 %v783, %v785
        %v787 = vadd.f32 %v783, %v786
        %vm788 = vweird.f32 %v627
        %vm789 = vweird.f32 %v783
        %vm790 = vmor %vm788, %vm789
        %v791 = vsel %vm790, %v783, %v787
        %v792 = vand.u32 2147483647, %v627
        %vm793 = vcmp.eq.f32.partialorder %v792, 8.507059e+37
        %v794 = vand.u32 %v627, 2147483648
        %v795 = vor.u32 1.1754944e-38, %v794
        %v796 = vsel %vm793, %v795, %v791
        %v797 = vmul.f32 1.0, %v796
        %v798 = vrcp.pop %v628
        %v799 = vmul.f32 %v628, %v798
        %v800 = vsub.f32 1.0, %v799
        %v801 = vmul.f32 %v798, %v800
        %v802 = vadd.f32 %v798, %v801
        %vm803 = vweird.f32 %v628
        %vm804 = vweird.f32 %v798
        %vm805 = vmor %vm803, %vm804
        %v806 = vsel %vm805, %v798, %v802
        %v807 = vand.u32 2147483647, %v628
        %vm808 = vcmp.eq.f32.partialorder %v807, 8.507059e+37
        %v809 = vand.u32 %v628, 2147483648
        %v810 = vor.u32 1.1754944e-38, %v809
        %v811 = vsel %vm808, %v810, %v806
        %v812 = vmul.f32 1.0, %v811
        %v813 = vrcp.pop %v629
        %v814 = vmul.f32 %v629, %v813
        %v815 = vsub.f32 1.0, %v814
        %v816 = vmul.f32 %v813, %v815
        %v817 = vadd.f32 %v813, %v816
        %vm818 = vweird.f32 %v629
        %vm819 = vweird.f32 %v813
        %vm820 = vmor %vm818, %vm819
        %v821 = vsel %vm820, %v813, %v817
        %v822 = vand.u32 2147483647, %v629
        %vm823 = vcmp.eq.f32.partialorder %v822, 8.507059e+37
        %v824 = vand.u32 %v629, 2147483648
        %v825 = vor.u32 1.1754944e-38, %v824
        %v826 = vsel %vm823, %v825, %v821
        %v827 = vmul.f32 1.0, %v826
        %v828 = vrcp.pop %v630
        %v829 = vmul.f32 %v630, %v828
        %v830 = vsub.f32 1.0, %v829
        %v831 = vmul.f32 %v828, %v830
        %v832 = vadd.f32 %v828, %v831
        %vm833 = vweird.f32 %v630
        %vm834 = vweird.f32 %v828
        %vm835 = vmor %vm833, %vm834
        %v836 = vsel %vm835, %v828, %v832
        %v837 = vand.u32 2147483647, %v630
        %vm838 = vcmp.eq.f32.partialorder %v837, 8.507059e+37
        %v839 = vand.u32 %v630, 2147483648
        %v840 = vor.u32 1.1754944e-38, %v839
        %v841 = vsel %vm838, %v840, %v836
        %v842 = vmul.f32 1.0, %v841
        %v843 = vrcp.pop %v631
        %v844 = vmul.f32 %v631, %v843
        %v845 = vsub.f32 1.0, %v844
        %v846 = vmul.f32 %v843, %v845
        %v847 = vadd.f32 %v843, %v846
        %vm848 = vweird.f32 %v631
        %vm849 = vweird.f32 %v843
        %vm850 = vmor %vm848, %vm849
        %v851 = vsel %vm850, %v843, %v847
        %v852 = vand.u32 2147483647, %v631
        %vm853 = vcmp.eq.f32.partialorder %v852, 8.507059e+37
        %v854 = vand.u32 %v631, 2147483648
        %v855 = vor.u32 1.1754944e-38, %v854
        %v856 = vsel %vm853, %v855, %v851
        %v857 = vmul.f32 1.0, %v856
        %v858 = vrcp.pop %v632
        %v859 = vmul.f32 %v632, %v858
        %v860 = vsub.f32 1.0, %v859
        %v861 = vmul.f32 %v858, %v860
        %v862 = vadd.f32 %v858, %v861
        %vm863 = vweird.f32 %v632
        %vm864 = vweird.f32 %v858
        %vm865 = vmor %vm863, %vm864
        %v866 = vsel %vm865, %v858, %v862
        %v867 = vand.u32 2147483647, %v632
        %vm868 = vcmp.eq.f32.partialorder %v867, 8.507059e+37
        %v869 = vand.u32 %v632, 2147483648
        %v870 = vor.u32 1.1754944e-38, %v869
        %v871 = vsel %vm868, %v870, %v866
        %v872 = vmul.f32 1.0, %v871
        %v873 = vmul.f32 %v553, %v647
        %v874 = vmul.f32 %v554, %v662
        %v875 = vmul.f32 %v555, %v677
        %v876 = vmul.f32 %v556, %v692
        %v877 = vmul.f32 %v557, %v707
        %v878 = vmul.f32 %v558, %v722
        %v879 = vmul.f32 %v559, %v737
        %v880 = vmul.f32 %v560, %v752
        %v881 = vmul.f32 %v561, %v767
        %v882 = vmul.f32 %v562, %v782
        %v883 = vmul.f32 %v563, %v797
        %v884 = vmul.f32 %v564, %v812
        %v885 = vmul.f32 %v565, %v827
        %v886 = vmul.f32 %v566, %v842
        %v887 = vmul.f32 %v567, %v857
        %v888 = vmul.f32 %v568, %v872
        %889 = vst [vmem:[#allocation2 + $0x18] sm:$0xff] %v873
        %890 = vst [vmem:[#allocation2 + $0x20] sm:$0xff] %v874
        %891 = vst [vmem:[#allocation2 + $0x28] sm:$0xff] %v875
        %892 = vst [vmem:[#allocation2 + $0x30] sm:$0xff] %v876
        %893 = vst [vmem:[#allocation2 + $0x38] sm:$0xff] %v877
        %894 = vst [vmem:[#allocation2 + $0x40] sm:$0xff] %v878
        %895 = vst [vmem:[#allocation2 + $0x48] sm:$0xff] %v879
        %896 = vst [vmem:[#allocation2 + $0x50] sm:$0xff] %v880
        %897 = vst [vmem:[#allocation2 + $0x58] sm:$0xff] %v881
        %898 = vst [vmem:[#allocation2 + $0x60] sm:$0xff] %v882
        %899 = vst [vmem:[#allocation2 + $0x68] sm:$0xff] %v883
        %900 = vst [vmem:[#allocation2 + $0x70] sm:$0xff] %v884
        %901 = vst [vmem:[#allocation2 + $0x78] sm:$0xff] %v885
        %902 = vst [vmem:[#allocation2 + $0x80] sm:$0xff] %v886
        %903 = vst [vmem:[#allocation2 + $0x88] sm:$0xff] %v887
        %904 = vst [vmem:[#allocation2 + $0x90] sm:$0xff] %v888
        %p905 = scmp.gt.s32.totalorder %s30, 0
        // Predicated region
        $region61: #{tpu_custom_call.1} parent=47 // pred_check
          %p906 = pneg %p905
        $region62: #{tpu_custom_call.1} parent=47 // pred_check_branch
          %908 = sbr.rel (%p906) target = $region64
        $region63: #{tpu_custom_call.1} parent=47 // pred_region
          %s909 = ssub.s32 %s365, 16
          %s910 = sshra.s32 %s909, 3
          %s911 = sand.u32 %s909, 7
          %s912 = smul.addr %s910, 4
          %s913 = scalar_lea.vmem %s304, %s912 [#allocation3]
          %v914 = vld [vmem:[%s913] sm:$0xf]
          %v915 = vld [vmem:[%s913 + $0x4] sm:$0xf]
          %v918 = vunpack.c.l.b16 %v914
          %v919 = vunpack.c.l.b16 %v915
          %v920 = vpack.c.b16 %v919, %v918
          %922 = vmatpush.bf16.msra.mxu0 %v473
          %923 = vmatpush.bf16.msra.mxu0 %v472
          %924 = vmatpush.bf16.msra.mxu0 %v471
          %925 = vmatpush.bf16.msra.mxu0 %v470
          %926 = vmatpush.bf16.msra.mxu0 %v469
          %927 = vmatpush.bf16.msra.mxu0 %v468
          %928 = vmatpush.bf16.msra.mxu0 %v467
          %929 = vmatpush.bf16.msra.mxu0 %v466
          %930 = vmatmul.bf16.gmra.mxu0 %v920
          %v931 = vpop.f32.mrf.mxu0
          %v932 = vadd.f32 0.0, %v931
          %v933 = vpop.f32.mrf.mxu0
          %v934 = vadd.f32 0.0, %v933
          %935 = vdwg.mxu0
          %v936 = vmul.f32 %v932, %v532
          %v937 = vmul.f32 %v934, %v532
          %v938 = vadd.f32 %v936, %v551
          %v939 = vadd.f32 %v937, %v551
          %v940 = vxor.u32 %v938, 2147483648
          %v941 = vxor.u32 %v939, 2147483648
          %v942 = vmul.f32 %v940, 1.442695
          %v943 = vpow.pop %v942
          %v944 = vmul.f32 %v941, 1.442695
          %v945 = vpow.pop %v944
          %v946 = vadd.f32 %v943, 1.0
          %v947 = vadd.f32 %v945, 1.0
          %v948 = vrcp.pop %v946
          %v949 = vmul.f32 %v946, %v948
          %v950 = vsub.f32 1.0, %v949
          %v951 = vmul.f32 %v948, %v950
          %v952 = vadd.f32 %v948, %v951
          %vm953 = vweird.f32 %v946
          %vm954 = vweird.f32 %v948
          %vm955 = vmor %vm953, %vm954
          %v956 = vsel %vm955, %v948, %v952
          %v957 = vand.u32 2147483647, %v946
          %vm958 = vcmp.eq.f32.partialorder %v957, 8.507059e+37
          %v959 = vand.u32 %v946, 2147483648
          %v960 = vor.u32 1.1754944e-38, %v959
          %v961 = vsel %vm958, %v960, %v956
          %v962 = vmul.f32 1.0, %v961
          %v963 = vrcp.pop %v947
          %v964 = vmul.f32 %v947, %v963
          %v965 = vsub.f32 1.0, %v964
          %v966 = vmul.f32 %v963, %v965
          %v967 = vadd.f32 %v963, %v966
          %vm968 = vweird.f32 %v947
          %vm969 = vweird.f32 %v963
          %vm970 = vmor %vm968, %vm969
          %v971 = vsel %vm970, %v963, %v967
          %v972 = vand.u32 2147483647, %v947
          %vm973 = vcmp.eq.f32.partialorder %v972, 8.507059e+37
          %v974 = vand.u32 %v947, 2147483648
          %v975 = vor.u32 1.1754944e-38, %v974
          %v976 = vsel %vm973, %v975, %v971
          %v977 = vmul.f32 1.0, %v976
          %v978 = vmul.f32 %v938, %v962
          %v979 = vmul.f32 %v939, %v977
          %980 = vst [vmem:[#allocation2 + $0x8] sm:$0xff] %v978
          %981 = vst [vmem:[#allocation2 + $0x10] sm:$0xff] %v979
        $region64: #{tpu_custom_call.1} parent=47 // pred_fallthru
          _
        %p982 = scmp.eq.s32.totalorder %s30, 0
        // Predicated region
        $region65: #{tpu_custom_call.1} parent=47 // pred_check
          %p983 = pneg %p982
        $region66: #{tpu_custom_call.1} parent=47 // pred_check_branch
          %985 = sbr.rel (%p983) target = $region68
        $region67: #{tpu_custom_call.1} parent=47 // pred_region
          %986 = vst [vmem:[#allocation2 + $0x8] sm:$0xff] 0.0
          %987 = vst [vmem:[#allocation2 + $0x10] sm:$0xff] 0.0
        $region68: #{tpu_custom_call.1} parent=47 // pred_fallthru
          _
        %p988 = scmp.lt.s32.totalorder %s30, 1
        // Predicated region
        $region69: #{tpu_custom_call.1} parent=47 // pred_check
          %p989 = pneg %p988
        $region70: #{tpu_custom_call.1} parent=47 // pred_check_branch
          %991 = sbr.rel (%p989) target = $region72
        $region71: #{tpu_custom_call.1} parent=47 // pred_region
          %s992 = sadd.s32 %s365, 128
          %s993 = sshra.s32 %s992, 3
          %s994 = sand.u32 %s992, 7
          %s995 = smul.addr %s993, 4
          %s996 = scalar_lea.vmem %s304, %s995 [#allocation3]
          %v997 = vld [vmem:[%s996] sm:$0xf]
          %v998 = vld [vmem:[%s996 + $0x4] sm:$0xf]
          %v1001 = vunpack.c.l.b16 %v997
          %v1002 = vunpack.c.l.b16 %v998
          %v1003 = vpack.c.b16 %v1002, %v1001
          %1005 = vmatpush.bf16.msra.mxu0 %v473
          %1006 = vmatpush.bf16.msra.mxu0 %v472
          %1007 = vmatpush.bf16.msra.mxu0 %v471
          %1008 = vmatpush.bf16.msra.mxu0 %v470
          %1009 = vmatpush.bf16.msra.mxu0 %v469
          %1010 = vmatpush.bf16.msra.mxu0 %v468
          %1011 = vmatpush.bf16.msra.mxu0 %v467
          %1012 = vmatpush.bf16.msra.mxu0 %v466
          %1013 = vmatmul.bf16.gmra.mxu0 %v1003
          %v1014 = vpop.f32.mrf.mxu0
          %v1015 = vadd.f32 0.0, %v1014
          %v1016 = vpop.f32.mrf.mxu0
          %v1017 = vadd.f32 0.0, %v1016
          %1018 = vdwg.mxu0
          %v1019 = vmul.f32 %v1015, %v532
          %v1020 = vmul.f32 %v1017, %v532
          %v1021 = vadd.f32 %v1019, %v551
          %v1022 = vadd.f32 %v1020, %v551
          %v1023 = vxor.u32 %v1021, 2147483648
          %v1024 = vxor.u32 %v1022, 2147483648
          %v1025 = vmul.f32 %v1023, 1.442695
          %v1026 = vpow.pop %v1025
          %v1027 = vmul.f32 %v1024, 1.442695
          %v1028 = vpow.pop %v1027
          %v1029 = vadd.f32 %v1026, 1.0
          %v1030 = vadd.f32 %v1028, 1.0
          %v1031 = vrcp.pop %v1029
          %v1032 = vmul.f32 %v1029, %v1031
          %v1033 = vsub.f32 1.0, %v1032
          %v1034 = vmul.f32 %v1031, %v1033
          %v1035 = vadd.f32 %v1031, %v1034
          %vm1036 = vweird.f32 %v1029
          %vm1037 = vweird.f32 %v1031
          %vm1038 = vmor %vm1036, %vm1037
          %v1039 = vsel %vm1038, %v1031, %v1035
          %v1040 = vand.u32 2147483647, %v1029
          %vm1041 = vcmp.eq.f32.partialorder %v1040, 8.507059e+37
          %v1042 = vand.u32 %v1029, 2147483648
          %v1043 = vor.u32 1.1754944e-38, %v1042
          %v1044 = vsel %vm1041, %v1043, %v1039
          %v1045 = vmul.f32 1.0, %v1044
          %v1046 = vrcp.pop %v1030
          %v1047 = vmul.f32 %v1030, %v1046
          %v1048 = vsub.f32 1.0, %v1047
          %v1049 = vmul.f32 %v1046, %v1048
          %v1050 = vadd.f32 %v1046, %v1049
          %vm1051 = vweird.f32 %v1030
          %vm1052 = vweird.f32 %v1046
          %vm1053 = vmor %vm1051, %vm1052
          %v1054 = vsel %vm1053, %v1046, %v1050
          %v1055 = vand.u32 2147483647, %v1030
          %vm1056 = vcmp.eq.f32.partialorder %v1055, 8.507059e+37
          %v1057 = vand.u32 %v1030, 2147483648
          %v1058 = vor.u32 1.1754944e-38, %v1057
          %v1059 = vsel %vm1056, %v1058, %v1054
          %v1060 = vmul.f32 1.0, %v1059
          %v1061 = vmul.f32 %v1021, %v1045
          %v1062 = vmul.f32 %v1022, %v1060
          %1063 = vst [vmem:[#allocation2 + $0x98] sm:$0xff] %v1061
          %1064 = vst [vmem:[#allocation2 + $0xa0] sm:$0xff] %v1062
        $region72: #{tpu_custom_call.1} parent=47 // pred_fallthru
          _
        %p1065 = scmp.eq.s32.totalorder %s30, 1
        // Predicated region
        $region73: #{tpu_custom_call.1} parent=47 // pred_check
          %p1066 = pneg %p1065
        $region74: #{tpu_custom_call.1} parent=47 // pred_check_branch
          %1068 = sbr.rel (%p1066) target = $region76
        $region75: #{tpu_custom_call.1} parent=47 // pred_region
          %1069 = vst [vmem:[#allocation2 + $0x98] sm:$0xff] 0.0
          %1070 = vst [vmem:[#allocation2 + $0xa0] sm:$0xff] 0.0
        $region76: #{tpu_custom_call.1} parent=47 // pred_fallthru
          _
        %v1071 = vlaneseq
        %v1072 = vshrl.u32 %v1071, 7
        %v1073 = vadd.s32 %v1072, 8
        %v1074 = vadd.s32 %v1072, 16
        %v1075 = vadd.s32 %v1072, 24
        %v1076 = vadd.s32 %v1072, 32
        %v1077 = vadd.s32 %v1072, 40
        %v1078 = vadd.s32 %v1072, 48
        %v1079 = vadd.s32 %v1072, 56
        %v1080 = vadd.s32 %v1072, 64
        %v1081 = vadd.s32 %v1072, 72
        %v1082 = vadd.s32 %v1072, 80
        %v1083 = vadd.s32 %v1072, 88
        %v1084 = vadd.s32 %v1072, 96
        %v1085 = vadd.s32 %v1072, 104
        %v1086 = vadd.s32 %v1072, 112
        %v1087 = vadd.s32 %v1072, 120
        %vm1088 = vcmp.lt.s32.totalorder %v1072, 0
        %v1089 = vsub.s32 0, %v1072
        %v1090 = vsel %vm1088, %v1089, %v1072
        %v1091 = vshrl.u32 %v1090, 4
        %v1092 = vand.u32 %v1090, 15
        %v1093 = vsub.s32 0, %v1092
        %v1094 = vsel %vm1088, %v1093, %v1092
        %vm1095 = vcmp.lt.s32.totalorder %v1073, 0
        %v1096 = vsub.s32 0, %v1073
        %v1097 = vsel %vm1095, %v1096, %v1073
        %v1098 = vshrl.u32 %v1097, 4
        %v1099 = vand.u32 %v1097, 15
        %v1100 = vsub.s32 0, %v1099
        %v1101 = vsel %vm1095, %v1100, %v1099
        %vm1102 = vcmp.lt.s32.totalorder %v1074, 0
        %v1103 = vsub.s32 0, %v1074
        %v1104 = vsel %vm1102, %v1103, %v1074
        %v1105 = vshrl.u32 %v1104, 4
        %v1106 = vand.u32 %v1104, 15
        %v1107 = vsub.s32 0, %v1106
        %v1108 = vsel %vm1102, %v1107, %v1106
        %vm1109 = vcmp.lt.s32.totalorder %v1075, 0
        %v1110 = vsub.s32 0, %v1075
        %v1111 = vsel %vm1109, %v1110, %v1075
        %v1112 = vshrl.u32 %v1111, 4
        %v1113 = vand.u32 %v1111, 15
        %v1114 = vsub.s32 0, %v1113
        %v1115 = vsel %vm1109, %v1114, %v1113
        %vm1116 = vcmp.lt.s32.totalorder %v1076, 0
        %v1117 = vsub.s32 0, %v1076
        %v1118 = vsel %vm1116, %v1117, %v1076
        %v1119 = vshrl.u32 %v1118, 4
        %v1120 = vand.u32 %v1118, 15
        %v1121 = vsub.s32 0, %v1120
        %v1122 = vsel %vm1116, %v1121, %v1120
        %vm1123 = vcmp.lt.s32.totalorder %v1077, 0
        %v1124 = vsub.s32 0, %v1077
        %v1125 = vsel %vm1123, %v1124, %v1077
        %v1126 = vshrl.u32 %v1125, 4
        %v1127 = vand.u32 %v1125, 15
        %v1128 = vsub.s32 0, %v1127
        %v1129 = vsel %vm1123, %v1128, %v1127
        %vm1130 = vcmp.lt.s32.totalorder %v1078, 0
        %v1131 = vsub.s32 0, %v1078
        %v1132 = vsel %vm1130, %v1131, %v1078
        %v1133 = vshrl.u32 %v1132, 4
        %v1134 = vand.u32 %v1132, 15
        %v1135 = vsub.s32 0, %v1134
        %v1136 = vsel %vm1130, %v1135, %v1134
        %vm1137 = vcmp.lt.s32.totalorder %v1079, 0
        %v1138 = vsub.s32 0, %v1079
        %v1139 = vsel %vm1137, %v1138, %v1079
        %v1140 = vshrl.u32 %v1139, 4
        %v1141 = vand.u32 %v1139, 15
        %v1142 = vsub.s32 0, %v1141
        %v1143 = vsel %vm1137, %v1142, %v1141
        %vm1144 = vcmp.lt.s32.totalorder %v1080, 0
        %v1145 = vsub.s32 0, %v1080
        %v1146 = vsel %vm1144, %v1145, %v1080
        %v1147 = vshrl.u32 %v1146, 4
        %v1148 = vand.u32 %v1146, 15
        %v1149 = vsub.s32 0, %v1148
        %v1150 = vsel %vm1144, %v1149, %v1148
        %vm1151 = vcmp.lt.s32.totalorder %v1081, 0
        %v1152 = vsub.s32 0, %v1081
        %v1153 = vsel %vm1151, %v1152, %v1081
        %v1154 = vshrl.u32 %v1153, 4
        %v1155 = vand.u32 %v1153, 15
        %v1156 = vsub.s32 0, %v1155
        %v1157 = vsel %vm1151, %v1156, %v1155
        %vm1158 = vcmp.lt.s32.totalorder %v1082, 0
        %v1159 = vsub.s32 0, %v1082
        %v1160 = vsel %vm1158, %v1159, %v1082
        %v1161 = vshrl.u32 %v1160, 4
        %v1162 = vand.u32 %v1160, 15
        %v1163 = vsub.s32 0, %v1162
        %v1164 = vsel %vm1158, %v1163, %v1162
        %vm1165 = vcmp.lt.s32.totalorder %v1083, 0
        %v1166 = vsub.s32 0, %v1083
        %v1167 = vsel %vm1165, %v1166, %v1083
        %v1168 = vshrl.u32 %v1167, 4
        %v1169 = vand.u32 %v1167, 15
        %v1170 = vsub.s32 0, %v1169
        %v1171 = vsel %vm1165, %v1170, %v1169
        %vm1172 = vcmp.lt.s32.totalorder %v1084, 0
        %v1173 = vsub.s32 0, %v1084
        %v1174 = vsel %vm1172, %v1173, %v1084
        %v1175 = vshrl.u32 %v1174, 4
        %v1176 = vand.u32 %v1174, 15
        %v1177 = vsub.s32 0, %v1176
        %v1178 = vsel %vm1172, %v1177, %v1176
        %vm1179 = vcmp.lt.s32.totalorder %v1085, 0
        %v1180 = vsub.s32 0, %v1085
        %v1181 = vsel %vm1179, %v1180, %v1085
        %v1182 = vshrl.u32 %v1181, 4
        %v1183 = vand.u32 %v1181, 15
        %v1184 = vsub.s32 0, %v1183
        %v1185 = vsel %vm1179, %v1184, %v1183
        %vm1186 = vcmp.lt.s32.totalorder %v1086, 0
        %v1187 = vsub.s32 0, %v1086
        %v1188 = vsel %vm1186, %v1187, %v1086
        %v1189 = vshrl.u32 %v1188, 4
        %v1190 = vand.u32 %v1188, 15
        %v1191 = vsub.s32 0, %v1190
        %v1192 = vsel %vm1186, %v1191, %v1190
        %vm1193 = vcmp.lt.s32.totalorder %v1087, 0
        %v1194 = vsub.s32 0, %v1087
        %v1195 = vsel %vm1193, %v1194, %v1087
        %v1196 = vshrl.u32 %v1195, 4
        %v1197 = vand.u32 %v1195, 15
        %v1198 = vsub.s32 0, %v1197
        %v1199 = vsel %vm1193, %v1198, %v1197
        %vm1200 = vcmp.ne.s32.totalorder %v1094, 0
        %vm1201 = vcmp.ne.s32.totalorder %v1101, 0
        %vm1202 = vcmp.ne.s32.totalorder %v1108, 0
        %vm1203 = vcmp.ne.s32.totalorder %v1115, 0
        %vm1204 = vcmp.ne.s32.totalorder %v1122, 0
        %vm1205 = vcmp.ne.s32.totalorder %v1129, 0
        %vm1206 = vcmp.ne.s32.totalorder %v1136, 0
        %vm1207 = vcmp.ne.s32.totalorder %v1143, 0
        %vm1208 = vcmp.ne.s32.totalorder %v1150, 0
        %vm1209 = vcmp.ne.s32.totalorder %v1157, 0
        %vm1210 = vcmp.ne.s32.totalorder %v1164, 0
        %vm1211 = vcmp.ne.s32.totalorder %v1171, 0
        %vm1212 = vcmp.ne.s32.totalorder %v1178, 0
        %vm1213 = vcmp.ne.s32.totalorder %v1185, 0
        %vm1214 = vcmp.ne.s32.totalorder %v1192, 0
        %vm1215 = vcmp.ne.s32.totalorder %v1199, 0
        %vm1216 = vcmp.lt.s32.totalorder %v1094, 0
        %vm1217 = vcmp.lt.s32.totalorder %v1101, 0
        %vm1218 = vcmp.lt.s32.totalorder %v1108, 0
        %vm1219 = vcmp.lt.s32.totalorder %v1115, 0
        %vm1220 = vcmp.lt.s32.totalorder %v1122, 0
        %vm1221 = vcmp.lt.s32.totalorder %v1129, 0
        %vm1222 = vcmp.lt.s32.totalorder %v1136, 0
        %vm1223 = vcmp.lt.s32.totalorder %v1143, 0
        %vm1224 = vcmp.lt.s32.totalorder %v1150, 0
        %vm1225 = vcmp.lt.s32.totalorder %v1157, 0
        %vm1226 = vcmp.lt.s32.totalorder %v1164, 0
        %vm1227 = vcmp.lt.s32.totalorder %v1171, 0
        %vm1228 = vcmp.lt.s32.totalorder %v1178, 0
        %vm1229 = vcmp.lt.s32.totalorder %v1185, 0
        %vm1230 = vcmp.lt.s32.totalorder %v1192, 0
        %vm1231 = vcmp.lt.s32.totalorder %v1199, 0
        %vm1232 = vmand %vm1216, %vm1200
        %vm1233 = vmand %vm1217, %vm1201
        %vm1234 = vmand %vm1218, %vm1202
        %vm1235 = vmand %vm1219, %vm1203
        %vm1236 = vmand %vm1220, %vm1204
        %vm1237 = vmand %vm1221, %vm1205
        %vm1238 = vmand %vm1222, %vm1206
        %vm1239 = vmand %vm1223, %vm1207
        %vm1240 = vmand %vm1224, %vm1208
        %vm1241 = vmand %vm1225, %vm1209
        %vm1242 = vmand %vm1226, %vm1210
        %vm1243 = vmand %vm1227, %vm1211
        %vm1244 = vmand %vm1228, %vm1212
        %vm1245 = vmand %vm1229, %vm1213
        %vm1246 = vmand %vm1230, %vm1214
        %vm1247 = vmand %vm1231, %vm1215
        %v1248 = vadd.s32 %v1094, 16
        %v1249 = vadd.s32 %v1101, 16
        %v1250 = vadd.s32 %v1108, 16
        %v1251 = vadd.s32 %v1115, 16
        %v1252 = vadd.s32 %v1122, 16
        %v1253 = vadd.s32 %v1129, 16
        %v1254 = vadd.s32 %v1136, 16
        %v1255 = vadd.s32 %v1143, 16
        %v1256 = vadd.s32 %v1150, 16
        %v1257 = vadd.s32 %v1157, 16
        %v1258 = vadd.s32 %v1164, 16
        %v1259 = vadd.s32 %v1171, 16
        %v1260 = vadd.s32 %v1178, 16
        %v1261 = vadd.s32 %v1185, 16
        %v1262 = vadd.s32 %v1192, 16
        %v1263 = vadd.s32 %v1199, 16
        %v1264 = vsel %vm1232, %v1248, %v1094
        %v1265 = vsel %vm1233, %v1249, %v1101
        %v1266 = vsel %vm1234, %v1250, %v1108
        %v1267 = vsel %vm1235, %v1251, %v1115
        %v1268 = vsel %vm1236, %v1252, %v1122
        %v1269 = vsel %vm1237, %v1253, %v1129
        %v1270 = vsel %vm1238, %v1254, %v1136
        %v1271 = vsel %vm1239, %v1255, %v1143
        %v1272 = vsel %vm1240, %v1256, %v1150
        %v1273 = vsel %vm1241, %v1257, %v1157
        %v1274 = vsel %vm1242, %v1258, %v1164
        %v1275 = vsel %vm1243, %v1259, %v1171
        %v1276 = vsel %vm1244, %v1260, %v1178
        %v1277 = vsel %vm1245, %v1261, %v1185
        %v1278 = vsel %vm1246, %v1262, %v1192
        %v1279 = vsel %vm1247, %v1263, %v1199
        %vm1280 = vcmp.gt.s32.totalorder %v1264, 0
        %vm1281 = vcmp.gt.s32.totalorder %v1265, 0
        %vm1282 = vcmp.gt.s32.totalorder %v1266, 0
        %vm1283 = vcmp.gt.s32.totalorder %v1267, 0
        %vm1284 = vcmp.gt.s32.totalorder %v1268, 0
        %vm1285 = vcmp.gt.s32.totalorder %v1269, 0
        %vm1286 = vcmp.gt.s32.totalorder %v1270, 0
        %vm1287 = vcmp.gt.s32.totalorder %v1271, 0
        %vm1288 = vcmp.gt.s32.totalorder %v1272, 0
        %vm1289 = vcmp.gt.s32.totalorder %v1273, 0
        %vm1290 = vcmp.gt.s32.totalorder %v1274, 0
        %vm1291 = vcmp.gt.s32.totalorder %v1275, 0
        %vm1292 = vcmp.gt.s32.totalorder %v1276, 0
        %vm1293 = vcmp.gt.s32.totalorder %v1277, 0
        %vm1294 = vcmp.gt.s32.totalorder %v1278, 0
        %vm1295 = vcmp.gt.s32.totalorder %v1279, 0
        %vm1296 = vcmp.lt.s32.totalorder %v1264, 15
        %vm1297 = vcmp.lt.s32.totalorder %v1265, 15
        %vm1298 = vcmp.lt.s32.totalorder %v1266, 15
        %vm1299 = vcmp.lt.s32.totalorder %v1267, 15
        %vm1300 = vcmp.lt.s32.totalorder %v1268, 15
        %vm1301 = vcmp.lt.s32.totalorder %v1269, 15
        %vm1302 = vcmp.lt.s32.totalorder %v1270, 15
        %vm1303 = vcmp.lt.s32.totalorder %v1271, 15
        %vm1304 = vcmp.lt.s32.totalorder %v1272, 15
        %vm1305 = vcmp.lt.s32.totalorder %v1273, 15
        %vm1306 = vcmp.lt.s32.totalorder %v1274, 15
        %vm1307 = vcmp.lt.s32.totalorder %v1275, 15
        %vm1308 = vcmp.lt.s32.totalorder %v1276, 15
        %vm1309 = vcmp.lt.s32.totalorder %v1277, 15
        %vm1310 = vcmp.lt.s32.totalorder %v1278, 15
        %vm1311 = vcmp.lt.s32.totalorder %v1279, 15
        %v1312 = vld [vmem:[#allocation2 + $0x7] sm:$0xff]
        %v1313 = vld [vmem:[#allocation2 + $0xf] sm:$0xff]
        %v1314 = vld [vmem:[#allocation2 + $0x17] sm:$0xff]
        %v1315 = vld [vmem:[#allocation2 + $0x1f] sm:$0xff]
        %v1316 = vld [vmem:[#allocation2 + $0x27] sm:$0xff]
        %v1317 = vld [vmem:[#allocation2 + $0x2f] sm:$0xff]
        %v1318 = vld [vmem:[#allocation2 + $0x37] sm:$0xff]
        %v1319 = vld [vmem:[#allocation2 + $0x3f] sm:$0xff]
        %v1320 = vld [vmem:[#allocation2 + $0x47] sm:$0xff]
        %v1321 = vld [vmem:[#allocation2 + $0x4f] sm:$0xff]
        %v1322 = vld [vmem:[#allocation2 + $0x57] sm:$0xff]
        %v1323 = vld [vmem:[#allocation2 + $0x5f] sm:$0xff]
        %v1324 = vld [vmem:[#allocation2 + $0x67] sm:$0xff]
        %v1325 = vld [vmem:[#allocation2 + $0x6f] sm:$0xff]
        %v1326 = vld [vmem:[#allocation2 + $0x77] sm:$0xff]
        %v1327 = vld [vmem:[#allocation2 + $0x7f] sm:$0xff]
        %v1328 = vsel %vm1280, 1, 0
        %v1329 = vsel %vm1281, 1, 0
        %v1330 = vsel %vm1282, 1, 0
        %v1331 = vsel %vm1283, 1, 0
        %v1332 = vsel %vm1284, 1, 0
        %v1333 = vsel %vm1285, 1, 0
        %v1334 = vsel %vm1286, 1, 0
        %v1335 = vsel %vm1287, 1, 0
        %v1336 = vsel %vm1288, 1, 0
        %v1337 = vsel %vm1289, 1, 0
        %v1338 = vsel %vm1290, 1, 0
        %v1339 = vsel %vm1291, 1, 0
        %v1340 = vsel %vm1292, 1, 0
        %v1341 = vsel %vm1293, 1, 0
        %v1342 = vsel %vm1294, 1, 0
        %v1343 = vsel %vm1295, 1, 0
        %vm1344 = vcmp.eq.s32.totalorder %v1328, 1
        %vm1345 = vcmp.eq.s32.totalorder %v1329, 1
        %vm1346 = vcmp.eq.s32.totalorder %v1330, 1
        %vm1347 = vcmp.eq.s32.totalorder %v1331, 1
        %vm1348 = vcmp.eq.s32.totalorder %v1332, 1
        %vm1349 = vcmp.eq.s32.totalorder %v1333, 1
        %vm1350 = vcmp.eq.s32.totalorder %v1334, 1
        %vm1351 = vcmp.eq.s32.totalorder %v1335, 1
        %vm1352 = vcmp.eq.s32.totalorder %v1336, 1
        %vm1353 = vcmp.eq.s32.totalorder %v1337, 1
        %vm1354 = vcmp.eq.s32.totalorder %v1338, 1
        %vm1355 = vcmp.eq.s32.totalorder %v1339, 1
        %vm1356 = vcmp.eq.s32.totalorder %v1340, 1
        %vm1357 = vcmp.eq.s32.totalorder %v1341, 1
        %vm1358 = vcmp.eq.s32.totalorder %v1342, 1
        %vm1359 = vcmp.eq.s32.totalorder %v1343, 1
        %v1360 = vsel %vm1344, %v1312, 0.0
        %v1361 = vsel %vm1345, %v1313, 0.0
        %v1362 = vsel %vm1346, %v1314, 0.0
        %v1363 = vsel %vm1347, %v1315, 0.0
        %v1364 = vsel %vm1348, %v1316, 0.0
        %v1365 = vsel %vm1349, %v1317, 0.0
        %v1366 = vsel %vm1350, %v1318, 0.0
        %v1367 = vsel %vm1351, %v1319, 0.0
        %v1368 = vsel %vm1352, %v1320, 0.0
        %v1369 = vsel %vm1353, %v1321, 0.0
        %v1370 = vsel %vm1354, %v1322, 0.0
        %v1371 = vsel %vm1355, %v1323, 0.0
        %v1372 = vsel %vm1356, %v1324, 0.0
        %v1373 = vsel %vm1357, %v1325, 0.0
        %v1374 = vsel %vm1358, %v1326, 0.0
        %v1375 = vsel %vm1359, %v1327, 0.0
        %v1376 = vpack.c.bf16 %v1360, %v1360
        %v1377 = vpack.c.bf16 %v1361, %v1361
        %v1378 = vpack.c.bf16 %v1362, %v1362
        %v1379 = vpack.c.bf16 %v1363, %v1363
        %v1380 = vpack.c.bf16 %v1364, %v1364
        %v1381 = vpack.c.bf16 %v1365, %v1365
        %v1382 = vpack.c.bf16 %v1366, %v1366
        %v1383 = vpack.c.bf16 %v1367, %v1367
        %v1384 = vpack.c.bf16 %v1368, %v1368
        %v1385 = vpack.c.bf16 %v1369, %v1369
        %v1386 = vpack.c.bf16 %v1370, %v1370
        %v1387 = vpack.c.bf16 %v1371, %v1371
        %v1388 = vpack.c.bf16 %v1372, %v1372
        %v1389 = vpack.c.bf16 %v1373, %v1373
        %v1390 = vpack.c.bf16 %v1374, %v1374
        %v1391 = vpack.c.bf16 %v1375, %v1375
        %v1392 = vld [vmem:[#allocation2 + $0x8] sm:$0xff]
        %v1393 = vld [vmem:[#allocation2 + $0x10] sm:$0xff]
        %v1394 = vld [vmem:[#allocation2 + $0x18] sm:$0xff]
        %v1395 = vld [vmem:[#allocation2 + $0x20] sm:$0xff]
        %v1396 = vld [vmem:[#allocation2 + $0x28] sm:$0xff]
        %v1397 = vld [vmem:[#allocation2 + $0x30] sm:$0xff]
        %v1398 = vld [vmem:[#allocation2 + $0x38] sm:$0xff]
        %v1399 = vld [vmem:[#allocation2 + $0x40] sm:$0xff]
        %v1400 = vld [vmem:[#allocation2 + $0x48] sm:$0xff]
        %v1401 = vld [vmem:[#allocation2 + $0x50] sm:$0xff]
        %v1402 = vld [vmem:[#allocation2 + $0x58] sm:$0xff]
        %v1403 = vld [vmem:[#allocation2 + $0x60] sm:$0xff]
        %v1404 = vld [vmem:[#allocation2 + $0x68] sm:$0xff]
        %v1405 = vld [vmem:[#allocation2 + $0x70] sm:$0xff]
        %v1406 = vld [vmem:[#allocation2 + $0x78] sm:$0xff]
        %v1407 = vld [vmem:[#allocation2 + $0x80] sm:$0xff]
        %v1408 = vpack.c.bf16 %v1392, %v1392
        %v1409 = vpack.c.bf16 %v1393, %v1393
        %v1410 = vpack.c.bf16 %v1394, %v1394
        %v1411 = vpack.c.bf16 %v1395, %v1395
        %v1412 = vpack.c.bf16 %v1396, %v1396
        %v1413 = vpack.c.bf16 %v1397, %v1397
        %v1414 = vpack.c.bf16 %v1398, %v1398
        %v1415 = vpack.c.bf16 %v1399, %v1399
        %v1416 = vpack.c.bf16 %v1400, %v1400
        %v1417 = vpack.c.bf16 %v1401, %v1401
        %v1418 = vpack.c.bf16 %v1402, %v1402
        %v1419 = vpack.c.bf16 %v1403, %v1403
        %v1420 = vpack.c.bf16 %v1404, %v1404
        %v1421 = vpack.c.bf16 %v1405, %v1405
        %v1422 = vpack.c.bf16 %v1406, %v1406
        %v1423 = vpack.c.bf16 %v1407, %v1407
        %v1424 = vld [vmem:[#allocation2 + $0x9] sm:$0xff]
        %v1425 = vld [vmem:[#allocation2 + $0x11] sm:$0xff]
        %v1426 = vld [vmem:[#allocation2 + $0x19] sm:$0xff]
        %v1427 = vld [vmem:[#allocation2 + $0x21] sm:$0xff]
        %v1428 = vld [vmem:[#allocation2 + $0x29] sm:$0xff]
        %v1429 = vld [vmem:[#allocation2 + $0x31] sm:$0xff]
        %v1430 = vld [vmem:[#allocation2 + $0x39] sm:$0xff]
        %v1431 = vld [vmem:[#allocation2 + $0x41] sm:$0xff]
        %v1432 = vld [vmem:[#allocation2 + $0x49] sm:$0xff]
        %v1433 = vld [vmem:[#allocation2 + $0x51] sm:$0xff]
        %v1434 = vld [vmem:[#allocation2 + $0x59] sm:$0xff]
        %v1435 = vld [vmem:[#allocation2 + $0x61] sm:$0xff]
        %v1436 = vld [vmem:[#allocation2 + $0x69] sm:$0xff]
        %v1437 = vld [vmem:[#allocation2 + $0x71] sm:$0xff]
        %v1438 = vld [vmem:[#allocation2 + $0x79] sm:$0xff]
        %v1439 = vld [vmem:[#allocation2 + $0x81] sm:$0xff]
        %v1440 = vsel %vm1296, 1, 0
        %v1441 = vsel %vm1297, 1, 0
        %v1442 = vsel %vm1298, 1, 0
        %v1443 = vsel %vm1299, 1, 0
        %v1444 = vsel %vm1300, 1, 0
        %v1445 = vsel %vm1301, 1, 0
        %v1446 = vsel %vm1302, 1, 0
        %v1447 = vsel %vm1303, 1, 0
        %v1448 = vsel %vm1304, 1, 0
        %v1449 = vsel %vm1305, 1, 0
        %v1450 = vsel %vm1306, 1, 0
        %v1451 = vsel %vm1307, 1, 0
        %v1452 = vsel %vm1308, 1, 0
        %v1453 = vsel %vm1309, 1, 0
        %v1454 = vsel %vm1310, 1, 0
        %v1455 = vsel %vm1311, 1, 0
        %vm1456 = vcmp.eq.s32.totalorder %v1440, 1
        %vm1457 = vcmp.eq.s32.totalorder %v1441, 1
        %vm1458 = vcmp.eq.s32.totalorder %v1442, 1
        %vm1459 = vcmp.eq.s32.totalorder %v1443, 1
        %vm1460 = vcmp.eq.s32.totalorder %v1444, 1
        %vm1461 = vcmp.eq.s32.totalorder %v1445, 1
        %vm1462 = vcmp.eq.s32.totalorder %v1446, 1
        %vm1463 = vcmp.eq.s32.totalorder %v1447, 1
        %vm1464 = vcmp.eq.s32.totalorder %v1448, 1
        %vm1465 = vcmp.eq.s32.totalorder %v1449, 1
        %vm1466 = vcmp.eq.s32.totalorder %v1450, 1
        %vm1467 = vcmp.eq.s32.totalorder %v1451, 1
        %vm1468 = vcmp.eq.s32.totalorder %v1452, 1
        %vm1469 = vcmp.eq.s32.totalorder %v1453, 1
        %vm1470 = vcmp.eq.s32.totalorder %v1454, 1
        %vm1471 = vcmp.eq.s32.totalorder %v1455, 1
        %v1472 = vsel %vm1456, %v1424, 0.0
        %v1473 = vsel %vm1457, %v1425, 0.0
        %v1474 = vsel %vm1458, %v1426, 0.0
        %v1475 = vsel %vm1459, %v1427, 0.0
        %v1476 = vsel %vm1460, %v1428, 0.0
        %v1477 = vsel %vm1461, %v1429, 0.0
        %v1478 = vsel %vm1462, %v1430, 0.0
        %v1479 = vsel %vm1463, %v1431, 0.0
        %v1480 = vsel %vm1464, %v1432, 0.0
        %v1481 = vsel %vm1465, %v1433, 0.0
        %v1482 = vsel %vm1466, %v1434, 0.0
        %v1483 = vsel %vm1467, %v1435, 0.0
        %v1484 = vsel %vm1468, %v1436, 0.0
        %v1485 = vsel %vm1469, %v1437, 0.0
        %v1486 = vsel %vm1470, %v1438, 0.0
        %v1487 = vsel %vm1471, %v1439, 0.0
        %v1488 = vpack.c.bf16 %v1472, %v1472
        %v1489 = vpack.c.bf16 %v1473, %v1473
        %v1490 = vpack.c.bf16 %v1474, %v1474
        %v1491 = vpack.c.bf16 %v1475, %v1475
        %v1492 = vpack.c.bf16 %v1476, %v1476
        %v1493 = vpack.c.bf16 %v1477, %v1477
        %v1494 = vpack.c.bf16 %v1478, %v1478
        %v1495 = vpack.c.bf16 %v1479, %v1479
        %v1496 = vpack.c.bf16 %v1480, %v1480
        %v1497 = vpack.c.bf16 %v1481, %v1481
        %v1498 = vpack.c.bf16 %v1482, %v1482
        %v1499 = vpack.c.bf16 %v1483, %v1483
        %v1500 = vpack.c.bf16 %v1484, %v1484
        %v1501 = vpack.c.bf16 %v1485, %v1485
        %v1502 = vpack.c.bf16 %v1486, %v1486
        %v1503 = vpack.c.bf16 %v1487, %v1487
        %v1504 = vld [vmem:[#allocation2 + $0x87] sm:$0xff]
        %v1505 = vld [vmem:[#allocation2 + $0x8f] sm:$0xff]
        %v1506 = vsel %vm1344, %v1314, 0.0
        %v1507 = vsel %vm1345, %v1315, 0.0
        %v1508 = vsel %vm1346, %v1316, 0.0
        %v1509 = vsel %vm1347, %v1317, 0.0
        %v1510 = vsel %vm1348, %v1318, 0.0
        %v1511 = vsel %vm1349, %v1319, 0.0
        %v1512 = vsel %vm1350, %v1320, 0.0
        %v1513 = vsel %vm1351, %v1321, 0.0
        %v1514 = vsel %vm1352, %v1322, 0.0
        %v1515 = vsel %vm1353, %v1323, 0.0
        %v1516 = vsel %vm1354, %v1324, 0.0
        %v1517 = vsel %vm1355, %v1325, 0.0
        %v1518 = vsel %vm1356, %v1326, 0.0
        %v1519 = vsel %vm1357, %v1327, 0.0
        %v1520 = vsel %vm1358, %v1504, 0.0
        %v1521 = vsel %vm1359, %v1505, 0.0
        %v1522 = vpack.c.bf16 %v1506, %v1506
        %v1523 = vpack.c.bf16 %v1507, %v1507
        %v1524 = vpack.c.bf16 %v1508, %v1508
        %v1525 = vpack.c.bf16 %v1509, %v1509
        %v1526 = vpack.c.bf16 %v1510, %v1510
        %v1527 = vpack.c.bf16 %v1511, %v1511
        %v1528 = vpack.c.bf16 %v1512, %v1512
        %v1529 = vpack.c.bf16 %v1513, %v1513
        %v1530 = vpack.c.bf16 %v1514, %v1514
        %v1531 = vpack.c.bf16 %v1515, %v1515
        %v1532 = vpack.c.bf16 %v1516, %v1516
        %v1533 = vpack.c.bf16 %v1517, %v1517
        %v1534 = vpack.c.bf16 %v1518, %v1518
        %v1535 = vpack.c.bf16 %v1519, %v1519
        %v1536 = vpack.c.bf16 %v1520, %v1520
        %v1537 = vpack.c.bf16 %v1521, %v1521
        %v1538 = vld [vmem:[#allocation2 + $0x88] sm:$0xff]
        %v1539 = vld [vmem:[#allocation2 + $0x90] sm:$0xff]
        %v1540 = vpack.c.bf16 %v1538, %v1538
        %v1541 = vpack.c.bf16 %v1539, %v1539
        %v1542 = vld [vmem:[#allocation2 + $0x89] sm:$0xff]
        %v1543 = vld [vmem:[#allocation2 + $0x91] sm:$0xff]
        %v1544 = vsel %vm1456, %v1426, 0.0
        %v1545 = vsel %vm1457, %v1427, 0.0
        %v1546 = vsel %vm1458, %v1428, 0.0
        %v1547 = vsel %vm1459, %v1429, 0.0
        %v1548 = vsel %vm1460, %v1430, 0.0
        %v1549 = vsel %vm1461, %v1431, 0.0
        %v1550 = vsel %vm1462, %v1432, 0.0
        %v1551 = vsel %vm1463, %v1433, 0.0
        %v1552 = vsel %vm1464, %v1434, 0.0
        %v1553 = vsel %vm1465, %v1435, 0.0
        %v1554 = vsel %vm1466, %v1436, 0.0
        %v1555 = vsel %vm1467, %v1437, 0.0
        %v1556 = vsel %vm1468, %v1438, 0.0
        %v1557 = vsel %vm1469, %v1439, 0.0
        %v1558 = vsel %vm1470, %v1542, 0.0
        %v1559 = vsel %vm1471, %v1543, 0.0
        %v1560 = vpack.c.bf16 %v1544, %v1544
        %v1561 = vpack.c.bf16 %v1545, %v1545
        %v1562 = vpack.c.bf16 %v1546, %v1546
        %v1563 = vpack.c.bf16 %v1547, %v1547
        %v1564 = vpack.c.bf16 %v1548, %v1548
        %v1565 = vpack.c.bf16 %v1549, %v1549
        %v1566 = vpack.c.bf16 %v1550, %v1550
        %v1567 = vpack.c.bf16 %v1551, %v1551
        %v1568 = vpack.c.bf16 %v1552, %v1552
        %v1569 = vpack.c.bf16 %v1553, %v1553
        %v1570 = vpack.c.bf16 %v1554, %v1554
        %v1571 = vpack.c.bf16 %v1555, %v1555
        %v1572 = vpack.c.bf16 %v1556, %v1556
        %v1573 = vpack.c.bf16 %v1557, %v1557
        %v1574 = vpack.c.bf16 %v1558, %v1558
        %v1575 = vpack.c.bf16 %v1559, %v1559
        %v1576 = vld [vmem:[#allocation2 + $0x97] sm:$0xff]
        %v1577 = vld [vmem:[#allocation2 + $0x9f] sm:$0xff]
        %v1578 = vsel %vm1344, %v1316, 0.0
        %v1579 = vsel %vm1345, %v1317, 0.0
        %v1580 = vsel %vm1346, %v1318, 0.0
        %v1581 = vsel %vm1347, %v1319, 0.0
        %v1582 = vsel %vm1348, %v1320, 0.0
        %v1583 = vsel %vm1349, %v1321, 0.0
        %v1584 = vsel %vm1350, %v1322, 0.0
        %v1585 = vsel %vm1351, %v1323, 0.0
        %v1586 = vsel %vm1352, %v1324, 0.0
        %v1587 = vsel %vm1353, %v1325, 0.0
        %v1588 = vsel %vm1354, %v1326, 0.0
        %v1589 = vsel %vm1355, %v1327, 0.0
        %v1590 = vsel %vm1356, %v1504, 0.0
        %v1591 = vsel %vm1357, %v1505, 0.0
        %v1592 = vsel %vm1358, %v1576, 0.0
        %v1593 = vsel %vm1359, %v1577, 0.0
        %v1594 = vpack.c.bf16 %v1578, %v1578
        %v1595 = vpack.c.bf16 %v1579, %v1579
        %v1596 = vpack.c.bf16 %v1580, %v1580
        %v1597 = vpack.c.bf16 %v1581, %v1581
        %v1598 = vpack.c.bf16 %v1582, %v1582
        %v1599 = vpack.c.bf16 %v1583, %v1583
        %v1600 = vpack.c.bf16 %v1584, %v1584
        %v1601 = vpack.c.bf16 %v1585, %v1585
        %v1602 = vpack.c.bf16 %v1586, %v1586
        %v1603 = vpack.c.bf16 %v1587, %v1587
        %v1604 = vpack.c.bf16 %v1588, %v1588
        %v1605 = vpack.c.bf16 %v1589, %v1589
        %v1606 = vpack.c.bf16 %v1590, %v1590
        %v1607 = vpack.c.bf16 %v1591, %v1591
        %v1608 = vpack.c.bf16 %v1592, %v1592
        %v1609 = vpack.c.bf16 %v1593, %v1593
        %v1610 = vld [vmem:[#allocation2 + $0x98] sm:$0xff]
        %v1611 = vld [vmem:[#allocation2 + $0xa0] sm:$0xff]
        %v1612 = vpack.c.bf16 %v1610, %v1610
        %v1613 = vpack.c.bf16 %v1611, %v1611
        %v1614 = vld [vmem:[#allocation2 + $0x99] sm:$0xff]
        %v1615 = vld [vmem:[#allocation2 + $0xa1] sm:$0xff]
        %v1616 = vsel %vm1456, %v1428, 0.0
        %v1617 = vsel %vm1457, %v1429, 0.0
        %v1618 = vsel %vm1458, %v1430, 0.0
        %v1619 = vsel %vm1459, %v1431, 0.0
        %v1620 = vsel %vm1460, %v1432, 0.0
        %v1621 = vsel %vm1461, %v1433, 0.0
        %v1622 = vsel %vm1462, %v1434, 0.0
        %v1623 = vsel %vm1463, %v1435, 0.0
        %v1624 = vsel %vm1464, %v1436, 0.0
        %v1625 = vsel %vm1465, %v1437, 0.0
        %v1626 = vsel %vm1466, %v1438, 0.0
        %v1627 = vsel %vm1467, %v1439, 0.0
        %v1628 = vsel %vm1468, %v1542, 0.0
        %v1629 = vsel %vm1469, %v1543, 0.0
        %v1630 = vsel %vm1470, %v1614, 0.0
        %v1631 = vsel %vm1471, %v1615, 0.0
        %v1632 = vpack.c.bf16 %v1616, %v1616
        %v1633 = vpack.c.bf16 %v1617, %v1617
        %v1634 = vpack.c.bf16 %v1618, %v1618
        %v1635 = vpack.c.bf16 %v1619, %v1619
        %v1636 = vpack.c.bf16 %v1620, %v1620
        %v1637 = vpack.c.bf16 %v1621, %v1621
        %v1638 = vpack.c.bf16 %v1622, %v1622
        %v1639 = vpack.c.bf16 %v1623, %v1623
        %v1640 = vpack.c.bf16 %v1624, %v1624
        %v1641 = vpack.c.bf16 %v1625, %v1625
        %v1642 = vpack.c.bf16 %v1626, %v1626
        %v1643 = vpack.c.bf16 %v1627, %v1627
        %v1644 = vpack.c.bf16 %v1628, %v1628
        %v1645 = vpack.c.bf16 %v1629, %v1629
        %v1646 = vpack.c.bf16 %v1630, %v1630
        %v1647 = vpack.c.bf16 %v1631, %v1631
        %v1664 = vunpack.c.l.b16 %v1376
        %v1665 = vunpack.c.l.b16 %v1377
        %v1666 = vunpack.c.l.b16 %v1378
        %v1667 = vunpack.c.l.b16 %v1379
        %v1668 = vunpack.c.l.b16 %v1380
        %v1669 = vunpack.c.l.b16 %v1381
        %v1670 = vunpack.c.l.b16 %v1382
        %v1671 = vunpack.c.l.b16 %v1383
        %v1672 = vunpack.c.l.b16 %v1384
        %v1673 = vunpack.c.l.b16 %v1385
        %v1674 = vunpack.c.l.b16 %v1386
        %v1675 = vunpack.c.l.b16 %v1387
        %v1676 = vunpack.c.l.b16 %v1388
        %v1677 = vunpack.c.l.b16 %v1389
        %v1678 = vunpack.c.l.b16 %v1390
        %v1679 = vunpack.c.l.b16 %v1391
        %v1680 = vpack.c.b16 %v1665, %v1664
        %v1681 = vpack.c.b16 %v1667, %v1666
        %v1682 = vpack.c.b16 %v1669, %v1668
        %v1683 = vpack.c.b16 %v1671, %v1670
        %v1684 = vpack.c.b16 %v1673, %v1672
        %v1685 = vpack.c.b16 %v1675, %v1674
        %v1686 = vpack.c.b16 %v1677, %v1676
        %v1687 = vpack.c.b16 %v1679, %v1678
        %v1712 = vunpack.c.l.b16 %v1408
        %v1713 = vunpack.c.l.b16 %v1409
        %v1714 = vunpack.c.l.b16 %v1410
        %v1715 = vunpack.c.l.b16 %v1411
        %v1716 = vunpack.c.l.b16 %v1412
        %v1717 = vunpack.c.l.b16 %v1413
        %v1718 = vunpack.c.l.b16 %v1414
        %v1719 = vunpack.c.l.b16 %v1415
        %v1720 = vunpack.c.l.b16 %v1416
        %v1721 = vunpack.c.l.b16 %v1417
        %v1722 = vunpack.c.l.b16 %v1418
        %v1723 = vunpack.c.l.b16 %v1419
        %v1724 = vunpack.c.l.b16 %v1420
        %v1725 = vunpack.c.l.b16 %v1421
        %v1726 = vunpack.c.l.b16 %v1422
        %v1727 = vunpack.c.l.b16 %v1423
        %v1728 = vpack.c.b16 %v1713, %v1712
        %v1729 = vpack.c.b16 %v1715, %v1714
        %v1730 = vpack.c.b16 %v1717, %v1716
        %v1731 = vpack.c.b16 %v1719, %v1718
        %v1732 = vpack.c.b16 %v1721, %v1720
        %v1733 = vpack.c.b16 %v1723, %v1722
        %v1734 = vpack.c.b16 %v1725, %v1724
        %v1735 = vpack.c.b16 %v1727, %v1726
        %v1760 = vunpack.c.l.b16 %v1488
        %v1761 = vunpack.c.l.b16 %v1489
        %v1762 = vunpack.c.l.b16 %v1490
        %v1763 = vunpack.c.l.b16 %v1491
        %v1764 = vunpack.c.l.b16 %v1492
        %v1765 = vunpack.c.l.b16 %v1493
        %v1766 = vunpack.c.l.b16 %v1494
        %v1767 = vunpack.c.l.b16 %v1495
        %v1768 = vunpack.c.l.b16 %v1496
        %v1769 = vunpack.c.l.b16 %v1497
        %v1770 = vunpack.c.l.b16 %v1498
        %v1771 = vunpack.c.l.b16 %v1499
        %v1772 = vunpack.c.l.b16 %v1500
        %v1773 = vunpack.c.l.b16 %v1501
        %v1774 = vunpack.c.l.b16 %v1502
        %v1775 = vunpack.c.l.b16 %v1503
        %v1776 = vpack.c.b16 %v1761, %v1760
        %v1777 = vpack.c.b16 %v1763, %v1762
        %v1778 = vpack.c.b16 %v1765, %v1764
        %v1779 = vpack.c.b16 %v1767, %v1766
        %v1780 = vpack.c.b16 %v1769, %v1768
        %v1781 = vpack.c.b16 %v1771, %v1770
        %v1782 = vpack.c.b16 %v1773, %v1772
        %v1783 = vpack.c.b16 %v1775, %v1774
        %v1808 = vunpack.c.l.b16 %v1522
        %v1809 = vunpack.c.l.b16 %v1523
        %v1810 = vunpack.c.l.b16 %v1524
        %v1811 = vunpack.c.l.b16 %v1525
        %v1812 = vunpack.c.l.b16 %v1526
        %v1813 = vunpack.c.l.b16 %v1527
        %v1814 = vunpack.c.l.b16 %v1528
        %v1815 = vunpack.c.l.b16 %v1529
        %v1816 = vunpack.c.l.b16 %v1530
        %v1817 = vunpack.c.l.b16 %v1531
        %v1818 = vunpack.c.l.b16 %v1532
        %v1819 = vunpack.c.l.b16 %v1533
        %v1820 = vunpack.c.l.b16 %v1534
        %v1821 = vunpack.c.l.b16 %v1535
        %v1822 = vunpack.c.l.b16 %v1536
        %v1823 = vunpack.c.l.b16 %v1537
        %v1824 = vpack.c.b16 %v1809, %v1808
        %v1825 = vpack.c.b16 %v1811, %v1810
        %v1826 = vpack.c.b16 %v1813, %v1812
        %v1827 = vpack.c.b16 %v1815, %v1814
        %v1828 = vpack.c.b16 %v1817, %v1816
        %v1829 = vpack.c.b16 %v1819, %v1818
        %v1830 = vpack.c.b16 %v1821, %v1820
        %v1831 = vpack.c.b16 %v1823, %v1822
        %v1842 = vunpack.c.l.b16 %v1540
        %v1843 = vunpack.c.l.b16 %v1541
        %v1844 = vpack.c.b16 %v1843, %v1842
        %v1862 = vunpack.c.l.b16 %v1560
        %v1863 = vunpack.c.l.b16 %v1561
        %v1864 = vunpack.c.l.b16 %v1562
        %v1865 = vunpack.c.l.b16 %v1563
        %v1866 = vunpack.c.l.b16 %v1564
        %v1867 = vunpack.c.l.b16 %v1565
        %v1868 = vunpack.c.l.b16 %v1566
        %v1869 = vunpack.c.l.b16 %v1567
        %v1870 = vunpack.c.l.b16 %v1568
        %v1871 = vunpack.c.l.b16 %v1569
        %v1872 = vunpack.c.l.b16 %v1570
        %v1873 = vunpack.c.l.b16 %v1571
        %v1874 = vunpack.c.l.b16 %v1572
        %v1875 = vunpack.c.l.b16 %v1573
        %v1876 = vunpack.c.l.b16 %v1574
        %v1877 = vunpack.c.l.b16 %v1575
        %v1878 = vpack.c.b16 %v1863, %v1862
        %v1879 = vpack.c.b16 %v1865, %v1864
        %v1880 = vpack.c.b16 %v1867, %v1866
        %v1881 = vpack.c.b16 %v1869, %v1868
        %v1882 = vpack.c.b16 %v1871, %v1870
        %v1883 = vpack.c.b16 %v1873, %v1872
        %v1884 = vpack.c.b16 %v1875, %v1874
        %v1885 = vpack.c.b16 %v1877, %v1876
        %v1910 = vunpack.c.l.b16 %v1594
        %v1911 = vunpack.c.l.b16 %v1595
        %v1912 = vunpack.c.l.b16 %v1596
        %v1913 = vunpack.c.l.b16 %v1597
        %v1914 = vunpack.c.l.b16 %v1598
        %v1915 = vunpack.c.l.b16 %v1599
        %v1916 = vunpack.c.l.b16 %v1600
        %v1917 = vunpack.c.l.b16 %v1601
        %v1918 = vunpack.c.l.b16 %v1602
        %v1919 = vunpack.c.l.b16 %v1603
        %v1920 = vunpack.c.l.b16 %v1604
        %v1921 = vunpack.c.l.b16 %v1605
        %v1922 = vunpack.c.l.b16 %v1606
        %v1923 = vunpack.c.l.b16 %v1607
        %v1924 = vunpack.c.l.b16 %v1608
        %v1925 = vunpack.c.l.b16 %v1609
        %v1926 = vpack.c.b16 %v1911, %v1910
        %v1927 = vpack.c.b16 %v1913, %v1912
        %v1928 = vpack.c.b16 %v1915, %v1914
        %v1929 = vpack.c.b16 %v1917, %v1916
        %v1930 = vpack.c.b16 %v1919, %v1918
        %v1931 = vpack.c.b16 %v1921, %v1920
        %v1932 = vpack.c.b16 %v1923, %v1922
        %v1933 = vpack.c.b16 %v1925, %v1924
        %v1944 = vunpack.c.l.b16 %v1612
        %v1945 = vunpack.c.l.b16 %v1613
        %v1946 = vpack.c.b16 %v1945, %v1944
        %v1964 = vunpack.c.l.b16 %v1632
        %v1965 = vunpack.c.l.b16 %v1633
        %v1966 = vunpack.c.l.b16 %v1634
        %v1967 = vunpack.c.l.b16 %v1635
        %v1968 = vunpack.c.l.b16 %v1636
        %v1969 = vunpack.c.l.b16 %v1637
        %v1970 = vunpack.c.l.b16 %v1638
        %v1971 = vunpack.c.l.b16 %v1639
        %v1972 = vunpack.c.l.b16 %v1640
        %v1973 = vunpack.c.l.b16 %v1641
        %v1974 = vunpack.c.l.b16 %v1642
        %v1975 = vunpack.c.l.b16 %v1643
        %v1976 = vunpack.c.l.b16 %v1644
        %v1977 = vunpack.c.l.b16 %v1645
        %v1978 = vunpack.c.l.b16 %v1646
        %v1979 = vunpack.c.l.b16 %v1647
        %v1980 = vpack.c.b16 %v1965, %v1964
        %v1981 = vpack.c.b16 %v1967, %v1966
        %v1982 = vpack.c.b16 %v1969, %v1968
        %v1983 = vpack.c.b16 %v1971, %v1970
        %v1984 = vpack.c.b16 %v1973, %v1972
        %v1985 = vpack.c.b16 %v1975, %v1974
        %v1986 = vpack.c.b16 %v1977, %v1976
        %v1987 = vpack.c.b16 %v1979, %v1978
        %v1996 = vld [vmem:[#allocation8] sm:$0xf]
        %v1997 = vld [vmem:[#allocation8 + $0x4] sm:$0xf]
        %v1998 = vld [vmem:[#allocation8 + $0x8] sm:$0xf]
        %v1999 = vld [vmem:[#allocation8 + $0xc] sm:$0xf]
        %v2000 = vld [vmem:[#allocation8 + $0x10] sm:$0xf]
        %v2001 = vld [vmem:[#allocation8 + $0x14] sm:$0xf]
        %v2002 = vld [vmem:[#allocation8 + $0x18] sm:$0xf]
        %v2003 = vld [vmem:[#allocation8 + $0x1c] sm:$0xf]
        %v2004 = vld [vmem:[#allocation8 + $0x20] sm:$0xf]
        %v2005 = vld [vmem:[#allocation8 + $0x24] sm:$0xf]
        %v2006 = vld [vmem:[#allocation8 + $0x28] sm:$0xf]
        %v2007 = vld [vmem:[#allocation8 + $0x2c] sm:$0xf]
        %v2008 = vld [vmem:[#allocation8 + $0x30] sm:$0xf]
        %v2009 = vld [vmem:[#allocation8 + $0x34] sm:$0xf]
        %v2010 = vld [vmem:[#allocation8 + $0x38] sm:$0xf]
        %v2011 = vld [vmem:[#allocation8 + $0x3c] sm:$0xf]
        %v2012 = vld [vmem:[#allocation8 + $0x40] sm:$0xf]
        %v2013 = vld [vmem:[#allocation8 + $0x44] sm:$0xf]
        %v2014 = vld [vmem:[#allocation8 + $0x48] sm:$0xf]
        %v2015 = vld [vmem:[#allocation8 + $0x4c] sm:$0xf]
        %v2016 = vld [vmem:[#allocation8 + $0x50] sm:$0xf]
        %v2017 = vld [vmem:[#allocation8 + $0x54] sm:$0xf]
        %v2018 = vld [vmem:[#allocation8 + $0x58] sm:$0xf]
        %v2019 = vld [vmem:[#allocation8 + $0x5c] sm:$0xf]
        %v2020 = vld [vmem:[#allocation8 + $0x60] sm:$0xf]
        %v2021 = vld [vmem:[#allocation8 + $0x64] sm:$0xf]
        %v2022 = vld [vmem:[#allocation8 + $0x68] sm:$0xf]
        %v2023 = vld [vmem:[#allocation8 + $0x6c] sm:$0xf]
        %v2024 = vld [vmem:[#allocation8 + $0x70] sm:$0xf]
        %v2025 = vld [vmem:[#allocation8 + $0x74] sm:$0xf]
        %v2026 = vld [vmem:[#allocation8 + $0x78] sm:$0xf]
        %v2027 = vld [vmem:[#allocation8 + $0x7c] sm:$0xf]
        %v2028 = vld [vmem:[#allocation8 + $0x80] sm:$0xf]
        %v2029 = vld [vmem:[#allocation8 + $0x84] sm:$0xf]
        %v2030 = vld [vmem:[#allocation8 + $0x88] sm:$0xf]
        %v2031 = vld [vmem:[#allocation8 + $0x8c] sm:$0xf]
        %v2032 = vld [vmem:[#allocation8 + $0x90] sm:$0xf]
        %v2033 = vld [vmem:[#allocation8 + $0x94] sm:$0xf]
        %v2034 = vld [vmem:[#allocation8 + $0x98] sm:$0xf]
        %v2035 = vld [vmem:[#allocation8 + $0x9c] sm:$0xf]
        %v2036 = vld [vmem:[#allocation8 + $0xa0] sm:$0xf]
        %v2037 = vld [vmem:[#allocation8 + $0xa4] sm:$0xf]
        %v2038 = vld [vmem:[#allocation8 + $0xa8] sm:$0xf]
        %v2039 = vld [vmem:[#allocation8 + $0xac] sm:$0xf]
        %v2040 = vld [vmem:[#allocation8 + $0xb0] sm:$0xf]
        %v2041 = vld [vmem:[#allocation8 + $0xb4] sm:$0xf]
        %v2042 = vld [vmem:[#allocation8 + $0xb8] sm:$0xf]
        %v2043 = vld [vmem:[#allocation8 + $0xbc] sm:$0xf]
        %v2044 = vld [vmem:[#allocation8 + $0xc0] sm:$0xf]
        %v2045 = vld [vmem:[#allocation8 + $0xc4] sm:$0xf]
        %v2046 = vld [vmem:[#allocation8 + $0xc8] sm:$0xf]
        %v2047 = vld [vmem:[#allocation8 + $0xcc] sm:$0xf]
        %v2048 = vld [vmem:[#allocation8 + $0xd0] sm:$0xf]
        %v2049 = vld [vmem:[#allocation8 + $0xd4] sm:$0xf]
        %v2050 = vld [vmem:[#allocation8 + $0xd8] sm:$0xf]
        %v2051 = vld [vmem:[#allocation8 + $0xdc] sm:$0xf]
        %v2052 = vld [vmem:[#allocation8 + $0xe0] sm:$0xf]
        %v2053 = vld [vmem:[#allocation8 + $0xe4] sm:$0xf]
        %v2054 = vld [vmem:[#allocation8 + $0xe8] sm:$0xf]
        %v2055 = vld [vmem:[#allocation8 + $0xec] sm:$0xf]
        %v2056 = vld [vmem:[#allocation8 + $0xf0] sm:$0xf]
        %v2057 = vld [vmem:[#allocation8 + $0xf4] sm:$0xf]
        %v2058 = vld [vmem:[#allocation8 + $0xf8] sm:$0xf]
        %v2059 = vld [vmem:[#allocation8 + $0xfc] sm:$0xf]
        %v2060 = vld [vmem:[#allocation8 + $0x100] sm:$0xf]
        %v2061 = vld [vmem:[#allocation8 + $0x104] sm:$0xf]
        %v2062 = vld [vmem:[#allocation8 + $0x108] sm:$0xf]
        %v2063 = vld [vmem:[#allocation8 + $0x10c] sm:$0xf]
        %v2064 = vld [vmem:[#allocation8 + $0x110] sm:$0xf]
        %v2065 = vld [vmem:[#allocation8 + $0x114] sm:$0xf]
        %v2066 = vld [vmem:[#allocation8 + $0x118] sm:$0xf]
        %v2067 = vld [vmem:[#allocation8 + $0x11c] sm:$0xf]
        %v2068 = vld [vmem:[#allocation8 + $0x120] sm:$0xf]
        %v2069 = vld [vmem:[#allocation8 + $0x124] sm:$0xf]
        %v2070 = vld [vmem:[#allocation8 + $0x128] sm:$0xf]
        %v2071 = vld [vmem:[#allocation8 + $0x12c] sm:$0xf]
        %v2072 = vld [vmem:[#allocation8 + $0x130] sm:$0xf]
        %v2073 = vld [vmem:[#allocation8 + $0x134] sm:$0xf]
        %v2074 = vld [vmem:[#allocation8 + $0x138] sm:$0xf]
        %v2075 = vld [vmem:[#allocation8 + $0x13c] sm:$0xf]
        %v2076 = vld [vmem:[#allocation8 + $0x140] sm:$0xf]
        %v2077 = vld [vmem:[#allocation8 + $0x144] sm:$0xf]
        %v2078 = vld [vmem:[#allocation8 + $0x148] sm:$0xf]
        %v2079 = vld [vmem:[#allocation8 + $0x14c] sm:$0xf]
        %v2080 = vld [vmem:[#allocation8 + $0x150] sm:$0xf]
        %v2081 = vld [vmem:[#allocation8 + $0x154] sm:$0xf]
        %v2082 = vld [vmem:[#allocation8 + $0x158] sm:$0xf]
        %v2083 = vld [vmem:[#allocation8 + $0x15c] sm:$0xf]
        %v2084 = vld [vmem:[#allocation8 + $0x160] sm:$0xf]
        %v2085 = vld [vmem:[#allocation8 + $0x164] sm:$0xf]
        %v2086 = vld [vmem:[#allocation8 + $0x168] sm:$0xf]
        %v2087 = vld [vmem:[#allocation8 + $0x16c] sm:$0xf]
        %v2088 = vld [vmem:[#allocation8 + $0x170] sm:$0xf]
        %v2089 = vld [vmem:[#allocation8 + $0x174] sm:$0xf]
        %v2090 = vld [vmem:[#allocation8 + $0x178] sm:$0xf]
        %v2091 = vld [vmem:[#allocation8 + $0x17c] sm:$0xf]
        %v2092 = vld [vmem:[#allocation8 + $0x180] sm:$0xf]
        %v2093 = vld [vmem:[#allocation8 + $0x184] sm:$0xf]
        %v2094 = vld [vmem:[#allocation8 + $0x188] sm:$0xf]
        %v2095 = vld [vmem:[#allocation8 + $0x18c] sm:$0xf]
        %v2096 = vld [vmem:[#allocation8 + $0x190] sm:$0xf]
        %v2097 = vld [vmem:[#allocation8 + $0x194] sm:$0xf]
        %v2098 = vld [vmem:[#allocation8 + $0x198] sm:$0xf]
        %v2099 = vld [vmem:[#allocation8 + $0x19c] sm:$0xf]
        %v2100 = vld [vmem:[#allocation8 + $0x1a0] sm:$0xf]
        %v2101 = vld [vmem:[#allocation8 + $0x1a4] sm:$0xf]
        %v2102 = vld [vmem:[#allocation8 + $0x1a8] sm:$0xf]
        %v2103 = vld [vmem:[#allocation8 + $0x1ac] sm:$0xf]
        %v2104 = vld [vmem:[#allocation8 + $0x1b0] sm:$0xf]
        %v2105 = vld [vmem:[#allocation8 + $0x1b4] sm:$0xf]
        %v2106 = vld [vmem:[#allocation8 + $0x1b8] sm:$0xf]
        %v2107 = vld [vmem:[#allocation8 + $0x1bc] sm:$0xf]
        %v2108 = vld [vmem:[#allocation8 + $0x1c0] sm:$0xf]
        %v2109 = vld [vmem:[#allocation8 + $0x1c4] sm:$0xf]
        %v2110 = vld [vmem:[#allocation8 + $0x1c8] sm:$0xf]
        %v2111 = vld [vmem:[#allocation8 + $0x1cc] sm:$0xf]
        %v2112 = vld [vmem:[#allocation8 + $0x1d0] sm:$0xf]
        %v2113 = vld [vmem:[#allocation8 + $0x1d4] sm:$0xf]
        %v2114 = vld [vmem:[#allocation8 + $0x1d8] sm:$0xf]
        %v2115 = vld [vmem:[#allocation8 + $0x1dc] sm:$0xf]
        %v2116 = vld [vmem:[#allocation8 + $0x1e0] sm:$0xf]
        %v2117 = vld [vmem:[#allocation8 + $0x1e4] sm:$0xf]
        %v2118 = vld [vmem:[#allocation8 + $0x1e8] sm:$0xf]
        %v2119 = vld [vmem:[#allocation8 + $0x1ec] sm:$0xf]
        %v2120 = vld [vmem:[#allocation8 + $0x1f0] sm:$0xf]
        %v2121 = vld [vmem:[#allocation8 + $0x1f4] sm:$0xf]
        %v2122 = vld [vmem:[#allocation8 + $0x1f8] sm:$0xf]
        %v2123 = vld [vmem:[#allocation8 + $0x1fc] sm:$0xf]
        %v2124 = vld [vmem:[#allocation8 + $0x200] sm:$0xf]
        %v2125 = vld [vmem:[#allocation8 + $0x204] sm:$0xf]
        %v2126 = vld [vmem:[#allocation8 + $0x208] sm:$0xf]
        %v2127 = vld [vmem:[#allocation8 + $0x20c] sm:$0xf]
        %v2128 = vld [vmem:[#allocation8 + $0x210] sm:$0xf]
        %v2129 = vld [vmem:[#allocation8 + $0x214] sm:$0xf]
        %v2130 = vld [vmem:[#allocation8 + $0x218] sm:$0xf]
        %v2131 = vld [vmem:[#allocation8 + $0x21c] sm:$0xf]
        %v2132 = vld [vmem:[#allocation8 + $0x220] sm:$0xf]
        %v2133 = vld [vmem:[#allocation8 + $0x224] sm:$0xf]
        %v2134 = vld [vmem:[#allocation8 + $0x228] sm:$0xf]
        %v2135 = vld [vmem:[#allocation8 + $0x22c] sm:$0xf]
        %v2136 = vld [vmem:[#allocation8 + $0x230] sm:$0xf]
        %v2137 = vld [vmem:[#allocation8 + $0x234] sm:$0xf]
        %v2138 = vld [vmem:[#allocation8 + $0x238] sm:$0xf]
        %v2139 = vld [vmem:[#allocation8 + $0x23c] sm:$0xf]
        %v2284 = vunpack.c.l.b16 %v1996
        %v2285 = vunpack.c.l.b16 %v1997
        %v2286 = vunpack.c.l.b16 %v1998
        %v2287 = vunpack.c.l.b16 %v1999
        %v2288 = vunpack.c.l.b16 %v2000
        %v2289 = vunpack.c.l.b16 %v2001
        %v2290 = vunpack.c.l.b16 %v2002
        %v2291 = vunpack.c.l.b16 %v2003
        %v2292 = vunpack.c.l.b16 %v2004
        %v2293 = vunpack.c.l.b16 %v2005
        %v2294 = vunpack.c.l.b16 %v2006
        %v2295 = vunpack.c.l.b16 %v2007
        %v2296 = vunpack.c.l.b16 %v2008
        %v2297 = vunpack.c.l.b16 %v2009
        %v2298 = vunpack.c.l.b16 %v2010
        %v2299 = vunpack.c.l.b16 %v2011
        %v2300 = vunpack.c.l.b16 %v2012
        %v2301 = vunpack.c.l.b16 %v2013
        %v2302 = vunpack.c.l.b16 %v2014
        %v2303 = vunpack.c.l.b16 %v2015
        %v2304 = vunpack.c.l.b16 %v2016
        %v2305 = vunpack.c.l.b16 %v2017
        %v2306 = vunpack.c.l.b16 %v2018
        %v2307 = vunpack.c.l.b16 %v2019
        %v2308 = vunpack.c.l.b16 %v2020
        %v2309 = vunpack.c.l.b16 %v2021
        %v2310 = vunpack.c.l.b16 %v2022
        %v2311 = vunpack.c.l.b16 %v2023
        %v2312 = vunpack.c.l.b16 %v2024
        %v2313 = vunpack.c.l.b16 %v2025
        %v2314 = vunpack.c.l.b16 %v2026
        %v2315 = vunpack.c.l.b16 %v2027
        %v2316 = vunpack.c.l.b16 %v2028
        %v2317 = vunpack.c.l.b16 %v2029
        %v2318 = vunpack.c.l.b16 %v2030
        %v2319 = vunpack.c.l.b16 %v2031
        %v2320 = vunpack.c.l.b16 %v2032
        %v2321 = vunpack.c.l.b16 %v2033
        %v2322 = vunpack.c.l.b16 %v2034
        %v2323 = vunpack.c.l.b16 %v2035
        %v2324 = vunpack.c.l.b16 %v2036
        %v2325 = vunpack.c.l.b16 %v2037
        %v2326 = vunpack.c.l.b16 %v2038
        %v2327 = vunpack.c.l.b16 %v2039
        %v2328 = vunpack.c.l.b16 %v2040
        %v2329 = vunpack.c.l.b16 %v2041
        %v2330 = vunpack.c.l.b16 %v2042
        %v2331 = vunpack.c.l.b16 %v2043
        %v2332 = vunpack.c.l.b16 %v2044
        %v2333 = vunpack.c.l.b16 %v2045
        %v2334 = vunpack.c.l.b16 %v2046
        %v2335 = vunpack.c.l.b16 %v2047
        %v2336 = vunpack.c.l.b16 %v2048
        %v2337 = vunpack.c.l.b16 %v2049
        %v2338 = vunpack.c.l.b16 %v2050
        %v2339 = vunpack.c.l.b16 %v2051
        %v2340 = vunpack.c.l.b16 %v2052
        %v2341 = vunpack.c.l.b16 %v2053
        %v2342 = vunpack.c.l.b16 %v2054
        %v2343 = vunpack.c.l.b16 %v2055
        %v2344 = vunpack.c.l.b16 %v2056
        %v2345 = vunpack.c.l.b16 %v2057
        %v2346 = vunpack.c.l.b16 %v2058
        %v2347 = vunpack.c.l.b16 %v2059
        %v2348 = vunpack.c.l.b16 %v2060
        %v2349 = vunpack.c.l.b16 %v2061
        %v2350 = vunpack.c.l.b16 %v2062
        %v2351 = vunpack.c.l.b16 %v2063
        %v2352 = vunpack.c.l.b16 %v2064
        %v2353 = vunpack.c.l.b16 %v2065
        %v2354 = vunpack.c.l.b16 %v2066
        %v2355 = vunpack.c.l.b16 %v2067
        %v2356 = vunpack.c.l.b16 %v2068
        %v2357 = vunpack.c.l.b16 %v2069
        %v2358 = vunpack.c.l.b16 %v2070
        %v2359 = vunpack.c.l.b16 %v2071
        %v2360 = vunpack.c.l.b16 %v2072
        %v2361 = vunpack.c.l.b16 %v2073
        %v2362 = vunpack.c.l.b16 %v2074
        %v2363 = vunpack.c.l.b16 %v2075
        %v2364 = vunpack.c.l.b16 %v2076
        %v2365 = vunpack.c.l.b16 %v2077
        %v2366 = vunpack.c.l.b16 %v2078
        %v2367 = vunpack.c.l.b16 %v2079
        %v2368 = vunpack.c.l.b16 %v2080
        %v2369 = vunpack.c.l.b16 %v2081
        %v2370 = vunpack.c.l.b16 %v2082
        %v2371 = vunpack.c.l.b16 %v2083
        %v2372 = vunpack.c.l.b16 %v2084
        %v2373 = vunpack.c.l.b16 %v2085
        %v2374 = vunpack.c.l.b16 %v2086
        %v2375 = vunpack.c.l.b16 %v2087
        %v2376 = vunpack.c.l.b16 %v2088
        %v2377 = vunpack.c.l.b16 %v2089
        %v2378 = vunpack.c.l.b16 %v2090
        %v2379 = vunpack.c.l.b16 %v2091
        %v2380 = vunpack.c.l.b16 %v2092
        %v2381 = vunpack.c.l.b16 %v2093
        %v2382 = vunpack.c.l.b16 %v2094
        %v2383 = vunpack.c.l.b16 %v2095
        %v2384 = vunpack.c.l.b16 %v2096
        %v2385 = vunpack.c.l.b16 %v2097
        %v2386 = vunpack.c.l.b16 %v2098
        %v2387 = vunpack.c.l.b16 %v2099
        %v2388 = vunpack.c.l.b16 %v2100
        %v2389 = vunpack.c.l.b16 %v2101
        %v2390 = vunpack.c.l.b16 %v2102
        %v2391 = vunpack.c.l.b16 %v2103
        %v2392 = vunpack.c.l.b16 %v2104
        %v2393 = vunpack.c.l.b16 %v2105
        %v2394 = vunpack.c.l.b16 %v2106
        %v2395 = vunpack.c.l.b16 %v2107
        %v2396 = vunpack.c.l.b16 %v2108
        %v2397 = vunpack.c.l.b16 %v2109
        %v2398 = vunpack.c.l.b16 %v2110
        %v2399 = vunpack.c.l.b16 %v2111
        %v2400 = vunpack.c.l.b16 %v2112
        %v2401 = vunpack.c.l.b16 %v2113
        %v2402 = vunpack.c.l.b16 %v2114
        %v2403 = vunpack.c.l.b16 %v2115
        %v2404 = vunpack.c.l.b16 %v2116
        %v2405 = vunpack.c.l.b16 %v2117
        %v2406 = vunpack.c.l.b16 %v2118
        %v2407 = vunpack.c.l.b16 %v2119
        %v2408 = vunpack.c.l.b16 %v2120
        %v2409 = vunpack.c.l.b16 %v2121
        %v2410 = vunpack.c.l.b16 %v2122
        %v2411 = vunpack.c.l.b16 %v2123
        %v2412 = vunpack.c.l.b16 %v2124
        %v2413 = vunpack.c.l.b16 %v2125
        %v2414 = vunpack.c.l.b16 %v2126
        %v2415 = vunpack.c.l.b16 %v2127
        %v2416 = vunpack.c.l.b16 %v2128
        %v2417 = vunpack.c.l.b16 %v2129
        %v2418 = vunpack.c.l.b16 %v2130
        %v2419 = vunpack.c.l.b16 %v2131
        %v2420 = vunpack.c.l.b16 %v2132
        %v2421 = vunpack.c.l.b16 %v2133
        %v2422 = vunpack.c.l.b16 %v2134
        %v2423 = vunpack.c.l.b16 %v2135
        %v2424 = vunpack.c.l.b16 %v2136
        %v2425 = vunpack.c.l.b16 %v2137
        %v2426 = vunpack.c.l.b16 %v2138
        %v2427 = vunpack.c.l.b16 %v2139
        %v2428 = vpack.c.b16 %v2285, %v2284
        %v2429 = vpack.c.b16 %v2287, %v2286
        %v2430 = vpack.c.b16 %v2289, %v2288
        %v2431 = vpack.c.b16 %v2291, %v2290
        %v2432 = vpack.c.b16 %v2293, %v2292
        %v2433 = vpack.c.b16 %v2295, %v2294
        %v2434 = vpack.c.b16 %v2297, %v2296
        %v2435 = vpack.c.b16 %v2299, %v2298
        %v2436 = vpack.c.b16 %v2301, %v2300
        %v2437 = vpack.c.b16 %v2303, %v2302
        %v2438 = vpack.c.b16 %v2305, %v2304
        %v2439 = vpack.c.b16 %v2307, %v2306
        %v2440 = vpack.c.b16 %v2309, %v2308
        %v2441 = vpack.c.b16 %v2311, %v2310
        %v2442 = vpack.c.b16 %v2313, %v2312
        %v2443 = vpack.c.b16 %v2315, %v2314
        %v2444 = vpack.c.b16 %v2317, %v2316
        %v2445 = vpack.c.b16 %v2319, %v2318
        %v2446 = vpack.c.b16 %v2321, %v2320
        %v2447 = vpack.c.b16 %v2323, %v2322
        %v2448 = vpack.c.b16 %v2325, %v2324
        %v2449 = vpack.c.b16 %v2327, %v2326
        %v2450 = vpack.c.b16 %v2329, %v2328
        %v2451 = vpack.c.b16 %v2331, %v2330
        %v2452 = vpack.c.b16 %v2333, %v2332
        %v2453 = vpack.c.b16 %v2335, %v2334
        %v2454 = vpack.c.b16 %v2337, %v2336
        %v2455 = vpack.c.b16 %v2339, %v2338
        %v2456 = vpack.c.b16 %v2341, %v2340
        %v2457 = vpack.c.b16 %v2343, %v2342
        %v2458 = vpack.c.b16 %v2345, %v2344
        %v2459 = vpack.c.b16 %v2347, %v2346
        %v2460 = vpack.c.b16 %v2349, %v2348
        %v2461 = vpack.c.b16 %v2351, %v2350
        %v2462 = vpack.c.b16 %v2353, %v2352
        %v2463 = vpack.c.b16 %v2355, %v2354
        %v2464 = vpack.c.b16 %v2357, %v2356
        %v2465 = vpack.c.b16 %v2359, %v2358
        %v2466 = vpack.c.b16 %v2361, %v2360
        %v2467 = vpack.c.b16 %v2363, %v2362
        %v2468 = vpack.c.b16 %v2365, %v2364
        %v2469 = vpack.c.b16 %v2367, %v2366
        %v2470 = vpack.c.b16 %v2369, %v2368
        %v2471 = vpack.c.b16 %v2371, %v2370
        %v2472 = vpack.c.b16 %v2373, %v2372
        %v2473 = vpack.c.b16 %v2375, %v2374
        %v2474 = vpack.c.b16 %v2377, %v2376
        %v2475 = vpack.c.b16 %v2379, %v2378
        %v2476 = vpack.c.b16 %v2381, %v2380
        %v2477 = vpack.c.b16 %v2383, %v2382
        %v2478 = vpack.c.b16 %v2385, %v2384
        %v2479 = vpack.c.b16 %v2387, %v2386
        %v2480 = vpack.c.b16 %v2389, %v2388
        %v2481 = vpack.c.b16 %v2391, %v2390
        %v2482 = vpack.c.b16 %v2393, %v2392
        %v2483 = vpack.c.b16 %v2395, %v2394
        %v2484 = vpack.c.b16 %v2397, %v2396
        %v2485 = vpack.c.b16 %v2399, %v2398
        %v2486 = vpack.c.b16 %v2401, %v2400
        %v2487 = vpack.c.b16 %v2403, %v2402
        %v2488 = vpack.c.b16 %v2405, %v2404
        %v2489 = vpack.c.b16 %v2407, %v2406
        %v2490 = vpack.c.b16 %v2409, %v2408
        %v2491 = vpack.c.b16 %v2411, %v2410
        %v2492 = vpack.c.b16 %v2413, %v2412
        %v2493 = vpack.c.b16 %v2415, %v2414
        %v2494 = vpack.c.b16 %v2417, %v2416
        %v2495 = vpack.c.b16 %v2419, %v2418
        %v2496 = vpack.c.b16 %v2421, %v2420
        %v2497 = vpack.c.b16 %v2423, %v2422
        %v2498 = vpack.c.b16 %v2425, %v2424
        %v2499 = vpack.c.b16 %v2427, %v2426
        %2572 = vmatpush.bf16.msra.mxu0 %v2435
        %2573 = vmatpush.bf16.msra.mxu0 %v2434
        %2574 = vmatpush.bf16.msra.mxu0 %v2433
        %2575 = vmatpush.bf16.msra.mxu0 %v2432
        %2576 = vmatpush.bf16.msra.mxu0 %v2431
        %2577 = vmatpush.bf16.msra.mxu0 %v2430
        %2578 = vmatpush.bf16.msra.mxu0 %v2429
        %2579 = vmatpush.bf16.msra.mxu0 %v2428
        %2580 = vmatmul.bf16.gmra.mxu0 %v1680
        %v2581 = vpop.f32.mrf.mxu0
        %v2582 = vadd.f32 0.0, %v2581
        %v2583 = vpop.f32.mrf.mxu0
        %v2584 = vadd.f32 0.0, %v2583
        %2585 = vmatmul.bf16.gmra.mxu0 %v1681
        %v2586 = vpop.f32.mrf.mxu0
        %v2587 = vadd.f32 0.0, %v2586
        %v2588 = vpop.f32.mrf.mxu0
        %v2589 = vadd.f32 0.0, %v2588
        %2590 = vmatmul.bf16.gmra.mxu0 %v1682
        %v2591 = vpop.f32.mrf.mxu0
        %v2592 = vadd.f32 0.0, %v2591
        %v2593 = vpop.f32.mrf.mxu0
        %v2594 = vadd.f32 0.0, %v2593
        %2595 = vmatmul.bf16.gmra.mxu0 %v1683
        %v2596 = vpop.f32.mrf.mxu0
        %v2597 = vadd.f32 0.0, %v2596
        %v2598 = vpop.f32.mrf.mxu0
        %v2599 = vadd.f32 0.0, %v2598
        %2600 = vmatmul.bf16.gmra.mxu0 %v1684
        %v2601 = vpop.f32.mrf.mxu0
        %v2602 = vadd.f32 0.0, %v2601
        %v2603 = vpop.f32.mrf.mxu0
        %v2604 = vadd.f32 0.0, %v2603
        %2605 = vmatmul.bf16.gmra.mxu0 %v1685
        %v2606 = vpop.f32.mrf.mxu0
        %v2607 = vadd.f32 0.0, %v2606
        %v2608 = vpop.f32.mrf.mxu0
        %v2609 = vadd.f32 0.0, %v2608
        %2610 = vmatmul.bf16.gmra.mxu0 %v1686
        %v2611 = vpop.f32.mrf.mxu0
        %v2612 = vadd.f32 0.0, %v2611
        %v2613 = vpop.f32.mrf.mxu0
        %v2614 = vadd.f32 0.0, %v2613
        %2615 = vmatmul.bf16.gmra.mxu0 %v1687
        %v2616 = vpop.f32.mrf.mxu0
        %v2617 = vadd.f32 0.0, %v2616
        %v2618 = vpop.f32.mrf.mxu0
        %v2619 = vadd.f32 0.0, %v2618
        %2620 = vdwg.mxu0
        %2621 = vmatpush.bf16.msra.mxu0 %v2443
        %2622 = vmatpush.bf16.msra.mxu0 %v2442
        %2623 = vmatpush.bf16.msra.mxu0 %v2441
        %2624 = vmatpush.bf16.msra.mxu0 %v2440
        %2625 = vmatpush.bf16.msra.mxu0 %v2439
        %2626 = vmatpush.bf16.msra.mxu0 %v2438
        %2627 = vmatpush.bf16.msra.mxu0 %v2437
        %2628 = vmatpush.bf16.msra.mxu0 %v2436
        %2629 = vmatmul.bf16.gmra.mxu0 %v1728
        %v2630 = vpop.f32.mrf.mxu0
        %v2631 = vadd.f32 %v2582, %v2630
        %v2632 = vpop.f32.mrf.mxu0
        %v2633 = vadd.f32 %v2584, %v2632
        %2634 = vmatmul.bf16.gmra.mxu0 %v1729
        %v2635 = vpop.f32.mrf.mxu0
        %v2636 = vadd.f32 %v2587, %v2635
        %v2637 = vpop.f32.mrf.mxu0
        %v2638 = vadd.f32 %v2589, %v2637
        %2639 = vmatmul.bf16.gmra.mxu0 %v1730
        %v2640 = vpop.f32.mrf.mxu0
        %v2641 = vadd.f32 %v2592, %v2640
        %v2642 = vpop.f32.mrf.mxu0
        %v2643 = vadd.f32 %v2594, %v2642
        %2644 = vmatmul.bf16.gmra.mxu0 %v1731
        %v2645 = vpop.f32.mrf.mxu0
        %v2646 = vadd.f32 %v2597, %v2645
        %v2647 = vpop.f32.mrf.mxu0
        %v2648 = vadd.f32 %v2599, %v2647
        %2649 = vmatmul.bf16.gmra.mxu0 %v1732
        %v2650 = vpop.f32.mrf.mxu0
        %v2651 = vadd.f32 %v2602, %v2650
        %v2652 = vpop.f32.mrf.mxu0
        %v2653 = vadd.f32 %v2604, %v2652
        %2654 = vmatmul.bf16.gmra.mxu0 %v1733
        %v2655 = vpop.f32.mrf.mxu0
        %v2656 = vadd.f32 %v2607, %v2655
        %v2657 = vpop.f32.mrf.mxu0
        %v2658 = vadd.f32 %v2609, %v2657
        %2659 = vmatmul.bf16.gmra.mxu0 %v1734
        %v2660 = vpop.f32.mrf.mxu0
        %v2661 = vadd.f32 %v2612, %v2660
        %v2662 = vpop.f32.mrf.mxu0
        %v2663 = vadd.f32 %v2614, %v2662
        %2664 = vmatmul.bf16.gmra.mxu0 %v1735
        %v2665 = vpop.f32.mrf.mxu0
        %v2666 = vadd.f32 %v2617, %v2665
        %v2667 = vpop.f32.mrf.mxu0
        %v2668 = vadd.f32 %v2619, %v2667
        %2669 = vdwg.mxu0
        %2670 = vmatpush.bf16.msra.mxu0 %v2451
        %2671 = vmatpush.bf16.msra.mxu0 %v2450
        %2672 = vmatpush.bf16.msra.mxu0 %v2449
        %2673 = vmatpush.bf16.msra.mxu0 %v2448
        %2674 = vmatpush.bf16.msra.mxu0 %v2447
        %2675 = vmatpush.bf16.msra.mxu0 %v2446
        %2676 = vmatpush.bf16.msra.mxu0 %v2445
        %2677 = vmatpush.bf16.msra.mxu0 %v2444
        %2678 = vmatmul.bf16.gmra.mxu0 %v1776
        %v2679 = vpop.f32.mrf.mxu0
        %v2680 = vadd.f32 %v2631, %v2679
        %v2681 = vpop.f32.mrf.mxu0
        %v2682 = vadd.f32 %v2633, %v2681
        %2683 = vmatmul.bf16.gmra.mxu0 %v1777
        %v2684 = vpop.f32.mrf.mxu0
        %v2685 = vadd.f32 %v2636, %v2684
        %v2686 = vpop.f32.mrf.mxu0
        %v2687 = vadd.f32 %v2638, %v2686
        %2688 = vmatmul.bf16.gmra.mxu0 %v1778
        %v2689 = vpop.f32.mrf.mxu0
        %v2690 = vadd.f32 %v2641, %v2689
        %v2691 = vpop.f32.mrf.mxu0
        %v2692 = vadd.f32 %v2643, %v2691
        %2693 = vmatmul.bf16.gmra.mxu0 %v1779
        %v2694 = vpop.f32.mrf.mxu0
        %v2695 = vadd.f32 %v2646, %v2694
        %v2696 = vpop.f32.mrf.mxu0
        %v2697 = vadd.f32 %v2648, %v2696
        %2698 = vmatmul.bf16.gmra.mxu0 %v1780
        %v2699 = vpop.f32.mrf.mxu0
        %v2700 = vadd.f32 %v2651, %v2699
        %v2701 = vpop.f32.mrf.mxu0
        %v2702 = vadd.f32 %v2653, %v2701
        %2703 = vmatmul.bf16.gmra.mxu0 %v1781
        %v2704 = vpop.f32.mrf.mxu0
        %v2705 = vadd.f32 %v2656, %v2704
        %v2706 = vpop.f32.mrf.mxu0
        %v2707 = vadd.f32 %v2658, %v2706
        %2708 = vmatmul.bf16.gmra.mxu0 %v1782
        %v2709 = vpop.f32.mrf.mxu0
        %v2710 = vadd.f32 %v2661, %v2709
        %v2711 = vpop.f32.mrf.mxu0
        %v2712 = vadd.f32 %v2663, %v2711
        %2713 = vmatmul.bf16.gmra.mxu0 %v1783
        %v2714 = vpop.f32.mrf.mxu0
        %v2715 = vadd.f32 %v2666, %v2714
        %v2716 = vpop.f32.mrf.mxu0
        %v2717 = vadd.f32 %v2668, %v2716
        %2718 = vdwg.mxu0
        %2719 = vmatpush.bf16.msra.mxu0 %v2459
        %2720 = vmatpush.bf16.msra.mxu0 %v2458
        %2721 = vmatpush.bf16.msra.mxu0 %v2457
        %2722 = vmatpush.bf16.msra.mxu0 %v2456
        %2723 = vmatpush.bf16.msra.mxu0 %v2455
        %2724 = vmatpush.bf16.msra.mxu0 %v2454
        %2725 = vmatpush.bf16.msra.mxu0 %v2453
        %2726 = vmatpush.bf16.msra.mxu0 %v2452
        %2727 = vmatmul.bf16.gmra.mxu0 %v1824
        %v2728 = vpop.f32.mrf.mxu0
        %v2729 = vadd.f32 %v2680, %v2728
        %v2730 = vpop.f32.mrf.mxu0
        %v2731 = vadd.f32 %v2682, %v2730
        %2732 = vmatmul.bf16.gmra.mxu0 %v1825
        %v2733 = vpop.f32.mrf.mxu0
        %v2734 = vadd.f32 %v2685, %v2733
        %v2735 = vpop.f32.mrf.mxu0
        %v2736 = vadd.f32 %v2687, %v2735
        %2737 = vmatmul.bf16.gmra.mxu0 %v1826
        %v2738 = vpop.f32.mrf.mxu0
        %v2739 = vadd.f32 %v2690, %v2738
        %v2740 = vpop.f32.mrf.mxu0
        %v2741 = vadd.f32 %v2692, %v2740
        %2742 = vmatmul.bf16.gmra.mxu0 %v1827
        %v2743 = vpop.f32.mrf.mxu0
        %v2744 = vadd.f32 %v2695, %v2743
        %v2745 = vpop.f32.mrf.mxu0
        %v2746 = vadd.f32 %v2697, %v2745
        %2747 = vmatmul.bf16.gmra.mxu0 %v1828
        %v2748 = vpop.f32.mrf.mxu0
        %v2749 = vadd.f32 %v2700, %v2748
        %v2750 = vpop.f32.mrf.mxu0
        %v2751 = vadd.f32 %v2702, %v2750
        %2752 = vmatmul.bf16.gmra.mxu0 %v1829
        %v2753 = vpop.f32.mrf.mxu0
        %v2754 = vadd.f32 %v2705, %v2753
        %v2755 = vpop.f32.mrf.mxu0
        %v2756 = vadd.f32 %v2707, %v2755
        %2757 = vmatmul.bf16.gmra.mxu0 %v1830
        %v2758 = vpop.f32.mrf.mxu0
        %v2759 = vadd.f32 %v2710, %v2758
        %v2760 = vpop.f32.mrf.mxu0
        %v2761 = vadd.f32 %v2712, %v2760
        %2762 = vmatmul.bf16.gmra.mxu0 %v1831
        %v2763 = vpop.f32.mrf.mxu0
        %v2764 = vadd.f32 %v2715, %v2763
        %v2765 = vpop.f32.mrf.mxu0
        %v2766 = vadd.f32 %v2717, %v2765
        %2767 = vdwg.mxu0
        %2768 = vmatpush.bf16.msra.mxu0 %v2467
        %2769 = vmatpush.bf16.msra.mxu0 %v2466
        %2770 = vmatpush.bf16.msra.mxu0 %v2465
        %2771 = vmatpush.bf16.msra.mxu0 %v2464
        %2772 = vmatpush.bf16.msra.mxu0 %v2463
        %2773 = vmatpush.bf16.msra.mxu0 %v2462
        %2774 = vmatpush.bf16.msra.mxu0 %v2461
        %2775 = vmatpush.bf16.msra.mxu0 %v2460
        %2776 = vmatmul.bf16.gmra.mxu0 %v1729
        %v2777 = vpop.f32.mrf.mxu0
        %v2778 = vadd.f32 %v2729, %v2777
        %v2779 = vpop.f32.mrf.mxu0
        %v2780 = vadd.f32 %v2731, %v2779
        %2781 = vmatmul.bf16.gmra.mxu0 %v1730
        %v2782 = vpop.f32.mrf.mxu0
        %v2783 = vadd.f32 %v2734, %v2782
        %v2784 = vpop.f32.mrf.mxu0
        %v2785 = vadd.f32 %v2736, %v2784
        %2786 = vmatmul.bf16.gmra.mxu0 %v1731
        %v2787 = vpop.f32.mrf.mxu0
        %v2788 = vadd.f32 %v2739, %v2787
        %v2789 = vpop.f32.mrf.mxu0
        %v2790 = vadd.f32 %v2741, %v2789
        %2791 = vmatmul.bf16.gmra.mxu0 %v1732
        %v2792 = vpop.f32.mrf.mxu0
        %v2793 = vadd.f32 %v2744, %v2792
        %v2794 = vpop.f32.mrf.mxu0
        %v2795 = vadd.f32 %v2746, %v2794
        %2796 = vmatmul.bf16.gmra.mxu0 %v1733
        %v2797 = vpop.f32.mrf.mxu0
        %v2798 = vadd.f32 %v2749, %v2797
        %v2799 = vpop.f32.mrf.mxu0
        %v2800 = vadd.f32 %v2751, %v2799
        %2801 = vmatmul.bf16.gmra.mxu0 %v1734
        %v2802 = vpop.f32.mrf.mxu0
        %v2803 = vadd.f32 %v2754, %v2802
        %v2804 = vpop.f32.mrf.mxu0
        %v2805 = vadd.f32 %v2756, %v2804
        %2806 = vmatmul.bf16.gmra.mxu0 %v1735
        %v2807 = vpop.f32.mrf.mxu0
        %v2808 = vadd.f32 %v2759, %v2807
        %v2809 = vpop.f32.mrf.mxu0
        %v2810 = vadd.f32 %v2761, %v2809
        %2811 = vmatmul.bf16.gmra.mxu0 %v1844
        %v2812 = vpop.f32.mrf.mxu0
        %v2813 = vadd.f32 %v2764, %v2812
        %v2814 = vpop.f32.mrf.mxu0
        %v2815 = vadd.f32 %v2766, %v2814
        %2816 = vdwg.mxu0
        %2817 = vmatpush.bf16.msra.mxu0 %v2475
        %2818 = vmatpush.bf16.msra.mxu0 %v2474
        %2819 = vmatpush.bf16.msra.mxu0 %v2473
        %2820 = vmatpush.bf16.msra.mxu0 %v2472
        %2821 = vmatpush.bf16.msra.mxu0 %v2471
        %2822 = vmatpush.bf16.msra.mxu0 %v2470
        %2823 = vmatpush.bf16.msra.mxu0 %v2469
        %2824 = vmatpush.bf16.msra.mxu0 %v2468
        %2825 = vmatmul.bf16.gmra.mxu0 %v1878
        %v2826 = vpop.f32.mrf.mxu0
        %v2827 = vadd.f32 %v2778, %v2826
        %v2828 = vpop.f32.mrf.mxu0
        %v2829 = vadd.f32 %v2780, %v2828
        %2830 = vmatmul.bf16.gmra.mxu0 %v1879
        %v2831 = vpop.f32.mrf.mxu0
        %v2832 = vadd.f32 %v2783, %v2831
        %v2833 = vpop.f32.mrf.mxu0
        %v2834 = vadd.f32 %v2785, %v2833
        %2835 = vmatmul.bf16.gmra.mxu0 %v1880
        %v2836 = vpop.f32.mrf.mxu0
        %v2837 = vadd.f32 %v2788, %v2836
        %v2838 = vpop.f32.mrf.mxu0
        %v2839 = vadd.f32 %v2790, %v2838
        %2840 = vmatmul.bf16.gmra.mxu0 %v1881
        %v2841 = vpop.f32.mrf.mxu0
        %v2842 = vadd.f32 %v2793, %v2841
        %v2843 = vpop.f32.mrf.mxu0
        %v2844 = vadd.f32 %v2795, %v2843
        %2845 = vmatmul.bf16.gmra.mxu0 %v1882
        %v2846 = vpop.f32.mrf.mxu0
        %v2847 = vadd.f32 %v2798, %v2846
        %v2848 = vpop.f32.mrf.mxu0
        %v2849 = vadd.f32 %v2800, %v2848
        %2850 = vmatmul.bf16.gmra.mxu0 %v1883
        %v2851 = vpop.f32.mrf.mxu0
        %v2852 = vadd.f32 %v2803, %v2851
        %v2853 = vpop.f32.mrf.mxu0
        %v2854 = vadd.f32 %v2805, %v2853
        %2855 = vmatmul.bf16.gmra.mxu0 %v1884
        %v2856 = vpop.f32.mrf.mxu0
        %v2857 = vadd.f32 %v2808, %v2856
        %v2858 = vpop.f32.mrf.mxu0
        %v2859 = vadd.f32 %v2810, %v2858
        %2860 = vmatmul.bf16.gmra.mxu0 %v1885
        %v2861 = vpop.f32.mrf.mxu0
        %v2862 = vadd.f32 %v2813, %v2861
        %v2863 = vpop.f32.mrf.mxu0
        %v2864 = vadd.f32 %v2815, %v2863
        %2865 = vdwg.mxu0
        %2866 = vmatpush.bf16.msra.mxu0 %v2483
        %2867 = vmatpush.bf16.msra.mxu0 %v2482
        %2868 = vmatpush.bf16.msra.mxu0 %v2481
        %2869 = vmatpush.bf16.msra.mxu0 %v2480
        %2870 = vmatpush.bf16.msra.mxu0 %v2479
        %2871 = vmatpush.bf16.msra.mxu0 %v2478
        %2872 = vmatpush.bf16.msra.mxu0 %v2477
        %2873 = vmatpush.bf16.msra.mxu0 %v2476
        %2874 = vmatmul.bf16.gmra.mxu0 %v1926
        %v2875 = vpop.f32.mrf.mxu0
        %v2876 = vadd.f32 %v2827, %v2875
        %v2877 = vpop.f32.mrf.mxu0
        %v2878 = vadd.f32 %v2829, %v2877
        %2879 = vmatmul.bf16.gmra.mxu0 %v1927
        %v2880 = vpop.f32.mrf.mxu0
        %v2881 = vadd.f32 %v2832, %v2880
        %v2882 = vpop.f32.mrf.mxu0
        %v2883 = vadd.f32 %v2834, %v2882
        %2884 = vmatmul.bf16.gmra.mxu0 %v1928
        %v2885 = vpop.f32.mrf.mxu0
        %v2886 = vadd.f32 %v2837, %v2885
        %v2887 = vpop.f32.mrf.mxu0
        %v2888 = vadd.f32 %v2839, %v2887
        %2889 = vmatmul.bf16.gmra.mxu0 %v1929
        %v2890 = vpop.f32.mrf.mxu0
        %v2891 = vadd.f32 %v2842, %v2890
        %v2892 = vpop.f32.mrf.mxu0
        %v2893 = vadd.f32 %v2844, %v2892
        %2894 = vmatmul.bf16.gmra.mxu0 %v1930
        %v2895 = vpop.f32.mrf.mxu0
        %v2896 = vadd.f32 %v2847, %v2895
        %v2897 = vpop.f32.mrf.mxu0
        %v2898 = vadd.f32 %v2849, %v2897
        %2899 = vmatmul.bf16.gmra.mxu0 %v1931
        %v2900 = vpop.f32.mrf.mxu0
        %v2901 = vadd.f32 %v2852, %v2900
        %v2902 = vpop.f32.mrf.mxu0
        %v2903 = vadd.f32 %v2854, %v2902
        %2904 = vmatmul.bf16.gmra.mxu0 %v1932
        %v2905 = vpop.f32.mrf.mxu0
        %v2906 = vadd.f32 %v2857, %v2905
        %v2907 = vpop.f32.mrf.mxu0
        %v2908 = vadd.f32 %v2859, %v2907
        %2909 = vmatmul.bf16.gmra.mxu0 %v1933
        %v2910 = vpop.f32.mrf.mxu0
        %v2911 = vadd.f32 %v2862, %v2910
        %v2912 = vpop.f32.mrf.mxu0
        %v2913 = vadd.f32 %v2864, %v2912
        %2914 = vdwg.mxu0
        %2915 = vmatpush.bf16.msra.mxu0 %v2491
        %2916 = vmatpush.bf16.msra.mxu0 %v2490
        %2917 = vmatpush.bf16.msra.mxu0 %v2489
        %2918 = vmatpush.bf16.msra.mxu0 %v2488
        %2919 = vmatpush.bf16.msra.mxu0 %v2487
        %2920 = vmatpush.bf16.msra.mxu0 %v2486
        %2921 = vmatpush.bf16.msra.mxu0 %v2485
        %2922 = vmatpush.bf16.msra.mxu0 %v2484
        %2923 = vmatmul.bf16.gmra.mxu0 %v1730
        %v2924 = vpop.f32.mrf.mxu0
        %v2925 = vadd.f32 %v2876, %v2924
        %v2926 = vpop.f32.mrf.mxu0
        %v2927 = vadd.f32 %v2878, %v2926
        %2928 = vmatmul.bf16.gmra.mxu0 %v1731
        %v2929 = vpop.f32.mrf.mxu0
        %v2930 = vadd.f32 %v2881, %v2929
        %v2931 = vpop.f32.mrf.mxu0
        %v2932 = vadd.f32 %v2883, %v2931
        %2933 = vmatmul.bf16.gmra.mxu0 %v1732
        %v2934 = vpop.f32.mrf.mxu0
        %v2935 = vadd.f32 %v2886, %v2934
        %v2936 = vpop.f32.mrf.mxu0
        %v2937 = vadd.f32 %v2888, %v2936
        %2938 = vmatmul.bf16.gmra.mxu0 %v1733
        %v2939 = vpop.f32.mrf.mxu0
        %v2940 = vadd.f32 %v2891, %v2939
        %v2941 = vpop.f32.mrf.mxu0
        %v2942 = vadd.f32 %v2893, %v2941
        %2943 = vmatmul.bf16.gmra.mxu0 %v1734
        %v2944 = vpop.f32.mrf.mxu0
        %v2945 = vadd.f32 %v2896, %v2944
        %v2946 = vpop.f32.mrf.mxu0
        %v2947 = vadd.f32 %v2898, %v2946
        %2948 = vmatmul.bf16.gmra.mxu0 %v1735
        %v2949 = vpop.f32.mrf.mxu0
        %v2950 = vadd.f32 %v2901, %v2949
        %v2951 = vpop.f32.mrf.mxu0
        %v2952 = vadd.f32 %v2903, %v2951
        %2953 = vmatmul.bf16.gmra.mxu0 %v1844
        %v2954 = vpop.f32.mrf.mxu0
        %v2955 = vadd.f32 %v2906, %v2954
        %v2956 = vpop.f32.mrf.mxu0
        %v2957 = vadd.f32 %v2908, %v2956
        %2958 = vmatmul.bf16.gmra.mxu0 %v1946
        %v2959 = vpop.f32.mrf.mxu0
        %v2960 = vadd.f32 %v2911, %v2959
        %v2961 = vpop.f32.mrf.mxu0
        %v2962 = vadd.f32 %v2913, %v2961
        %2963 = vdwg.mxu0
        %2964 = vmatpush.bf16.msra.mxu0 %v2499
        %2965 = vmatpush.bf16.msra.mxu0 %v2498
        %2966 = vmatpush.bf16.msra.mxu0 %v2497
        %2967 = vmatpush.bf16.msra.mxu0 %v2496
        %2968 = vmatpush.bf16.msra.mxu0 %v2495
        %2969 = vmatpush.bf16.msra.mxu0 %v2494
        %2970 = vmatpush.bf16.msra.mxu0 %v2493
        %2971 = vmatpush.bf16.msra.mxu0 %v2492
        %2972 = vmatmul.bf16.gmra.mxu0 %v1980
        %v2973 = vpop.f32.mrf.mxu0
        %v2974 = vadd.f32 %v2925, %v2973
        %v2975 = vpop.f32.mrf.mxu0
        %v2976 = vadd.f32 %v2927, %v2975
        %2977 = vmatmul.bf16.gmra.mxu0 %v1981
        %v2978 = vpop.f32.mrf.mxu0
        %v2979 = vadd.f32 %v2930, %v2978
        %v2980 = vpop.f32.mrf.mxu0
        %v2981 = vadd.f32 %v2932, %v2980
        %2982 = vmatmul.bf16.gmra.mxu0 %v1982
        %v2983 = vpop.f32.mrf.mxu0
        %v2984 = vadd.f32 %v2935, %v2983
        %v2985 = vpop.f32.mrf.mxu0
        %v2986 = vadd.f32 %v2937, %v2985
        %2987 = vmatmul.bf16.gmra.mxu0 %v1983
        %v2988 = vpop.f32.mrf.mxu0
        %v2989 = vadd.f32 %v2940, %v2988
        %v2990 = vpop.f32.mrf.mxu0
        %v2991 = vadd.f32 %v2942, %v2990
        %2992 = vmatmul.bf16.gmra.mxu0 %v1984
        %v2993 = vpop.f32.mrf.mxu0
        %v2994 = vadd.f32 %v2945, %v2993
        %v2995 = vpop.f32.mrf.mxu0
        %v2996 = vadd.f32 %v2947, %v2995
        %2997 = vmatmul.bf16.gmra.mxu0 %v1985
        %v2998 = vpop.f32.mrf.mxu0
        %v2999 = vadd.f32 %v2950, %v2998
        %v3000 = vpop.f32.mrf.mxu0
        %v3001 = vadd.f32 %v2952, %v3000
        %3002 = vmatmul.bf16.gmra.mxu0 %v1986
        %v3003 = vpop.f32.mrf.mxu0
        %v3004 = vadd.f32 %v2955, %v3003
        %v3005 = vpop.f32.mrf.mxu0
        %v3006 = vadd.f32 %v2957, %v3005
        %3007 = vmatmul.bf16.gmra.mxu0 %v1987
        %v3008 = vpop.f32.mrf.mxu0
        %v3009 = vadd.f32 %v2960, %v3008
        %v3010 = vpop.f32.mrf.mxu0
        %v3011 = vadd.f32 %v2962, %v3010
        %3012 = vdwg.mxu0
        %v3013 = vld [vmem:[%s5] sm:$0x1]
        %v3015 = vperm.slane %v3013, 0
        %v3017 = vmul.f32 %v2974, %v3015
        %v3018 = vmul.f32 %v2976, %v3015
        %v3019 = vmul.f32 %v2979, %v3015
        %v3020 = vmul.f32 %v2981, %v3015
        %v3021 = vmul.f32 %v2984, %v3015
        %v3022 = vmul.f32 %v2986, %v3015
        %v3023 = vmul.f32 %v2989, %v3015
        %v3024 = vmul.f32 %v2991, %v3015
        %v3025 = vmul.f32 %v2994, %v3015
        %v3026 = vmul.f32 %v2996, %v3015
        %v3027 = vmul.f32 %v2999, %v3015
        %v3028 = vmul.f32 %v3001, %v3015
        %v3029 = vmul.f32 %v3004, %v3015
        %v3030 = vmul.f32 %v3006, %v3015
        %v3031 = vmul.f32 %v3009, %v3015
        %v3032 = vmul.f32 %v3011, %v3015
        %v3033 = vld [vmem:[%s6] sm:$0x1]
        %v3035 = vperm.slane %v3033, 0
        %v3037 = vadd.f32 %v3017, %v3035
        %v3038 = vadd.f32 %v3018, %v3035
        %v3039 = vadd.f32 %v3019, %v3035
        %v3040 = vadd.f32 %v3020, %v3035
        %v3041 = vadd.f32 %v3021, %v3035
        %v3042 = vadd.f32 %v3022, %v3035
        %v3043 = vadd.f32 %v3023, %v3035
        %v3044 = vadd.f32 %v3024, %v3035
        %v3045 = vadd.f32 %v3025, %v3035
        %v3046 = vadd.f32 %v3026, %v3035
        %v3047 = vadd.f32 %v3027, %v3035
        %v3048 = vadd.f32 %v3028, %v3035
        %v3049 = vadd.f32 %v3029, %v3035
        %v3050 = vadd.f32 %v3030, %v3035
        %v3051 = vadd.f32 %v3031, %v3035
        %v3052 = vadd.f32 %v3032, %v3035
        %v3053 = vxor.u32 %v3037, 2147483648
        %v3054 = vxor.u32 %v3038, 2147483648
        %v3055 = vxor.u32 %v3039, 2147483648
        %v3056 = vxor.u32 %v3040, 2147483648
        %v3057 = vxor.u32 %v3041, 2147483648
        %v3058 = vxor.u32 %v3042, 2147483648
        %v3059 = vxor.u32 %v3043, 2147483648
        %v3060 = vxor.u32 %v3044, 2147483648
        %v3061 = vxor.u32 %v3045, 2147483648
        %v3062 = vxor.u32 %v3046, 2147483648
        %v3063 = vxor.u32 %v3047, 2147483648
        %v3064 = vxor.u32 %v3048, 2147483648
        %v3065 = vxor.u32 %v3049, 2147483648
        %v3066 = vxor.u32 %v3050, 2147483648
        %v3067 = vxor.u32 %v3051, 2147483648
        %v3068 = vxor.u32 %v3052, 2147483648
        %v3069 = vmul.f32 %v3053, 1.442695
        %v3070 = vpow.pop %v3069
        %v3071 = vmul.f32 %v3054, 1.442695
        %v3072 = vpow.pop %v3071
        %v3073 = vmul.f32 %v3055, 1.442695
        %v3074 = vpow.pop %v3073
        %v3075 = vmul.f32 %v3056, 1.442695
        %v3076 = vpow.pop %v3075
        %v3077 = vmul.f32 %v3057, 1.442695
        %v3078 = vpow.pop %v3077
        %v3079 = vmul.f32 %v3058, 1.442695
        %v3080 = vpow.pop %v3079
        %v3081 = vmul.f32 %v3059, 1.442695
        %v3082 = vpow.pop %v3081
        %v3083 = vmul.f32 %v3060, 1.442695
        %v3084 = vpow.pop %v3083
        %v3085 = vmul.f32 %v3061, 1.442695
        %v3086 = vpow.pop %v3085
        %v3087 = vmul.f32 %v3062, 1.442695
        %v3088 = vpow.pop %v3087
        %v3089 = vmul.f32 %v3063, 1.442695
        %v3090 = vpow.pop %v3089
        %v3091 = vmul.f32 %v3064, 1.442695
        %v3092 = vpow.pop %v3091
        %v3093 = vmul.f32 %v3065, 1.442695
        %v3094 = vpow.pop %v3093
        %v3095 = vmul.f32 %v3066, 1.442695
        %v3096 = vpow.pop %v3095
        %v3097 = vmul.f32 %v3067, 1.442695
        %v3098 = vpow.pop %v3097
        %v3099 = vmul.f32 %v3068, 1.442695
        %v3100 = vpow.pop %v3099
        %v3101 = vadd.f32 %v3070, 1.0
        %v3102 = vadd.f32 %v3072, 1.0
        %v3103 = vadd.f32 %v3074, 1.0
        %v3104 = vadd.f32 %v3076, 1.0
        %v3105 = vadd.f32 %v3078, 1.0
        %v3106 = vadd.f32 %v3080, 1.0
        %v3107 = vadd.f32 %v3082, 1.0
        %v3108 = vadd.f32 %v3084, 1.0
        %v3109 = vadd.f32 %v3086, 1.0
        %v3110 = vadd.f32 %v3088, 1.0
        %v3111 = vadd.f32 %v3090, 1.0
        %v3112 = vadd.f32 %v3092, 1.0
        %v3113 = vadd.f32 %v3094, 1.0
        %v3114 = vadd.f32 %v3096, 1.0
        %v3115 = vadd.f32 %v3098, 1.0
        %v3116 = vadd.f32 %v3100, 1.0
        %v3117 = vrcp.pop %v3101
        %v3118 = vmul.f32 %v3101, %v3117
        %v3119 = vsub.f32 1.0, %v3118
        %v3120 = vmul.f32 %v3117, %v3119
        %v3121 = vadd.f32 %v3117, %v3120
        %vm3122 = vweird.f32 %v3101
        %vm3123 = vweird.f32 %v3117
        %vm3124 = vmor %vm3122, %vm3123
        %v3125 = vsel %vm3124, %v3117, %v3121
        %v3126 = vand.u32 2147483647, %v3101
        %vm3127 = vcmp.eq.f32.partialorder %v3126, 8.507059e+37
        %v3128 = vand.u32 %v3101, 2147483648
        %v3129 = vor.u32 1.1754944e-38, %v3128
        %v3130 = vsel %vm3127, %v3129, %v3125
        %v3131 = vmul.f32 1.0, %v3130
        %v3132 = vrcp.pop %v3102
        %v3133 = vmul.f32 %v3102, %v3132
        %v3134 = vsub.f32 1.0, %v3133
        %v3135 = vmul.f32 %v3132, %v3134
        %v3136 = vadd.f32 %v3132, %v3135
        %vm3137 = vweird.f32 %v3102
        %vm3138 = vweird.f32 %v3132
        %vm3139 = vmor %vm3137, %vm3138
        %v3140 = vsel %vm3139, %v3132, %v3136
        %v3141 = vand.u32 2147483647, %v3102
        %vm3142 = vcmp.eq.f32.partialorder %v3141, 8.507059e+37
        %v3143 = vand.u32 %v3102, 2147483648
        %v3144 = vor.u32 1.1754944e-38, %v3143
        %v3145 = vsel %vm3142, %v3144, %v3140
        %v3146 = vmul.f32 1.0, %v3145
        %v3147 = vrcp.pop %v3103
        %v3148 = vmul.f32 %v3103, %v3147
        %v3149 = vsub.f32 1.0, %v3148
        %v3150 = vmul.f32 %v3147, %v3149
        %v3151 = vadd.f32 %v3147, %v3150
        %vm3152 = vweird.f32 %v3103
        %vm3153 = vweird.f32 %v3147
        %vm3154 = vmor %vm3152, %vm3153
        %v3155 = vsel %vm3154, %v3147, %v3151
        %v3156 = vand.u32 2147483647, %v3103
        %vm3157 = vcmp.eq.f32.partialorder %v3156, 8.507059e+37
        %v3158 = vand.u32 %v3103, 2147483648
        %v3159 = vor.u32 1.1754944e-38, %v3158
        %v3160 = vsel %vm3157, %v3159, %v3155
        %v3161 = vmul.f32 1.0, %v3160
        %v3162 = vrcp.pop %v3104
        %v3163 = vmul.f32 %v3104, %v3162
        %v3164 = vsub.f32 1.0, %v3163
        %v3165 = vmul.f32 %v3162, %v3164
        %v3166 = vadd.f32 %v3162, %v3165
        %vm3167 = vweird.f32 %v3104
        %vm3168 = vweird.f32 %v3162
        %vm3169 = vmor %vm3167, %vm3168
        %v3170 = vsel %vm3169, %v3162, %v3166
        %v3171 = vand.u32 2147483647, %v3104
        %vm3172 = vcmp.eq.f32.partialorder %v3171, 8.507059e+37
        %v3173 = vand.u32 %v3104, 2147483648
        %v3174 = vor.u32 1.1754944e-38, %v3173
        %v3175 = vsel %vm3172, %v3174, %v3170
        %v3176 = vmul.f32 1.0, %v3175
        %v3177 = vrcp.pop %v3105
        %v3178 = vmul.f32 %v3105, %v3177
        %v3179 = vsub.f32 1.0, %v3178
        %v3180 = vmul.f32 %v3177, %v3179
        %v3181 = vadd.f32 %v3177, %v3180
        %vm3182 = vweird.f32 %v3105
        %vm3183 = vweird.f32 %v3177
        %vm3184 = vmor %vm3182, %vm3183
        %v3185 = vsel %vm3184, %v3177, %v3181
        %v3186 = vand.u32 2147483647, %v3105
        %vm3187 = vcmp.eq.f32.partialorder %v3186, 8.507059e+37
        %v3188 = vand.u32 %v3105, 2147483648
        %v3189 = vor.u32 1.1754944e-38, %v3188
        %v3190 = vsel %vm3187, %v3189, %v3185
        %v3191 = vmul.f32 1.0, %v3190
        %v3192 = vrcp.pop %v3106
        %v3193 = vmul.f32 %v3106, %v3192
        %v3194 = vsub.f32 1.0, %v3193
        %v3195 = vmul.f32 %v3192, %v3194
        %v3196 = vadd.f32 %v3192, %v3195
        %vm3197 = vweird.f32 %v3106
        %vm3198 = vweird.f32 %v3192
        %vm3199 = vmor %vm3197, %vm3198
        %v3200 = vsel %vm3199, %v3192, %v3196
        %v3201 = vand.u32 2147483647, %v3106
        %vm3202 = vcmp.eq.f32.partialorder %v3201, 8.507059e+37
        %v3203 = vand.u32 %v3106, 2147483648
        %v3204 = vor.u32 1.1754944e-38, %v3203
        %v3205 = vsel %vm3202, %v3204, %v3200
        %v3206 = vmul.f32 1.0, %v3205
        %v3207 = vrcp.pop %v3107
        %v3208 = vmul.f32 %v3107, %v3207
        %v3209 = vsub.f32 1.0, %v3208
        %v3210 = vmul.f32 %v3207, %v3209
        %v3211 = vadd.f32 %v3207, %v3210
        %vm3212 = vweird.f32 %v3107
        %vm3213 = vweird.f32 %v3207
        %vm3214 = vmor %vm3212, %vm3213
        %v3215 = vsel %vm3214, %v3207, %v3211
        %v3216 = vand.u32 2147483647, %v3107
        %vm3217 = vcmp.eq.f32.partialorder %v3216, 8.507059e+37
        %v3218 = vand.u32 %v3107, 2147483648
        %v3219 = vor.u32 1.1754944e-38, %v3218
        %v3220 = vsel %vm3217, %v3219, %v3215
        %v3221 = vmul.f32 1.0, %v3220
        %v3222 = vrcp.pop %v3108
        %v3223 = vmul.f32 %v3108, %v3222
        %v3224 = vsub.f32 1.0, %v3223
        %v3225 = vmul.f32 %v3222, %v3224
        %v3226 = vadd.f32 %v3222, %v3225
        %vm3227 = vweird.f32 %v3108
        %vm3228 = vweird.f32 %v3222
        %vm3229 = vmor %vm3227, %vm3228
        %v3230 = vsel %vm3229, %v3222, %v3226
        %v3231 = vand.u32 2147483647, %v3108
        %vm3232 = vcmp.eq.f32.partialorder %v3231, 8.507059e+37
        %v3233 = vand.u32 %v3108, 2147483648
        %v3234 = vor.u32 1.1754944e-38, %v3233
        %v3235 = vsel %vm3232, %v3234, %v3230
        %v3236 = vmul.f32 1.0, %v3235
        %v3237 = vrcp.pop %v3109
        %v3238 = vmul.f32 %v3109, %v3237
        %v3239 = vsub.f32 1.0, %v3238
        %v3240 = vmul.f32 %v3237, %v3239
        %v3241 = vadd.f32 %v3237, %v3240
        %vm3242 = vweird.f32 %v3109
        %vm3243 = vweird.f32 %v3237
        %vm3244 = vmor %vm3242, %vm3243
        %v3245 = vsel %vm3244, %v3237, %v3241
        %v3246 = vand.u32 2147483647, %v3109
        %vm3247 = vcmp.eq.f32.partialorder %v3246, 8.507059e+37
        %v3248 = vand.u32 %v3109, 2147483648
        %v3249 = vor.u32 1.1754944e-38, %v3248
        %v3250 = vsel %vm3247, %v3249, %v3245
        %v3251 = vmul.f32 1.0, %v3250
        %v3252 = vrcp.pop %v3110
        %v3253 = vmul.f32 %v3110, %v3252
        %v3254 = vsub.f32 1.0, %v3253
        %v3255 = vmul.f32 %v3252, %v3254
        %v3256 = vadd.f32 %v3252, %v3255
        %vm3257 = vweird.f32 %v3110
        %vm3258 = vweird.f32 %v3252
        %vm3259 = vmor %vm3257, %vm3258
        %v3260 = vsel %vm3259, %v3252, %v3256
        %v3261 = vand.u32 2147483647, %v3110
        %vm3262 = vcmp.eq.f32.partialorder %v3261, 8.507059e+37
        %v3263 = vand.u32 %v3110, 2147483648
        %v3264 = vor.u32 1.1754944e-38, %v3263
        %v3265 = vsel %vm3262, %v3264, %v3260
        %v3266 = vmul.f32 1.0, %v3265
        %v3267 = vrcp.pop %v3111
        %v3268 = vmul.f32 %v3111, %v3267
        %v3269 = vsub.f32 1.0, %v3268
        %v3270 = vmul.f32 %v3267, %v3269
        %v3271 = vadd.f32 %v3267, %v3270
        %vm3272 = vweird.f32 %v3111
        %vm3273 = vweird.f32 %v3267
        %vm3274 = vmor %vm3272, %vm3273
        %v3275 = vsel %vm3274, %v3267, %v3271
        %v3276 = vand.u32 2147483647, %v3111
        %vm3277 = vcmp.eq.f32.partialorder %v3276, 8.507059e+37
        %v3278 = vand.u32 %v3111, 2147483648
        %v3279 = vor.u32 1.1754944e-38, %v3278
        %v3280 = vsel %vm3277, %v3279, %v3275
        %v3281 = vmul.f32 1.0, %v3280
        %v3282 = vrcp.pop %v3112
        %v3283 = vmul.f32 %v3112, %v3282
        %v3284 = vsub.f32 1.0, %v3283
        %v3285 = vmul.f32 %v3282, %v3284
        %v3286 = vadd.f32 %v3282, %v3285
        %vm3287 = vweird.f32 %v3112
        %vm3288 = vweird.f32 %v3282
        %vm3289 = vmor %vm3287, %vm3288
        %v3290 = vsel %vm3289, %v3282, %v3286
        %v3291 = vand.u32 2147483647, %v3112
        %vm3292 = vcmp.eq.f32.partialorder %v3291, 8.507059e+37
        %v3293 = vand.u32 %v3112, 2147483648
        %v3294 = vor.u32 1.1754944e-38, %v3293
        %v3295 = vsel %vm3292, %v3294, %v3290
        %v3296 = vmul.f32 1.0, %v3295
        %v3297 = vrcp.pop %v3113
        %v3298 = vmul.f32 %v3113, %v3297
        %v3299 = vsub.f32 1.0, %v3298
        %v3300 = vmul.f32 %v3297, %v3299
        %v3301 = vadd.f32 %v3297, %v3300
        %vm3302 = vweird.f32 %v3113
        %vm3303 = vweird.f32 %v3297
        %vm3304 = vmor %vm3302, %vm3303
        %v3305 = vsel %vm3304, %v3297, %v3301
        %v3306 = vand.u32 2147483647, %v3113
        %vm3307 = vcmp.eq.f32.partialorder %v3306, 8.507059e+37
        %v3308 = vand.u32 %v3113, 2147483648
        %v3309 = vor.u32 1.1754944e-38, %v3308
        %v3310 = vsel %vm3307, %v3309, %v3305
        %v3311 = vmul.f32 1.0, %v3310
        %v3312 = vrcp.pop %v3114
        %v3313 = vmul.f32 %v3114, %v3312
        %v3314 = vsub.f32 1.0, %v3313
        %v3315 = vmul.f32 %v3312, %v3314
        %v3316 = vadd.f32 %v3312, %v3315
        %vm3317 = vweird.f32 %v3114
        %vm3318 = vweird.f32 %v3312
        %vm3319 = vmor %vm3317, %vm3318
        %v3320 = vsel %vm3319, %v3312, %v3316
        %v3321 = vand.u32 2147483647, %v3114
        %vm3322 = vcmp.eq.f32.partialorder %v3321, 8.507059e+37
        %v3323 = vand.u32 %v3114, 2147483648
        %v3324 = vor.u32 1.1754944e-38, %v3323
        %v3325 = vsel %vm3322, %v3324, %v3320
        %v3326 = vmul.f32 1.0, %v3325
        %v3327 = vrcp.pop %v3115
        %v3328 = vmul.f32 %v3115, %v3327
        %v3329 = vsub.f32 1.0, %v3328
        %v3330 = vmul.f32 %v3327, %v3329
        %v3331 = vadd.f32 %v3327, %v3330
        %vm3332 = vweird.f32 %v3115
        %vm3333 = vweird.f32 %v3327
        %vm3334 = vmor %vm3332, %vm3333
        %v3335 = vsel %vm3334, %v3327, %v3331
        %v3336 = vand.u32 2147483647, %v3115
        %vm3337 = vcmp.eq.f32.partialorder %v3336, 8.507059e+37
        %v3338 = vand.u32 %v3115, 2147483648
        %v3339 = vor.u32 1.1754944e-38, %v3338
        %v3340 = vsel %vm3337, %v3339, %v3335
        %v3341 = vmul.f32 1.0, %v3340
        %v3342 = vrcp.pop %v3116
        %v3343 = vmul.f32 %v3116, %v3342
        %v3344 = vsub.f32 1.0, %v3343
        %v3345 = vmul.f32 %v3342, %v3344
        %v3346 = vadd.f32 %v3342, %v3345
        %vm3347 = vweird.f32 %v3116
        %vm3348 = vweird.f32 %v3342
        %vm3349 = vmor %vm3347, %vm3348
        %v3350 = vsel %vm3349, %v3342, %v3346
        %v3351 = vand.u32 2147483647, %v3116
        %vm3352 = vcmp.eq.f32.partialorder %v3351, 8.507059e+37
        %v3353 = vand.u32 %v3116, 2147483648
        %v3354 = vor.u32 1.1754944e-38, %v3353
        %v3355 = vsel %vm3352, %v3354, %v3350
        %v3356 = vmul.f32 1.0, %v3355
        %v3357 = vmul.f32 %v3037, %v3131
        %v3358 = vmul.f32 %v3038, %v3146
        %v3359 = vmul.f32 %v3039, %v3161
        %v3360 = vmul.f32 %v3040, %v3176
        %v3361 = vmul.f32 %v3041, %v3191
        %v3362 = vmul.f32 %v3042, %v3206
        %v3363 = vmul.f32 %v3043, %v3221
        %v3364 = vmul.f32 %v3044, %v3236
        %v3365 = vmul.f32 %v3045, %v3251
        %v3366 = vmul.f32 %v3046, %v3266
        %v3367 = vmul.f32 %v3047, %v3281
        %v3368 = vmul.f32 %v3048, %v3296
        %v3369 = vmul.f32 %v3049, %v3311
        %v3370 = vmul.f32 %v3050, %v3326
        %v3371 = vmul.f32 %v3051, %v3341
        %v3372 = vmul.f32 %v3052, %v3356
        %v3373 = vunpack.c.l.bf16 %v370
        %v3374 = vunpack.c.l.bf16 %v371
        %v3375 = vunpack.c.l.bf16 %v372
        %v3376 = vunpack.c.l.bf16 %v373
        %v3377 = vunpack.c.l.bf16 %v374
        %v3378 = vunpack.c.l.bf16 %v375
        %v3379 = vunpack.c.l.bf16 %v376
        %v3380 = vunpack.c.l.bf16 %v377
        %v3381 = vunpack.c.l.bf16 %v378
        %v3382 = vunpack.c.l.bf16 %v379
        %v3383 = vunpack.c.l.bf16 %v380
        %v3384 = vunpack.c.l.bf16 %v381
        %v3385 = vunpack.c.l.bf16 %v382
        %v3386 = vunpack.c.l.bf16 %v383
        %v3387 = vunpack.c.l.bf16 %v384
        %v3388 = vunpack.c.l.bf16 %v385
        %v3389 = vadd.f32 %v3357, %v3373
        %v3390 = vadd.f32 %v3358, %v3374
        %v3391 = vadd.f32 %v3359, %v3375
        %v3392 = vadd.f32 %v3360, %v3376
        %v3393 = vadd.f32 %v3361, %v3377
        %v3394 = vadd.f32 %v3362, %v3378
        %v3395 = vadd.f32 %v3363, %v3379
        %v3396 = vadd.f32 %v3364, %v3380
        %v3397 = vadd.f32 %v3365, %v3381
        %v3398 = vadd.f32 %v3366, %v3382
        %v3399 = vadd.f32 %v3367, %v3383
        %v3400 = vadd.f32 %v3368, %v3384
        %v3401 = vadd.f32 %v3369, %v3385
        %v3402 = vadd.f32 %v3370, %v3386
        %v3403 = vadd.f32 %v3371, %v3387
        %v3404 = vadd.f32 %v3372, %v3388
        %3405 = vst [vmem:[%s345] sm:$0xff] %v3389
        %3406 = vst [vmem:[%s345 + $0x8] sm:$0xff] %v3390
        %3407 = vst [vmem:[%s345 + $0x10] sm:$0xff] %v3391
        %3408 = vst [vmem:[%s345 + $0x18] sm:$0xff] %v3392
        %3409 = vst [vmem:[%s345 + $0x20] sm:$0xff] %v3393
        %3410 = vst [vmem:[%s345 + $0x28] sm:$0xff] %v3394
        %3411 = vst [vmem:[%s345 + $0x30] sm:$0xff] %v3395
        %3412 = vst [vmem:[%s345 + $0x38] sm:$0xff] %v3396
        %3413 = vst [vmem:[%s345 + $0x40] sm:$0xff] %v3397
        %3414 = vst [vmem:[%s345 + $0x48] sm:$0xff] %v3398
        %3415 = vst [vmem:[%s345 + $0x50] sm:$0xff] %v3399
        %3416 = vst [vmem:[%s345 + $0x58] sm:$0xff] %v3400
        %3417 = vst [vmem:[%s345 + $0x60] sm:$0xff] %v3401
        %3418 = vst [vmem:[%s345 + $0x68] sm:$0xff] %v3402
        %3419 = vst [vmem:[%s345 + $0x70] sm:$0xff] %v3403
        %3420 = vst [vmem:[%s345 + $0x78] sm:$0xff] %v3404
        %s3421 = sand.u32 %s199, 1
        %s3422 = scalar_lea.sflag [#allocation5], %s3421
        %s3423 = sand.u32 %s199, 1
        %s3424 = smul.addr %s3423, 128
        %s3425 = scalar_lea.vmem [#allocation9], %s3424
        // Predicated region
        $region77: #{tpu_custom_call.1} parent=47 // pred_check
          %p3426 = pneg %p209
        $region78: #{tpu_custom_call.1} parent=47 // pred_check_branch
          %3428 = sbr.rel (%p3426) target = $region80
        $region79: #{tpu_custom_call.1} parent=47 // pred_region
          %s3429 = smul.u32 16, %s30
          %3431 = vsyncadd %s3422, 0
          %s3432 = smul.addr %s29, 32
          %s3433 = sadd.s32 %s3429, %s3432
          %s3434 = smul.addr %s3433, 8
          %s3435 = scalar_lea.hbm %s7, %s3434
          %s3436 = sshll.u32 %s3425, 4
          %s3437 = int_to_ptr.vmem [resolvable:$true] %s3436
          %s3438 = sshll.u32 %s3435, 4
          %s3439 = int_to_ptr.hbm [resolvable:$true] %s3438
          %3444 = dma.vmem_to_hbm [thread:$0]  %s3437, 2048, %s3439, %s3422, 128, 128, 8
        $region80: #{tpu_custom_call.1} parent=47 // pred_fallthru
          _
      $region48: #{tpu_custom_call.1} parent=5 // pred_fallthru
        _
      %p3445 = scmp.le.s32.totalorder 2, %s20
      // Predicated region
      $region81: #{tpu_custom_call.1} parent=5 // pred_check
        %p3446 = pneg %p3445
      $region82: #{tpu_custom_call.1} parent=5 // pred_check_branch
        %3448 = sbr.rel (%p3446) target = $region84
      $region83: #{tpu_custom_call.1} parent=5 // pred_region
        %s3449 = ssub.s32 %s20, 2
        // Predicated region
        $region85: #{tpu_custom_call.1} parent=83 // pred_check
          %p3450 = pneg %p215
        $region86: #{tpu_custom_call.1} parent=83 // pred_check_branch
          %3452 = sbr.rel (%p3450) target = $region88
        $region87: #{tpu_custom_call.1} parent=83 // pred_region
          %s3453 = sand.u32 %s200, 1
          %s3454 = scalar_lea.sflag [#allocation5], %s3453
          %s3455 = sand.u32 %s200, 1
          %s3456 = smul.addr %s3455, 128
          %s3457 = scalar_lea.vmem [#allocation9], %s3456
          %3459 = dma.done %s3454, 2048
        $region88: #{tpu_custom_call.1} parent=83 // pred_fallthru
          _
      $region84: #{tpu_custom_call.1} parent=5 // pred_fallthru
        _
    $region6: #{tpu_custom_call.1} parent=1 // loop_footer
      %s24 = sadd.s32 1, %s20
    $region7: #{tpu_custom_call.1} parent=1 // loop_footer_branch
      %19 = sbr.rel target = $region3
    $region8: #{tpu_custom_call.1} parent=1 // loop_exit
      _
    %3460 = vsyncpa [#allocation4], 1
    %s3461 = scalar_lea.sflag [#allocation4], 1
    %3462 = vsyncpa %s3461, 1
    %3463 = vsyncpa [#allocation7], 1
    %3464 = vsyncpa [#allocation5], 1
    %s3465 = scalar_lea.sflag [#allocation5], 1
    %3466 = vsyncpa %s3465, 1

</llo_original>
